<compile_context>
chip_gen: v7x
topology: tpu7x:2x2x1
jax: 0.10.0
libtpu: 0.0.40
codegen_flags: <defaults>
</compile_context>

<pallas_src>
import functools

import jax
import jax.numpy as jnp
import numpy as np
from jax.experimental import pallas as pl
from jax.experimental.pallas import tpu as pltpu

K = 5               # conv kernel size
S = 2               # conv stride
TAPS = K * K        # 25 taps per 5x5 conv
TAP_GROUPS = 5      # grid steps over the conv-2 tap axis
TG = TAPS // TAP_GROUPS
LANES = 128         # lane width for padded patches / final output
C1, C2, C3 = 16, 32, 32   # conv1/conv2/conv3 output channels


def _conv_out(size):
    return (size - K) // S + 1


# ----------------------------------------------------------------------------
# Fused Pallas kernel: conv1/bn1/relu -> conv2/bn2/relu -> conv3/bn3/relu -> fc
# Grid: (batch blocks [parallel], conv-2 tap groups [arbitrary/reduction]).
# ----------------------------------------------------------------------------
def _dqn_fused_kernel(p1_ref, w1_ref, s1_ref, w2_ref, s2_ref, w3_ref, s3_ref,
                      wfc_ref, bfc_ref, o_ref, acc2_ref, *, m3, nb, sp3):
    g = pl.program_id(1)

    @pl.when(g == 0)
    def _():
        acc2_ref[...] = jnp.zeros_like(acc2_ref)

    # Layers 1+2 for this group of TG conv-2 taps: a1 = relu(patches @ w1 + s1)
    # is immediately contracted against that tap's conv-2 weights; the partial
    # conv-2 result accumulates in f32 VMEM scratch across grid steps.
    w1 = w1_ref[...]                      # (128, 16) bf16
    s1 = s1_ref[...]                      # (1, 16)  f32
    acc2 = acc2_ref[...]                  # (m2, 32) f32
    for j in range(TG):
        a1 = jnp.maximum(
            jnp.dot(p1_ref[j], w1, preferred_element_type=jnp.float32) + s1, 0.0)
        acc2 = acc2 + jnp.dot(a1.astype(jnp.bfloat16), w2_ref[j],
                              preferred_element_type=jnp.float32)
    acc2_ref[...] = acc2

    # Last grid step: finish conv2 (shift + relu), then conv3 and the FC layer.
    @pl.when(g == pl.num_programs(1) - 1)
    def _():
        a2 = jnp.maximum(acc2_ref[...] + s2_ref[...], 0.0).astype(jnp.bfloat16)
        # conv3: rows of a2 are grouped conv-3-tap major (row = t*m3 + i).
        acc3 = jnp.zeros((m3, C3), jnp.float32)
        for t in range(TAPS):
            acc3 = acc3 + jnp.dot(a2[t * m3:(t + 1) * m3, :], w3_ref[t],
                                  preferred_element_type=jnp.float32)
        a3 = jnp.maximum(acc3 + s3_ref[...], 0.0).astype(jnp.bfloat16)
        # FC: rows of a3 are spatial-major, batch minor (row = p*nb + n).
        acc4 = jnp.zeros((nb, LANES), jnp.float32)
        for p in range(sp3):
            acc4 = acc4 + jnp.dot(a3[p * nb:(p + 1) * nb, :], wfc_ref[p],
                                  preferred_element_type=jnp.float32)
        o_ref[...] = acc4 + bfc_ref[...]


# ----------------------------------------------------------------------------
# Wrapper-side preparation (all tiny, traced under jit)
# ----------------------------------------------------------------------------
def _build_patch_row_index(nb, s1hw, s3hw):
    """idx[t2, g]: row into the (nb*s1h*s1w, Cin*K*K) layer-1 patch matrix."""
    s1h, s1w = s1hw
    s3h, s3w = s3hw
    sp3 = s3h * s3w
    m3 = sp3 * nb
    m2 = TAPS * m3
    idx = np.empty((TAPS, m2), dtype=np.int32)
    for t2 in range(TAPS):
        kh2, kw2 = divmod(t2, K)
        for g in range(m2):
            t3, i3 = divmod(g, m3)
            kh3, kw3 = divmod(t3, K)
            p, n = divmod(i3, nb)
            oh3, ow3 = divmod(p, s3w)
            oh2, ow2 = S * oh3 + kh3, S * ow3 + kw3   # conv-2 output position
            oh1, ow1 = S * oh2 + kh2, S * ow2 + kw2   # conv-1 output position
            idx[t2, g] = n * (s1h * s1w) + oh1 * s1w + ow1
    return idx


def _fold_bn(w, b, gamma, beta, mean, var, eps=1e-5):
    scale = gamma / jnp.sqrt(var + eps)            # (Cout,)
    w_folded = w * scale[:, None, None, None]      # BN scale folded into weights
    shift = beta + scale * (b - mean)              # conv bias + BN shift folded
    return w_folded, shift


def _patch_weight(w_folded):
    # (Cout, Cin, K, K) -> (Cin*K*K padded to 128, Cout), row order (c, kh, kw)
    # to match conv_general_dilated_patches.  bf16.
    cout, cin = w_folded.shape[:2]
    w_m = jnp.transpose(w_folded, (1, 2, 3, 0)).reshape(cin * TAPS, cout)
    return jnp.pad(w_m, ((0, LANES - cin * TAPS), (0, 0))).astype(jnp.bfloat16)


def _tap_weights(w_folded):
    # (Cout, Cin, K, K) -> (K*K, Cin, Cout) bf16, natural (unpadded) dims.
    cout, cin = w_folded.shape[:2]
    w_t = jnp.transpose(w_folded, (2, 3, 1, 0)).reshape(TAPS, cin, cout)
    return w_t.astype(jnp.bfloat16)


def dqn_conv_forward(x_nchw, params, *, batch_block=64):
    """Full forward pass, NCHW float32 in, (N, output_size) out."""
    n_batch, cin, h, w = x_nchw.shape
    s1h, s1w = _conv_out(h), _conv_out(w)
    s2h, s2w = _conv_out(s1h), _conv_out(s1w)
    s3h, s3w = _conv_out(s2h), _conv_out(s2w)
    sp3 = s3h * s3w

    nb = n_batch if n_batch <= batch_block else batch_block   # rows / batch block
    nblk = -(-n_batch // nb)
    n_pad = nblk * nb
    m3 = sp3 * nb            # conv-3 output rows per block (spatial-major)
    m2 = TAPS * m3           # conv-2 output rows per block (conv-3-tap major)

    w1_raw, b1, g1, be1, mu1, v1 = params["layer1"]
    w2_raw, b2, g2, be2, mu2, v2 = params["layer2"]
    w3_raw, b3, g3, be3, mu3, v3 = params["layer3"]
    fc_w, fc_b = params["fc"]
    out_size = fc_w.shape[0]
    assert cin * TAPS <= LANES and out_size <= LANES
    assert w1_raw.shape[0] == C1 and w2_raw.shape[0] == C2 and w3_raw.shape[0] == C3

    # Fold BN into the conv weights / a single per-channel f32 shift.
    w1_f, sh1 = _fold_bn(w1_raw, b1, g1, be1, mu1, v1)
    w2_f, sh2 = _fold_bn(w2_raw, b2, g2, be2, mu2, v2)
    w3_f, sh3 = _fold_bn(w3_raw, b3, g3, be3, mu3, v3)
    w1_m = _patch_weight(w1_f)                    # (128, 16)   bf16
    w2_t = _tap_weights(w2_f)                     # (25, 16, 32) bf16
    w3_t = _tap_weights(w3_f)                     # (25, 32, 32) bf16
    s1_v = sh1[None, :].astype(jnp.float32)       # (1, 16)
    s2_v = sh2[None, :].astype(jnp.float32)       # (1, 32)
    s3_v = sh3[None, :].astype(jnp.float32)       # (1, 32)

    # fc weight: (out, c3*sp3) in NCHW-flatten order -> per spatial position
    # (sp3, c3, out padded to 128 lanes); bias padded to (1, 128).
    wfc = jnp.transpose(fc_w.reshape(out_size, C3, sp3), (2, 1, 0))
    wfc = jnp.pad(wfc, ((0, 0), (0, 0), (0, LANES - out_size))).astype(jnp.bfloat16)
    bfc = jnp.pad(fc_b[None, :], ((0, 0), (0, LANES - out_size))).astype(jnp.float32)

    # Layer-1 input patches (one patches op + one row gather), bf16, ordered so
    # that every in-kernel access is a plain static slice.
    patches = jax.lax.conv_general_dilated_patches(
        x_nchw, filter_shape=(K, K), window_strides=(S, S), padding="VALID",
        dimension_numbers=("NCHW", "OIHW", "NHWC"))
    patches = patches.reshape(n_batch * s1h * s1w, cin * TAPS).astype(jnp.bfloat16)
    if n_pad != n_batch:
        patches = jnp.pad(patches, ((0, (n_pad - n_batch) * s1h * s1w), (0, 0)))
    idx = _build_patch_row_index(nb, (s1h, s1w), (s3h, s3w))        # (TAPS, m2)
    idx = idx[None] + (np.arange(nblk) * nb * s1h * s1w)[:, None, None]
    p1 = patches[jnp.asarray(idx.reshape(nblk * TAPS, m2))]         # (nblk*25, m2, 100)
    p1 = jnp.pad(p1, ((0, 0), (0, 0), (0, LANES - cin * TAPS)))     # lane-pad to 128

    kernel = functools.partial(_dqn_fused_kernel, m3=m3, nb=nb, sp3=sp3)
    out = pl.pallas_call(
        kernel,
        out_shape=jax.ShapeDtypeStruct((n_pad, LANES), jnp.float32),
        grid=(nblk, TAP_GROUPS),
        in_specs=[
            pl.BlockSpec((TG, m2, LANES),
                         lambda b, g: (b * TAP_GROUPS + g, 0, 0)),    # p1 block
            pl.BlockSpec((LANES, C1), lambda b, g: (0, 0)),           # w1
            pl.BlockSpec((1, C1), lambda b, g: (0, 0)),               # s1
            pl.BlockSpec((TG, C1, C2), lambda b, g: (g, 0, 0)),       # w2 block
            pl.BlockSpec((1, C2), lambda b, g: (0, 0)),               # s2
            pl.BlockSpec((TAPS, C2, C3), lambda b, g: (0, 0, 0)),     # w3
            pl.BlockSpec((1, C3), lambda b, g: (0, 0)),               # s3
            pl.BlockSpec((sp3, C3, LANES), lambda b, g: (0, 0, 0)),   # wfc
            pl.BlockSpec((1, LANES), lambda b, g: (0, 0)),            # bfc
        ],
        out_specs=pl.BlockSpec((nb, LANES), lambda b, g: (b, 0)),
        scratch_shapes=[pltpu.VMEM((m2, C2), jnp.float32)],           # conv-2 acc
        compiler_params=pltpu.CompilerParams(
            dimension_semantics=("parallel", "arbitrary")),
    )(p1, w1_m, s1_v, w2_t, s2_v, w3_t, s3_v, wfc, bfc)
    return out[:n_batch, :out_size]


# ----------------------------------------------------------------------------
# Pure-JAX reference (accurate f32 ground truth for the correctness check)
# ----------------------------------------------------------------------------
def _reference_forward(x, params, eps=1e-5):
    def conv(x, w, b):
        y = jax.lax.conv_general_dilated(
            x, w, (S, S), "VALID",
            dimension_numbers=("NCHW", "OIHW", "NCHW"),
            precision=jax.lax.Precision.HIGHEST)
        return y + b[None, :, None, None]

    def bn(x, g, bta, m, v):
        return (g[None, :, None, None] * (x - m[None, :, None, None])
                / jnp.sqrt(v[None, :, None, None] + eps)
                + bta[None, :, None, None])

    for name in ("layer1", "layer2", "layer3"):
        w, b, g, bta, m, v = params[name]
        x = jax.nn.relu(bn(conv(x, w, b), g, bta, m, v))
    fc_w, fc_b = params["fc"]
    x = x.reshape(x.shape[0], -1)
    return jnp.dot(x, fc_w.T, precision=jax.lax.Precision.HIGHEST) + fc_b


# ----------------------------------------------------------------------------
# Deterministic parameter init
# ----------------------------------------------------------------------------
def _init_params(key, h, w, output_size):
    convw = _conv_out(_conv_out(_conv_out(w)))
    convh = _conv_out(_conv_out(_conv_out(h)))
    fc_input = convh * convw * 32

    keys = jax.random.split(key, 20)  # 3 conv/bn blocks x 6 keys + 2 for fc
    ki = iter(keys)

    def conv_bn(cin, cout):
        w_ = 0.05 * jax.random.normal(next(ki), (cout, cin, K, K), jnp.float32)
        b_ = 0.05 * jax.random.normal(next(ki), (cout,), jnp.float32)
        gamma = 1.0 + 0.1 * jax.random.normal(next(ki), (cout,), jnp.float32)
        beta = 0.1 * jax.random.normal(next(ki), (cout,), jnp.float32)
        mean = 0.1 * jax.random.normal(next(ki), (cout,), jnp.float32)
        var = jax.random.uniform(next(ki), (cout,), jnp.float32, 0.5, 1.5)
        return (w_, b_, gamma, beta, mean, var)

    params = {
        "layer1": conv_bn(4, 16),
        "layer2": conv_bn(16, 32),
        "layer3": conv_bn(32, 32),
    }
    params["fc"] = (
        0.05 * jax.random.normal(next(ki), (output_size, fc_input), jnp.float32),
        0.05 * jax.random.normal(next(ki), (output_size,), jnp.float32),
    )
    return params


# ----------------------------------------------------------------------------
if __name__ == "__main__":
    # Spatial size must survive three stride-2 5x5 valid convs: 32 -> 14 -> 5 -> 1.
    batch, channels, h, w = 2, 4, 32, 32
    output_size = 4

    key = jax.random.PRNGKey(0)
    kx, kp = jax.random.split(key)
    x = jax.random.normal(kx, (batch, channels, h, w), jnp.float32)
    params = _init_params(kp, h, w, output_size)

    fwd = jax.jit(dqn_conv_forward)
    out = jax.block_until_ready(fwd(x, params))
    ref = jax.block_until_ready(_reference_forward(x, params))

    # bf16 MXU operands with f32 accumulation -> compare against the f32
    # reference with a correspondingly relaxed tolerance.
    np.testing.assert_allclose(np.asarray(out), np.asarray(ref), rtol=2e-2, atol=2e-2)
    assert out.shape == (batch, output_size)

    print("KERNEL_OK")
</pallas_src>

<mosaic_0001>
module attributes {stable_mosaic.version = 11 : i64} {
  func.func @_dqn_fused_kernel(%arg0: i32, %arg1: i32, %arg2: memref<5x50x128xbf16, #tpu.memory_space<vmem>>, %arg3: memref<128x16xbf16, #tpu.memory_space<vmem>>, %arg4: memref<1x16xf32, #tpu.memory_space<vmem>>, %arg5: memref<5x16x32xbf16, #tpu.memory_space<vmem>>, %arg6: memref<1x32xf32, #tpu.memory_space<vmem>>, %arg7: memref<25x32x32xbf16, #tpu.memory_space<vmem>>, %arg8: memref<1x32xf32, #tpu.memory_space<vmem>>, %arg9: memref<1x32x128xbf16, #tpu.memory_space<vmem>>, %arg10: memref<1x128xf32, #tpu.memory_space<vmem>>, %arg11: memref<2x128xf32, #tpu.memory_space<vmem>>, %arg12: memref<50x32xf32, #tpu.memory_space<vmem>>) attributes {dimension_semantics = [#tpu.dimension_semantics<parallel>, #tpu.dimension_semantics<arbitrary>], iteration_bounds = array<i64: 1, 5>, scalar_prefetch = 0 : i64, scratch_operands = 1 : i64, tpu.core_type = #tpu.core_type<tc>, window_params = [{transform_indices = @transform_0, window_bounds = array<i64: 5, 50, 128>}, {pipeline_mode = #tpu.pipeline_mode<synchronous>, transform_indices = @transform_1, window_bounds = array<i64: 128, 16>}, {pipeline_mode = #tpu.pipeline_mode<synchronous>, transform_indices = @transform_2, window_bounds = array<i64: 1, 16>}, {transform_indices = @transform_3, window_bounds = array<i64: 5, 16, 32>}, {pipeline_mode = #tpu.pipeline_mode<synchronous>, transform_indices = @transform_4, window_bounds = array<i64: 1, 32>}, {pipeline_mode = #tpu.pipeline_mode<synchronous>, transform_indices = @transform_5, window_bounds = array<i64: 25, 32, 32>}, {pipeline_mode = #tpu.pipeline_mode<synchronous>, transform_indices = @transform_6, window_bounds = array<i64: 1, 32>}, {pipeline_mode = #tpu.pipeline_mode<synchronous>, transform_indices = @transform_7, window_bounds = array<i64: 1, 32, 128>}, {pipeline_mode = #tpu.pipeline_mode<synchronous>, transform_indices = @transform_8, window_bounds = array<i64: 1, 128>}, {transform_indices = @transform_9, window_bounds = array<i64: 2, 128>}]} {
    %c0_i32 = arith.constant 0 : i32
    %0 = arith.cmpi eq, %arg1, %c0_i32 : i32
    %1 = arith.extui %0 : i1 to i32
    %c0_i32_0 = arith.constant 0 : i32
    %2 = arith.cmpi ne, %1, %c0_i32_0 : i32
    scf.if %2 {
      %cst_49 = arith.constant 0.000000e+00 : f32
      %70 = vector.broadcast %cst_49 : f32 to vector<50x32xf32>
      %c0_50 = arith.constant 0 : index
      %c0_51 = arith.constant 0 : index
      %71 = vector.load %arg12[%c0_50, %c0_51] : memref<50x32xf32, #tpu.memory_space<vmem>>, vector<50x32xf32>
      tpu.vector_store %arg12[%c0_50, %c0_51], %70 {strides = array<i32>} : memref<50x32xf32, #tpu.memory_space<vmem>>, vector<50x32xf32>,
    } else {
    }
    %c0 = arith.constant 0 : index
    %c0_1 = arith.constant 0 : index
    %3 = vector.load %arg3[%c0, %c0_1] : memref<128x16xbf16, #tpu.memory_space<vmem>>, vector<128x16xbf16>
    %c0_2 = arith.constant 0 : index
    %c0_3 = arith.constant 0 : index
    %4 = vector.load %arg4[%c0_2, %c0_3] : memref<1x16xf32, #tpu.memory_space<vmem>>, vector<1x16xf32>
    %c0_4 = arith.constant 0 : index
    %c0_5 = arith.constant 0 : index
    %5 = vector.load %arg12[%c0_4, %c0_5] : memref<50x32xf32, #tpu.memory_space<vmem>>, vector<50x32xf32>
    %c0_6 = arith.constant 0 : index
    %c0_7 = arith.constant 0 : index
    %c0_8 = arith.constant 0 : index
    %6 = vector.load %arg2[%c0_6, %c0_7, %c0_8] : memref<5x50x128xbf16, #tpu.memory_space<vmem>>, vector<1x50x128xbf16>
    %7 = vector.shape_cast %6 : vector<1x50x128xbf16> to vector<50x128xbf16>
    %cst = arith.constant dense<0.000000e+00> : vector<50x16xf32>
    %8 = tpu.matmul %7, %3, %cst {dimension_numbers = #tpu.dot_dimension_numbers<[1], [0], [0], [1], [0, 0, 1, 1], [], []>} : vector<50x128xbf16>, vector<128x16xbf16>, vector<50x16xf32> -> vector<50x16xf32>
    %9 = vector.broadcast %4 : vector<1x16xf32> to vector<50x16xf32>
    %10 = arith.addf %8, %9 : vector<50x16xf32>
    %cst_9 = arith.constant 0.000000e+00 : f32
    %11 = vector.broadcast %cst_9 : f32 to vector<50x16xf32>
    %12 = arith.maximumf %10, %11 : vector<50x16xf32>
    %13 = arith.truncf %12 : vector<50x16xf32> to vector<50x16xbf16>
    %c0_10 = arith.constant 0 : index
    %c0_11 = arith.constant 0 : index
    %c0_12 = arith.constant 0 : index
    %14 = vector.load %arg5[%c0_10, %c0_11, %c0_12] : memref<5x16x32xbf16, #tpu.memory_space<vmem>>, vector<1x16x32xbf16>
    %15 = vector.shape_cast %14 : vector<1x16x32xbf16> to vector<16x32xbf16>
    %cst_13 = arith.constant dense<0.000000e+00> : vector<50x32xf32>
    %16 = tpu.matmul %13, %15, %cst_13 {dimension_numbers = #tpu.dot_dimension_numbers<[1], [0], [0], [1], [0, 0, 1, 1], [], []>} : vector<50x16xbf16>, vector<16x32xbf16>, vector<50x32xf32> -> vector<50x32xf32>
    %17 = arith.addf %5, %16 : vector<50x32xf32>
    %c1 = arith.constant 1 : index
    %c0_14 = arith.constant 0 : index
    %c0_15 = arith.constant 0 : index
    %18 = vector.load %arg2[%c1, %c0_14, %c0_15] : memref<5x50x128xbf16, #tpu.memory_space<vmem>>, vector<1x50x128xbf16>
    %19 = vector.shape_cast %18 : vector<1x50x128xbf16> to vector<50x128xbf16>
    %cst_16 = arith.constant dense<0.000000e+00> : vector<50x16xf32>
    %20 = tpu.matmul %19, %3, %cst_16 {dimension_numbers = #tpu.dot_dimension_numbers<[1], [0], [0], [1], [0, 0, 1, 1], [], []>} : vector<50x128xbf16>, vector<128x16xbf16>, vector<50x16xf32> -> vector<50x16xf32>
    %21 = vector.broadcast %4 : vector<1x16xf32> to vector<50x16xf32>
    %22 = arith.addf %20, %21 : vector<50x16xf32>
    %cst_17 = arith.constant 0.000000e+00 : f32
    %23 = vector.broadcast %cst_17 : f32 to vector<50x16xf32>
    %24 = arith.maximumf %22, %23 : vector<50x16xf32>
    %25 = arith.truncf %24 : vector<50x16xf32> to vector<50x16xbf16>
    %c1_18 = arith.constant 1 : index
    %c0_19 = arith.constant 0 : index
    %c0_20 = arith.constant 0 : index
    %26 = vector.load %arg5[%c1_18, %c0_19, %c0_20] : memref<5x16x32xbf16, #tpu.memory_space<vmem>>, vector<1x16x32xbf16>
    %27 = vector.shape_cast %26 : vector<1x16x32xbf16> to vector<16x32xbf16>
    %cst_21 = arith.constant dense<0.000000e+00> : vector<50x32xf32>
    %28 = tpu.matmul %25, %27, %cst_21 {dimension_numbers = #tpu.dot_dimension_numbers<[1], [0], [0], [1], [0, 0, 1, 1], [], []>} : vector<50x16xbf16>, vector<16x32xbf16>, vector<50x32xf32> -> vector<50x32xf32>
    %29 = arith.addf %17, %28 : vector<50x32xf32>
    %c2 = arith.constant 2 : index
    %c0_22 = arith.constant 0 : index
    %c0_23 = arith.constant 0 : index
    %30 = vector.load %arg2[%c2, %c0_22, %c0_23] : memref<5x50x128xbf16, #tpu.memory_space<vmem>>, vector<1x50x128xbf16>
    %31 = vector.shape_cast %30 : vector<1x50x128xbf16> to vector<50x128xbf16>
    %cst_24 = arith.constant dense<0.000000e+00> : vector<50x16xf32>
    %32 = tpu.matmul %31, %3, %cst_24 {dimension_numbers = #tpu.dot_dimension_numbers<[1], [0], [0], [1], [0, 0, 1, 1], [], []>} : vector<50x128xbf16>, vector<128x16xbf16>, vector<50x16xf32> -> vector<50x16xf32>
    %33 = vector.broadcast %4 : vector<1x16xf32> to vector<50x16xf32>
    %34 = arith.addf %32, %33 : vector<50x16xf32>
    %cst_25 = arith.constant 0.000000e+00 : f32
    %35 = vector.broadcast %cst_25 : f32 to vector<50x16xf32>
    %36 = arith.maximumf %34, %35 : vector<50x16xf32>
    %37 = arith.truncf %36 : vector<50x16xf32> to vector<50x16xbf16>
    %c2_26 = arith.constant 2 : index
    %c0_27 = arith.constant 0 : index
    %c0_28 = arith.constant 0 : index
    %38 = vector.load %arg5[%c2_26, %c0_27, %c0_28] : memref<5x16x32xbf16, #tpu.memory_space<vmem>>, vector<1x16x32xbf16>
    %39 = vector.shape_cast %38 : vector<1x16x32xbf16> to vector<16x32xbf16>
    %cst_29 = arith.constant dense<0.000000e+00> : vector<50x32xf32>
    %40 = tpu.matmul %37, %39, %cst_29 {dimension_numbers = #tpu.dot_dimension_numbers<[1], [0], [0], [1], [0, 0, 1, 1], [], []>} : vector<50x16xbf16>, vector<16x32xbf16>, vector<50x32xf32> -> vector<50x32xf32>
    %41 = arith.addf %29, %40 : vector<50x32xf32>
    %c3 = arith.constant 3 : index
    %c0_30 = arith.constant 0 : index
    %c0_31 = arith.constant 0 : index
    %42 = vector.load %arg2[%c3, %c0_30, %c0_31] : memref<5x50x128xbf16, #tpu.memory_space<vmem>>, vector<1x50x128xbf16>
    %43 = vector.shape_cast %42 : vector<1x50x128xbf16> to vector<50x128xbf16>
    %cst_32 = arith.constant dense<0.000000e+00> : vector<50x16xf32>
    %44 = tpu.matmul %43, %3, %cst_32 {dimension_numbers = #tpu.dot_dimension_numbers<[1], [0], [0], [1], [0, 0, 1, 1], [], []>} : vector<50x128xbf16>, vector<128x16xbf16>, vector<50x16xf32> -> vector<50x16xf32>
    %45 = vector.broadcast %4 : vector<1x16xf32> to vector<50x16xf32>
    %46 = arith.addf %44, %45 : vector<50x16xf32>
    %cst_33 = arith.constant 0.000000e+00 : f32
    %47 = vector.broadcast %cst_33 : f32 to vector<50x16xf32>
    %48 = arith.maximumf %46, %47 : vector<50x16xf32>
    %49 = arith.truncf %48 : vector<50x16xf32> to vector<50x16xbf16>
    %c3_34 = arith.constant 3 : index
    %c0_35 = arith.constant 0 : index
    %c0_36 = arith.constant 0 : index
    %50 = vector.load %arg5[%c3_34, %c0_35, %c0_36] : memref<5x16x32xbf16, #tpu.memory_space<vmem>>, vector<1x16x32xbf16>
    %51 = vector.shape_cast %50 : vector<1x16x32xbf16> to vector<16x32xbf16>
    %cst_37 = arith.constant dense<0.000000e+00> : vector<50x32xf32>
    %52 = tpu.matmul %49, %51, %cst_37 {dimension_numbers = #tpu.dot_dimension_numbers<[1], [0], [0], [1], [0, 0, 1, 1], [], []>} : vector<50x16xbf16>, vector<16x32xbf16>, vector<50x32xf32> -> vector<50x32xf32>
    %53 = arith.addf %41, %52 : vector<50x32xf32>
    %c4 = arith.constant 4 : index
    %c0_38 = arith.constant 0 : index
    %c0_39 = arith.constant 0 : index
    %54 = vector.load %arg2[%c4, %c0_38, %c0_39] : memref<5x50x128xbf16, #tpu.memory_space<vmem>>, vector<1x50x128xbf16>
    %55 = vector.shape_cast %54 : vector<1x50x128xbf16> to vector<50x128xbf16>
    %cst_40 = arith.constant dense<0.000000e+00> : vector<50x16xf32>
    %56 = tpu.matmul %55, %3, %cst_40 {dimension_numbers = #tpu.dot_dimension_numbers<[1], [0], [0], [1], [0, 0, 1, 1], [], []>} : vector<50x128xbf16>, vector<128x16xbf16>, vector<50x16xf32> -> vector<50x16xf32>
    %57 = vector.broadcast %4 : vector<1x16xf32> to vector<50x16xf32>
    %58 = arith.addf %56, %57 : vector<50x16xf32>
    %cst_41 = arith.constant 0.000000e+00 : f32
    %59 = vector.broadcast %cst_41 : f32 to vector<50x16xf32>
    %60 = arith.maximumf %58, %59 : vector<50x16xf32>
    %61 = arith.truncf %60 : vector<50x16xf32> to vector<50x16xbf16>
    %c4_42 = arith.constant 4 : index
    %c0_43 = arith.constant 0 : index
    %c0_44 = arith.constant 0 : index
    %62 = vector.load %arg5[%c4_42, %c0_43, %c0_44] : memref<5x16x32xbf16, #tpu.memory_space<vmem>>, vector<1x16x32xbf16>
    %63 = vector.shape_cast %62 : vector<1x16x32xbf16> to vector<16x32xbf16>
    %cst_45 = arith.constant dense<0.000000e+00> : vector<50x32xf32>
    %64 = tpu.matmul %61, %63, %cst_45 {dimension_numbers = #tpu.dot_dimension_numbers<[1], [0], [0], [1], [0, 0, 1, 1], [], []>} : vector<50x16xbf16>, vector<16x32xbf16>, vector<50x32xf32> -> vector<50x32xf32>
    %65 = arith.addf %53, %64 : vector<50x32xf32>
    %c0_46 = arith.constant 0 : index
    %c0_47 = arith.constant 0 : index
    %66 = vector.load %arg12[%c0_46, %c0_47] : memref<50x32xf32, #tpu.memory_space<vmem>>, vector<50x32xf32>
    tpu.vector_store %arg12[%c0_46, %c0_47], %65 {strides = array<i32>} : memref<50x32xf32, #tpu.memory_space<vmem>>, vector<50x32xf32>,
    %c4_i32 = arith.constant 4 : i32
    %67 = arith.cmpi eq, %arg1, %c4_i32 : i32
    %68 = arith.extui %67 : i1 to i32
    %c0_i32_48 = arith.constant 0 : i32
    %69 = arith.cmpi ne, %68, %c0_i32_48 : i32
    scf.if %69 {
      %c0_49 = arith.constant 0 : index
      %c0_50 = arith.constant 0 : index
      %70 = vector.load %arg12[%c0_49, %c0_50] : memref<50x32xf32, #tpu.memory_space<vmem>>, vector<50x32xf32>
      %c0_51 = arith.constant 0 : index
      %c0_52 = arith.constant 0 : index
      %71 = vector.load %arg6[%c0_51, %c0_52] : memref<1x32xf32, #tpu.memory_space<vmem>>, vector<1x32xf32>
      %72 = vector.broadcast %71 : vector<1x32xf32> to vector<50x32xf32>
      %73 = arith.addf %70, %72 : vector<50x32xf32>
      %cst_53 = arith.constant 0.000000e+00 : f32
      %74 = vector.broadcast %cst_53 : f32 to vector<50x32xf32>
      %75 = arith.maximumf %73, %74 : vector<50x32xf32>
      %76 = arith.truncf %75 : vector<50x32xf32> to vector<50x32xbf16>
      %cst_54 = arith.constant 0.000000e+00 : f32
      %77 = vector.broadcast %cst_54 : f32 to vector<2x32xf32>
      %78 = vector.extract_strided_slice %76 {offsets = [0, 0], sizes = [2, 32], strides = [1, 1]} : vector<50x32xbf16> to vector<2x32xbf16>
      %c0_55 = arith.constant 0 : index
      %c0_56 = arith.constant 0 : index
      %c0_57 = arith.constant 0 : index
      %79 = vector.load %arg7[%c0_55, %c0_56, %c0_57] : memref<25x32x32xbf16, #tpu.memory_space<vmem>>, vector<1x32x32xbf16>
      %80 = vector.shape_cast %79 : vector<1x32x32xbf16> to vector<32x32xbf16>
      %cst_58 = arith.constant dense<0.000000e+00> : vector<2x32xf32>
      %81 = tpu.matmul %78, %80, %cst_58 {dimension_numbers = #tpu.dot_dimension_numbers<[1], [0], [0], [1], [0, 0, 1, 1], [], []>} : vector<2x32xbf16>, vector<32x32xbf16>, vector<2x32xf32> -> vector<2x32xf32>
      %82 = arith.addf %77, %81 : vector<2x32xf32>
      %83 = vector.extract_strided_slice %76 {offsets = [2, 0], sizes = [2, 32], strides = [1, 1]} : vector<50x32xbf16> to vector<2x32xbf16>
      %c1_59 = arith.constant 1 : index
      %c0_60 = arith.constant 0 : index
      %c0_61 = arith.constant 0 : index
      %84 = vector.load %arg7[%c1_59, %c0_60, %c0_61] : memref<25x32x32xbf16, #tpu.memory_space<vmem>>, vector<1x32x32xbf16>
      %85 = vector.shape_cast %84 : vector<1x32x32xbf16> to vector<32x32xbf16>
      %cst_62 = arith.constant dense<0.000000e+00> : vector<2x32xf32>
      %86 = tpu.matmul %83, %85, %cst_62 {dimension_numbers = #tpu.dot_dimension_numbers<[1], [0], [0], [1], [0, 0, 1, 1], [], []>} : vector<2x32xbf16>, vector<32x32xbf16>, vector<2x32xf32> -> vector<2x32xf32>
      %87 = arith.addf %82, %86 : vector<2x32xf32>
      %88 = vector.extract_strided_slice %76 {offsets = [4, 0], sizes = [2, 32], strides = [1, 1]} : vector<50x32xbf16> to vector<2x32xbf16>
      %c2_63 = arith.constant 2 : index
      %c0_64 = arith.constant 0 : index
      %c0_65 = arith.constant 0 : index
      %89 = vector.load %arg7[%c2_63, %c0_64, %c0_65] : memref<25x32x32xbf16, #tpu.memory_space<vmem>>, vector<1x32x32xbf16>
      %90 = vector.shape_cast %89 : vector<1x32x32xbf16> to vector<32x32xbf16>
      %cst_66 = arith.constant dense<0.000000e+00> : vector<2x32xf32>
      %91 = tpu.matmul %88, %90, %cst_66 {dimension_numbers = #tpu.dot_dimension_numbers<[1], [0], [0], [1], [0, 0, 1, 1], [], []>} : vector<2x32xbf16>, vector<32x32xbf16>, vector<2x32xf32> -> vector<2x32xf32>
      %92 = arith.addf %87, %91 : vector<2x32xf32>
      %93 = vector.extract_strided_slice %76 {offsets = [6, 0], sizes = [2, 32], strides = [1, 1]} : vector<50x32xbf16> to vector<2x32xbf16>
      %c3_67 = arith.constant 3 : index
      %c0_68 = arith.constant 0 : index
      %c0_69 = arith.constant 0 : index
      %94 = vector.load %arg7[%c3_67, %c0_68, %c0_69] : memref<25x32x32xbf16, #tpu.memory_space<vmem>>, vector<1x32x32xbf16>
      %95 = vector.shape_cast %94 : vector<1x32x32xbf16> to vector<32x32xbf16>
      %cst_70 = arith.constant dense<0.000000e+00> : vector<2x32xf32>
      %96 = tpu.matmul %93, %95, %cst_70 {dimension_numbers = #tpu.dot_dimension_numbers<[1], [0], [0], [1], [0, 0, 1, 1], [], []>} : vector<2x32xbf16>, vector<32x32xbf16>, vector<2x32xf32> -> vector<2x32xf32>
      %97 = arith.addf %92, %96 : vector<2x32xf32>
      %98 = vector.extract_strided_slice %76 {offsets = [8, 0], sizes = [2, 32], strides = [1, 1]} : vector<50x32xbf16> to vector<2x32xbf16>
      %c4_71 = arith.constant 4 : index
      %c0_72 = arith.constant 0 : index
      %c0_73 = arith.constant 0 : index
      %99 = vector.load %arg7[%c4_71, %c0_72, %c0_73] : memref<25x32x32xbf16, #tpu.memory_space<vmem>>, vector<1x32x32xbf16>
      %100 = vector.shape_cast %99 : vector<1x32x32xbf16> to vector<32x32xbf16>
      %cst_74 = arith.constant dense<0.000000e+00> : vector<2x32xf32>
      %101 = tpu.matmul %98, %100, %cst_74 {dimension_numbers = #tpu.dot_dimension_numbers<[1], [0], [0], [1], [0, 0, 1, 1], [], []>} : vector<2x32xbf16>, vector<32x32xbf16>, vector<2x32xf32> -> vector<2x32xf32>
      %102 = arith.addf %97, %101 : vector<2x32xf32>
      %103 = vector.extract_strided_slice %76 {offsets = [10, 0], sizes = [2, 32], strides = [1, 1]} : vector<50x32xbf16> to vector<2x32xbf16>
      %c5 = arith.constant 5 : index
      %c0_75 = arith.constant 0 : index
      %c0_76 = arith.constant 0 : index
      %104 = vector.load %arg7[%c5, %c0_75, %c0_76] : memref<25x32x32xbf16, #tpu.memory_space<vmem>>, vector<1x32x32xbf16>
      %105 = vector.shape_cast %104 : vector<1x32x32xbf16> to vector<32x32xbf16>
      %cst_77 = arith.constant dense<0.000000e+00> : vector<2x32xf32>
      %106 = tpu.matmul %103, %105, %cst_77 {dimension_numbers = #tpu.dot_dimension_numbers<[1], [0], [0], [1], [0, 0, 1, 1], [], []>} : vector<2x32xbf16>, vector<32x32xbf16>, vector<2x32xf32> -> vector<2x32xf32>
      %107 = arith.addf %102, %106 : vector<2x32xf32>
      %108 = vector.extract_strided_slice %76 {offsets = [12, 0], sizes = [2, 32], strides = [1, 1]} : vector<50x32xbf16> to vector<2x32xbf16>
      %c6 = arith.constant 6 : index
      %c0_78 = arith.constant 0 : index
      %c0_79 = arith.constant 0 : index
      %109 = vector.load %arg7[%c6, %c0_78, %c0_79] : memref<25x32x32xbf16, #tpu.memory_space<vmem>>, vector<1x32x32xbf16>
      %110 = vector.shape_cast %109 : vector<1x32x32xbf16> to vector<32x32xbf16>
      %cst_80 = arith.constant dense<0.000000e+00> : vector<2x32xf32>
      %111 = tpu.matmul %108, %110, %cst_80 {dimension_numbers = #tpu.dot_dimension_numbers<[1], [0], [0], [1], [0, 0, 1, 1], [], []>} : vector<2x32xbf16>, vector<32x32xbf16>, vector<2x32xf32> -> vector<2x32xf32>
      %112 = arith.addf %107, %111 : vector<2x32xf32>
      %113 = vector.extract_strided_slice %76 {offsets = [14, 0], sizes = [2, 32], strides = [1, 1]} : vector<50x32xbf16> to vector<2x32xbf16>
      %c7 = arith.constant 7 : index
      %c0_81 = arith.constant 0 : index
      %c0_82 = arith.constant 0 : index
      %114 = vector.load %arg7[%c7, %c0_81, %c0_82] : memref<25x32x32xbf16, #tpu.memory_space<vmem>>, vector<1x32x32xbf16>
      %115 = vector.shape_cast %114 : vector<1x32x32xbf16> to vector<32x32xbf16>
      %cst_83 = arith.constant dense<0.000000e+00> : vector<2x32xf32>
      %116 = tpu.matmul %113, %115, %cst_83 {dimension_numbers = #tpu.dot_dimension_numbers<[1], [0], [0], [1], [0, 0, 1, 1], [], []>} : vector<2x32xbf16>, vector<32x32xbf16>, vector<2x32xf32> -> vector<2x32xf32>
      %117 = arith.addf %112, %116 : vector<2x32xf32>
      %118 = vector.extract_strided_slice %76 {offsets = [16, 0], sizes = [2, 32], strides = [1, 1]} : vector<50x32xbf16> to vector<2x32xbf16>
      %c8 = arith.constant 8 : index
      %c0_84 = arith.constant 0 : index
      %c0_85 = arith.constant 0 : index
      %119 = vector.load %arg7[%c8, %c0_84, %c0_85] : memref<25x32x32xbf16, #tpu.memory_space<vmem>>, vector<1x32x32xbf16>
      %120 = vector.shape_cast %119 : vector<1x32x32xbf16> to vector<32x32xbf16>
      %cst_86 = arith.constant dense<0.000000e+00> : vector<2x32xf32>
      %121 = tpu.matmul %118, %120, %cst_86 {dimension_numbers = #tpu.dot_dimension_numbers<[1], [0], [0], [1], [0, 0, 1, 1], [], []>} : vector<2x32xbf16>, vector<32x32xbf16>, vector<2x32xf32> -> vector<2x32xf32>
      %122 = arith.addf %117, %121 : vector<2x32xf32>
      %123 = vector.extract_strided_slice %76 {offsets = [18, 0], sizes = [2, 32], strides = [1, 1]} : vector<50x32xbf16> to vector<2x32xbf16>
      %c9 = arith.constant 9 : index
      %c0_87 = arith.constant 0 : index
      %c0_88 = arith.constant 0 : index
      %124 = vector.load %arg7[%c9, %c0_87, %c0_88] : memref<25x32x32xbf16, #tpu.memory_space<vmem>>, vector<1x32x32xbf16>
      %125 = vector.shape_cast %124 : vector<1x32x32xbf16> to vector<32x32xbf16>
      %cst_89 = arith.constant dense<0.000000e+00> : vector<2x32xf32>
      %126 = tpu.matmul %123, %125, %cst_89 {dimension_numbers = #tpu.dot_dimension_numbers<[1], [0], [0], [1], [0, 0, 1, 1], [], []>} : vector<2x32xbf16>, vector<32x32xbf16>, vector<2x32xf32> -> vector<2x32xf32>
      %127 = arith.addf %122, %126 : vector<2x32xf32>
      %128 = vector.extract_strided_slice %76 {offsets = [20, 0], sizes = [2, 32], strides = [1, 1]} : vector<50x32xbf16> to vector<2x32xbf16>
      %c10 = arith.constant 10 : index
      %c0_90 = arith.constant 0 : index
      %c0_91 = arith.constant 0 : index
      %129 = vector.load %arg7[%c10, %c0_90, %c0_91] : memref<25x32x32xbf16, #tpu.memory_space<vmem>>, vector<1x32x32xbf16>
      %130 = vector.shape_cast %129 : vector<1x32x32xbf16> to vector<32x32xbf16>
      %cst_92 = arith.constant dense<0.000000e+00> : vector<2x32xf32>
      %131 = tpu.matmul %128, %130, %cst_92 {dimension_numbers = #tpu.dot_dimension_numbers<[1], [0], [0], [1], [0, 0, 1, 1], [], []>} : vector<2x32xbf16>, vector<32x32xbf16>, vector<2x32xf32> -> vector<2x32xf32>
      %132 = arith.addf %127, %131 : vector<2x32xf32>
      %133 = vector.extract_strided_slice %76 {offsets = [22, 0], sizes = [2, 32], strides = [1, 1]} : vector<50x32xbf16> to vector<2x32xbf16>
      %c11 = arith.constant 11 : index
      %c0_93 = arith.constant 0 : index
      %c0_94 = arith.constant 0 : index
      %134 = vector.load %arg7[%c11, %c0_93, %c0_94] : memref<25x32x32xbf16, #tpu.memory_space<vmem>>, vector<1x32x32xbf16>
      %135 = vector.shape_cast %134 : vector<1x32x32xbf16> to vector<32x32xbf16>
      %cst_95 = arith.constant dense<0.000000e+00> : vector<2x32xf32>
      %136 = tpu.matmul %133, %135, %cst_95 {dimension_numbers = #tpu.dot_dimension_numbers<[1], [0], [0], [1], [0, 0, 1, 1], [], []>} : vector<2x32xbf16>, vector<32x32xbf16>, vector<2x32xf32> -> vector<2x32xf32>
      %137 = arith.addf %132, %136 : vector<2x32xf32>
      %138 = vector.extract_strided_slice %76 {offsets = [24, 0], sizes = [2, 32], strides = [1, 1]} : vector<50x32xbf16> to vector<2x32xbf16>
      %c12 = arith.constant 12 : index
      %c0_96 = arith.constant 0 : index
      %c0_97 = arith.constant 0 : index
      %139 = vector.load %arg7[%c12, %c0_96, %c0_97] : memref<25x32x32xbf16, #tpu.memory_space<vmem>>, vector<1x32x32xbf16>
      %140 = vector.shape_cast %139 : vector<1x32x32xbf16> to vector<32x32xbf16>
      %cst_98 = arith.constant dense<0.000000e+00> : vector<2x32xf32>
      %141 = tpu.matmul %138, %140, %cst_98 {dimension_numbers = #tpu.dot_dimension_numbers<[1], [0], [0], [1], [0, 0, 1, 1], [], []>} : vector<2x32xbf16>, vector<32x32xbf16>, vector<2x32xf32> -> vector<2x32xf32>
      %142 = arith.addf %137, %141 : vector<2x32xf32>
      %143 = vector.extract_strided_slice %76 {offsets = [26, 0], sizes = [2, 32], strides = [1, 1]} : vector<50x32xbf16> to vector<2x32xbf16>
      %c13 = arith.constant 13 : index
      %c0_99 = arith.constant 0 : index
      %c0_100 = arith.constant 0 : index
      %144 = vector.load %arg7[%c13, %c0_99, %c0_100] : memref<25x32x32xbf16, #tpu.memory_space<vmem>>, vector<1x32x32xbf16>
      %145 = vector.shape_cast %144 : vector<1x32x32xbf16> to vector<32x32xbf16>
      %cst_101 = arith.constant dense<0.000000e+00> : vector<2x32xf32>
      %146 = tpu.matmul %143, %145, %cst_101 {dimension_numbers = #tpu.dot_dimension_numbers<[1], [0], [0], [1], [0, 0, 1, 1], [], []>} : vector<2x32xbf16>, vector<32x32xbf16>, vector<2x32xf32> -> vector<2x32xf32>
      %147 = arith.addf %142, %146 : vector<2x32xf32>
      %148 = vector.extract_strided_slice %76 {offsets = [28, 0], sizes = [2, 32], strides = [1, 1]} : vector<50x32xbf16> to vector<2x32xbf16>
      %c14 = arith.constant 14 : index
      %c0_102 = arith.constant 0 : index
      %c0_103 = arith.constant 0 : index
      %149 = vector.load %arg7[%c14, %c0_102, %c0_103] : memref<25x32x32xbf16, #tpu.memory_space<vmem>>, vector<1x32x32xbf16>
      %150 = vector.shape_cast %149 : vector<1x32x32xbf16> to vector<32x32xbf16>
      %cst_104 = arith.constant dense<0.000000e+00> : vector<2x32xf32>
      %151 = tpu.matmul %148, %150, %cst_104 {dimension_numbers = #tpu.dot_dimension_numbers<[1], [0], [0], [1], [0, 0, 1, 1], [], []>} : vector<2x32xbf16>, vector<32x32xbf16>, vector<2x32xf32> -> vector<2x32xf32>
      %152 = arith.addf %147, %151 : vector<2x32xf32>
      %153 = vector.extract_strided_slice %76 {offsets = [30, 0], sizes = [2, 32], strides = [1, 1]} : vector<50x32xbf16> to vector<2x32xbf16>
      %c15 = arith.constant 15 : index
      %c0_105 = arith.constant 0 : index
      %c0_106 = arith.constant 0 : index
      %154 = vector.load %arg7[%c15, %c0_105, %c0_106] : memref<25x32x32xbf16, #tpu.memory_space<vmem>>, vector<1x32x32xbf16>
      %155 = vector.shape_cast %154 : vector<1x32x32xbf16> to vector<32x32xbf16>
      %cst_107 = arith.constant dense<0.000000e+00> : vector<2x32xf32>
      %156 = tpu.matmul %153, %155, %cst_107 {dimension_numbers = #tpu.dot_dimension_numbers<[1], [0], [0], [1], [0, 0, 1, 1], [], []>} : vector<2x32xbf16>, vector<32x32xbf16>, vector<2x32xf32> -> vector<2x32xf32>
      %157 = arith.addf %152, %156 : vector<2x32xf32>
      %158 = vector.extract_strided_slice %76 {offsets = [32, 0], sizes = [2, 32], strides = [1, 1]} : vector<50x32xbf16> to vector<2x32xbf16>
      %c16 = arith.constant 16 : index
      %c0_108 = arith.constant 0 : index
      %c0_109 = arith.constant 0 : index
      %159 = vector.load %arg7[%c16, %c0_108, %c0_109] : memref<25x32x32xbf16, #tpu.memory_space<vmem>>, vector<1x32x32xbf16>
      %160 = vector.shape_cast %159 : vector<1x32x32xbf16> to vector<32x32xbf16>
      %cst_110 = arith.constant dense<0.000000e+00> : vector<2x32xf32>
      %161 = tpu.matmul %158, %160, %cst_110 {dimension_numbers = #tpu.dot_dimension_numbers<[1], [0], [0], [1], [0, 0, 1, 1], [], []>} : vector<2x32xbf16>, vector<32x32xbf16>, vector<2x32xf32> -> vector<2x32xf32>
      %162 = arith.addf %157, %161 : vector<2x32xf32>
      %163 = vector.extract_strided_slice %76 {offsets = [34, 0], sizes = [2, 32], strides = [1, 1]} : vector<50x32xbf16> to vector<2x32xbf16>
      %c17 = arith.constant 17 : index
      %c0_111 = arith.constant 0 : index
      %c0_112 = arith.constant 0 : index
      %164 = vector.load %arg7[%c17, %c0_111, %c0_112] : memref<25x32x32xbf16, #tpu.memory_space<vmem>>, vector<1x32x32xbf16>
      %165 = vector.shape_cast %164 : vector<1x32x32xbf16> to vector<32x32xbf16>
      %cst_113 = arith.constant dense<0.000000e+00> : vector<2x32xf32>
      %166 = tpu.matmul %163, %165, %cst_113 {dimension_numbers = #tpu.dot_dimension_numbers<[1], [0], [0], [1], [0, 0, 1, 1], [], []>} : vector<2x32xbf16>, vector<32x32xbf16>, vector<2x32xf32> -> vector<2x32xf32>
      %167 = arith.addf %162, %166 : vector<2x32xf32>
      %168 = vector.extract_strided_slice %76 {offsets = [36, 0], sizes = [2, 32], strides = [1, 1]} : vector<50x32xbf16> to vector<2x32xbf16>
      %c18 = arith.constant 18 : index
      %c0_114 = arith.constant 0 : index
      %c0_115 = arith.constant 0 : index
      %169 = vector.load %arg7[%c18, %c0_114, %c0_115] : memref<25x32x32xbf16, #tpu.memory_space<vmem>>, vector<1x32x32xbf16>
      %170 = vector.shape_cast %169 : vector<1x32x32xbf16> to vector<32x32xbf16>
      %cst_116 = arith.constant dense<0.000000e+00> : vector<2x32xf32>
      %171 = tpu.matmul %168, %170, %cst_116 {dimension_numbers = #tpu.dot_dimension_numbers<[1], [0], [0], [1], [0, 0, 1, 1], [], []>} : vector<2x32xbf16>, vector<32x32xbf16>, vector<2x32xf32> -> vector<2x32xf32>
      %172 = arith.addf %167, %171 : vector<2x32xf32>
      %173 = vector.extract_strided_slice %76 {offsets = [38, 0], sizes = [2, 32], strides = [1, 1]} : vector<50x32xbf16> to vector<2x32xbf16>
      %c19 = arith.constant 19 : index
      %c0_117 = arith.constant 0 : index
      %c0_118 = arith.constant 0 : index
      %174 = vector.load %arg7[%c19, %c0_117, %c0_118] : memref<25x32x32xbf16, #tpu.memory_space<vmem>>, vector<1x32x32xbf16>
      %175 = vector.shape_cast %174 : vector<1x32x32xbf16> to vector<32x32xbf16>
      %cst_119 = arith.constant dense<0.000000e+00> : vector<2x32xf32>
      %176 = tpu.matmul %173, %175, %cst_119 {dimension_numbers = #tpu.dot_dimension_numbers<[1], [0], [0], [1], [0, 0, 1, 1], [], []>} : vector<2x32xbf16>, vector<32x32xbf16>, vector<2x32xf32> -> vector<2x32xf32>
      %177 = arith.addf %172, %176 : vector<2x32xf32>
      %178 = vector.extract_strided_slice %76 {offsets = [40, 0], sizes = [2, 32], strides = [1, 1]} : vector<50x32xbf16> to vector<2x32xbf16>
      %c20 = arith.constant 20 : index
      %c0_120 = arith.constant 0 : index
      %c0_121 = arith.constant 0 : index
      %179 = vector.load %arg7[%c20, %c0_120, %c0_121] : memref<25x32x32xbf16, #tpu.memory_space<vmem>>, vector<1x32x32xbf16>
      %180 = vector.shape_cast %179 : vector<1x32x32xbf16> to vector<32x32xbf16>
      %cst_122 = arith.constant dense<0.000000e+00> : vector<2x32xf32>
      %181 = tpu.matmul %178, %180, %cst_122 {dimension_numbers = #tpu.dot_dimension_numbers<[1], [0], [0], [1], [0, 0, 1, 1], [], []>} : vector<2x32xbf16>, vector<32x32xbf16>, vector<2x32xf32> -> vector<2x32xf32>
      %182 = arith.addf %177, %181 : vector<2x32xf32>
      %183 = vector.extract_strided_slice %76 {offsets = [42, 0], sizes = [2, 32], strides = [1, 1]} : vector<50x32xbf16> to vector<2x32xbf16>
      %c21 = arith.constant 21 : index
      %c0_123 = arith.constant 0 : index
      %c0_124 = arith.constant 0 : index
      %184 = vector.load %arg7[%c21, %c0_123, %c0_124] : memref<25x32x32xbf16, #tpu.memory_space<vmem>>, vector<1x32x32xbf16>
      %185 = vector.shape_cast %184 : vector<1x32x32xbf16> to vector<32x32xbf16>
      %cst_125 = arith.constant dense<0.000000e+00> : vector<2x32xf32>
      %186 = tpu.matmul %183, %185, %cst_125 {dimension_numbers = #tpu.dot_dimension_numbers<[1], [0], [0], [1], [0, 0, 1, 1], [], []>} : vector<2x32xbf16>, vector<32x32xbf16>, vector<2x32xf32> -> vector<2x32xf32>
      %187 = arith.addf %182, %186 : vector<2x32xf32>
      %188 = vector.extract_strided_slice %76 {offsets = [44, 0], sizes = [2, 32], strides = [1, 1]} : vector<50x32xbf16> to vector<2x32xbf16>
      %c22 = arith.constant 22 : index
      %c0_126 = arith.constant 0 : index
      %c0_127 = arith.constant 0 : index
      %189 = vector.load %arg7[%c22, %c0_126, %c0_127] : memref<25x32x32xbf16, #tpu.memory_space<vmem>>, vector<1x32x32xbf16>
      %190 = vector.shape_cast %189 : vector<1x32x32xbf16> to vector<32x32xbf16>
      %cst_128 = arith.constant dense<0.000000e+00> : vector<2x32xf32>
      %191 = tpu.matmul %188, %190, %cst_128 {dimension_numbers = #tpu.dot_dimension_numbers<[1], [0], [0], [1], [0, 0, 1, 1], [], []>} : vector<2x32xbf16>, vector<32x32xbf16>, vector<2x32xf32> -> vector<2x32xf32>
      %192 = arith.addf %187, %191 : vector<2x32xf32>
      %193 = vector.extract_strided_slice %76 {offsets = [46, 0], sizes = [2, 32], strides = [1, 1]} : vector<50x32xbf16> to vector<2x32xbf16>
      %c23 = arith.constant 23 : index
      %c0_129 = arith.constant 0 : index
      %c0_130 = arith.constant 0 : index
      %194 = vector.load %arg7[%c23, %c0_129, %c0_130] : memref<25x32x32xbf16, #tpu.memory_space<vmem>>, vector<1x32x32xbf16>
      %195 = vector.shape_cast %194 : vector<1x32x32xbf16> to vector<32x32xbf16>
      %cst_131 = arith.constant dense<0.000000e+00> : vector<2x32xf32>
      %196 = tpu.matmul %193, %195, %cst_131 {dimension_numbers = #tpu.dot_dimension_numbers<[1], [0], [0], [1], [0, 0, 1, 1], [], []>} : vector<2x32xbf16>, vector<32x32xbf16>, vector<2x32xf32> -> vector<2x32xf32>
      %197 = arith.addf %192, %196 : vector<2x32xf32>
      %198 = vector.extract_strided_slice %76 {offsets = [48, 0], sizes = [2, 32], strides = [1, 1]} : vector<50x32xbf16> to vector<2x32xbf16>
      %c24 = arith.constant 24 : index
      %c0_132 = arith.constant 0 : index
      %c0_133 = arith.constant 0 : index
      %199 = vector.load %arg7[%c24, %c0_132, %c0_133] : memref<25x32x32xbf16, #tpu.memory_space<vmem>>, vector<1x32x32xbf16>
      %200 = vector.shape_cast %199 : vector<1x32x32xbf16> to vector<32x32xbf16>
      %cst_134 = arith.constant dense<0.000000e+00> : vector<2x32xf32>
      %201 = tpu.matmul %198, %200, %cst_134 {dimension_numbers = #tpu.dot_dimension_numbers<[1], [0], [0], [1], [0, 0, 1, 1], [], []>} : vector<2x32xbf16>, vector<32x32xbf16>, vector<2x32xf32> -> vector<2x32xf32>
      %202 = arith.addf %197, %201 : vector<2x32xf32>
      %c0_135 = arith.constant 0 : index
      %c0_136 = arith.constant 0 : index
      %203 = vector.load %arg8[%c0_135, %c0_136] : memref<1x32xf32, #tpu.memory_space<vmem>>, vector<1x32xf32>
      %204 = vector.broadcast %203 : vector<1x32xf32> to vector<2x32xf32>
      %205 = arith.addf %202, %204 : vector<2x32xf32>
      %cst_137 = arith.constant 0.000000e+00 : f32
      %206 = vector.broadcast %cst_137 : f32 to vector<2x32xf32>
      %207 = arith.maximumf %205, %206 : vector<2x32xf32>
      %208 = arith.truncf %207 : vector<2x32xf32> to vector<2x32xbf16>
      %cst_138 = arith.constant 0.000000e+00 : f32
      %209 = vector.broadcast %cst_138 : f32 to vector<2x128xf32>
      %c0_139 = arith.constant 0 : index
      %c0_140 = arith.constant 0 : index
      %c0_141 = arith.constant 0 : index
      %210 = vector.load %arg9[%c0_139, %c0_140, %c0_141] : memref<1x32x128xbf16, #tpu.memory_space<vmem>>, vector<1x32x128xbf16>
      %211 = vector.shape_cast %210 : vector<1x32x128xbf16> to vector<32x128xbf16>
      %cst_142 = arith.constant dense<0.000000e+00> : vector<2x128xf32>
      %212 = tpu.matmul %208, %211, %cst_142 {dimension_numbers = #tpu.dot_dimension_numbers<[1], [0], [0], [1], [0, 0, 1, 1], [], []>} : vector<2x32xbf16>, vector<32x128xbf16>, vector<2x128xf32> -> vector<2x128xf32>
      %213 = arith.addf %209, %212 : vector<2x128xf32>
      %c0_143 = arith.constant 0 : index
      %c0_144 = arith.constant 0 : index
      %214 = vector.load %arg10[%c0_143, %c0_144] : memref<1x128xf32, #tpu.memory_space<vmem>>, vector<1x128xf32>
      %215 = vector.broadcast %214 : vector<1x128xf32> to vector<2x128xf32>
      %216 = arith.addf %213, %215 : vector<2x128xf32>
      %c0_145 = arith.constant 0 : index
      %c0_146 = arith.constant 0 : index
      %217 = vector.load %arg11[%c0_145, %c0_146] : memref<2x128xf32, #tpu.memory_space<vmem>>, vector<2x128xf32>
      tpu.vector_store %arg11[%c0_145, %c0_146], %216 {strides = array<i32>} : memref<2x128xf32, #tpu.memory_space<vmem>>, vector<2x128xf32>,
    } else {
    }
    return
  }
  func.func @transform_0(%arg0: i32, %arg1: i32) -> (i32, i32, i32) {
    %c5_i32 = arith.constant 5 : i32
    %0 = arith.muli %arg0, %c5_i32 : i32
    %1 = arith.addi %0, %arg1 : i32
    %c0_i32 = arith.constant 0 : i32
    %c0_i32_0 = arith.constant 0 : i32
    %c0_i32_1 = arith.constant 0 : i32
    return %1, %c0_i32, %c0_i32_0 : i32, i32, i32
  }
  func.func @transform_1(%arg0: i32, %arg1: i32) -> (i32, i32) {
    %c0_i32 = arith.constant 0 : i32
    %c0_i32_0 = arith.constant 0 : i32
    %c0_i32_1 = arith.constant 0 : i32
    return %c0_i32, %c0_i32_0 : i32, i32
  }
  func.func @transform_2(%arg0: i32, %arg1: i32) -> (i32, i32) {
    %c0_i32 = arith.constant 0 : i32
    %c0_i32_0 = arith.constant 0 : i32
    %c0_i32_1 = arith.constant 0 : i32
    return %c0_i32, %c0_i32_0 : i32, i32
  }
  func.func @transform_3(%arg0: i32, %arg1: i32) -> (i32, i32, i32) {
    %c0_i32 = arith.constant 0 : i32
    %c0_i32_0 = arith.constant 0 : i32
    %c0_i32_1 = arith.constant 0 : i32
    return %arg1, %c0_i32, %c0_i32_0 : i32, i32, i32
  }
  func.func @transform_4(%arg0: i32, %arg1: i32) -> (i32, i32) {
    %c0_i32 = arith.constant 0 : i32
    %c0_i32_0 = arith.constant 0 : i32
    %c0_i32_1 = arith.constant 0 : i32
    return %c0_i32, %c0_i32_0 : i32, i32
  }
  func.func @transform_5(%arg0: i32, %arg1: i32) -> (i32, i32, i32) {
    %c0_i32 = arith.constant 0 : i32
    %c0_i32_0 = arith.constant 0 : i32
    %c0_i32_1 = arith.constant 0 : i32
    %c0_i32_2 = arith.constant 0 : i32
    return %c0_i32, %c0_i32_0, %c0_i32_1 : i32, i32, i32
  }
  func.func @transform_6(%arg0: i32, %arg1: i32) -> (i32, i32) {
    %c0_i32 = arith.constant 0 : i32
    %c0_i32_0 = arith.constant 0 : i32
    %c0_i32_1 = arith.constant 0 : i32
    return %c0_i32, %c0_i32_0 : i32, i32
  }
  func.func @transform_7(%arg0: i32, %arg1: i32) -> (i32, i32, i32) {
    %c0_i32 = arith.constant 0 : i32
    %c0_i32_0 = arith.constant 0 : i32
    %c0_i32_1 = arith.constant 0 : i32
    %c0_i32_2 = arith.constant 0 : i32
    return %c0_i32, %c0_i32_0, %c0_i32_1 : i32, i32, i32
  }
  func.func @transform_8(%arg0: i32, %arg1: i32) -> (i32, i32) {
    %c0_i32 = arith.constant 0 : i32
    %c0_i32_0 = arith.constant 0 : i32
    %c0_i32_1 = arith.constant 0 : i32
    return %c0_i32, %c0_i32_0 : i32, i32
  }
  func.func @transform_9(%arg0: i32, %arg1: i32) -> (i32, i32) {
    %c0_i32 = arith.constant 0 : i32
    %c0_i32_0 = arith.constant 0 : i32
    return %arg0, %c0_i32 : i32, i32
  }
}

</mosaic_0001>

<llo_original>
// kernel: dqn_conv_forward.1
$region0: #{dqn_conv_forward.1}
  #allocation0 [shape = 'u32[]', space=smem, size = 0x4, offset = 0x4, fixed_abs, tag = 'smem constant byte address 0x4 - core index']
  #allocation1 [shape = 'u32[144,128]{1,0:T(1,128)}', space=vmem, size = 0x12000, scoped, tag = 'internal scratch']
  #allocation2 [shape = 'f32[50,32]{1,0:T(8,128)}', space=vmem, size = 0x7000, scoped, tag = 'scratch operand']
  %s0 = inlined_call_operand.vmem [shape: bf16[25,50,128], index: 0, kind: input, shape index: {}]
  %s1 = inlined_call_operand.vmem [shape: bf16[128,16], index: 1, kind: input, shape index: {}]
  %s2 = inlined_call_operand.vmem [shape: f32[1,16], index: 2, kind: input, shape index: {}]
  %s3 = inlined_call_operand.vmem [shape: bf16[25,16,32], index: 3, kind: input, shape index: {}]
  %s4 = inlined_call_operand.vmem [shape: f32[1,32], index: 4, kind: input, shape index: {}]
  %s5 = inlined_call_operand.vmem [shape: bf16[25,32,32], index: 5, kind: input, shape index: {}]
  %s6 = inlined_call_operand.vmem [shape: f32[1,32], index: 6, kind: input, shape index: {}]
  %s7 = inlined_call_operand.vmem [shape: bf16[1,32,128], index: 7, kind: input, shape index: {}]
  %s8 = inlined_call_operand.vmem [shape: f32[1,128], index: 8, kind: input, shape index: {}]
  %s9 = inlined_call_operand.hbm [shape: f32[2,128], index: 9, kind: output, shape index: {}]
  %s10 = sld [smem:[#allocation0]]
  $region77: #{dqn_conv_forward.1} parent=0
    _
  %s12 = ssub.s32 1, %s10
  %s13 = scalar_select 0, %s12, %s10
  $region1: #{dqn_conv_forward.1} parent=0
    #allocation3 [shape = 'u8[1024]{0}', space=vmem, size = 0x400, scoped, tag = 'output window, operand 0, single buffered']
    #allocation4 [shape = 's32[2]{0}', space=sflag, size = 0x8, scoped, tag = 'scoped memory for dqn_conv_forward.1']
    %14 = vsyncpa [#allocation4], 0
    loop: start=0, step=1, limit=7
    $region2: #{dqn_conv_forward.1} parent=1 // loop_pre_header
      _
    $region3: #{dqn_conv_forward.1} parent=1 // loop_header
      %s16 = sphi 0, %s20
      %p17 = scmp.ge.s32.totalorder %s16, 7
      %s23 = sphi 0, %s35
      %s24 = sphi 0, %s31
      %s25 = sphi 0, %s23
      %s26 = sphi 0, %s24
      %s27 = sphi 0, %s25
      %s28 = sphi 0, %s26
      %s42 = sphi 0, %s44
      %s45 = sphi 0, %s42
      %s46 = sphi 0, %s45
      %s62 = sphi 0, %s46
      %s66 = sphi 0, %s66
      %s68 = sphi 0, %s66
      %s69 = sphi 0, %s68
      %s83 = sphi 0, %s69
      %s87 = sphi 0, %s87
      %s89 = sphi 0, %s87
      %s90 = sphi 0, %s89
      %s104 = sphi 0, %s90
      %s110 = sphi 0, %s112
      %s113 = sphi 0, %s110
      %s114 = sphi 0, %s113
      %s130 = sphi 0, %s114
      %s134 = sphi 0, %s134
      %s136 = sphi 0, %s134
      %s137 = sphi 0, %s136
      %s151 = sphi 0, %s137
      %s155 = sphi 0, %s155
      %s157 = sphi 0, %s155
      %s158 = sphi 0, %s157
      %s172 = sphi 0, %s158
      %s176 = sphi 0, %s176
      %s178 = sphi 0, %s176
      %s179 = sphi 0, %s178
      %s193 = sphi 0, %s179
      %s197 = sphi 0, %s197
      %s199 = sphi 0, %s197
      %s200 = sphi 0, %s199
      %s214 = sphi 0, %s200
      %s218 = sphi 0, %s218
      %s220 = sphi 0, %s218
      %s221 = sphi 0, %s220
      %s235 = sphi 0, %s221
      %s241 = sphi 0, %s243
      %s244 = sphi 0, %s241
      %s245 = sphi 0, %s244
      %s261 = sphi 0, %s245
    $region4: #{dqn_conv_forward.1} parent=1 // loop_header_branch
      %19 = sbr.rel (%p17) target = $region8
    $region5: #{dqn_conv_forward.1} parent=1 // loop_body
      %s21 = ssub.s32 %s16, 1
      %s22 = ssub.s32 %s16, 2
      %s29 = sadd.s32 1, %s24
      %p30 = scmp.ge.s32.totalorder %s29, 5
      %s31 = scalar_select %p30, 0, %s29
      %s32 = sadd.s32 1, %s23
      %s33 = scalar_select %p30, %s32, %s23
      %p34 = scmp.ge.s32.totalorder %s33, 1
      %s35 = scalar_select %p34, 0, %s33
      %s36 = smul.u32 %s23, 5
      %s37 = sadd.s32 %s36, %s24
      %s38 = smul.u32 %s35, 5
      %s39 = sadd.s32 %s38, %s31
      %s40 = ssub.s32 %s37, %s39
      %p41 = scmp.eq.s32.totalorder %s40, 0
      %s43 = sadd.s32 %s42, 1
      %s44 = scalar_select %p41, %s42, %s43
      %p47 = pneg %p41
      %p48 = scmp.eq.s32.totalorder %s16, 4
      %p49 = por %p47, %p48
      %p50 = scmp.ne.s32.totalorder %s42, %s45
      %p51 = scmp.eq.s32.totalorder %s16, 0
      %p52 = por %p50, %p51
      %p53 = scmp.ne.s32.totalorder %s42, %s45
      %p54 = scmp.eq.s32.totalorder %s21, 4
      %p55 = por %p53, %p54
      %p56 = scmp.ne.s32.totalorder %s45, %s46
      %p57 = scmp.eq.s32.totalorder %s21, 0
      %p58 = por %p56, %p57
      %p59 = scmp.ne.s32.totalorder %s45, %s46
      %p60 = scmp.eq.s32.totalorder %s22, 4
      %p61 = por %p59, %p60
      %p63 = scmp.ne.s32.totalorder %s46, %s62
      %p64 = scmp.eq.s32.totalorder %s22, 0
      %p65 = por %p63, %p64
      %s67 = sadd.s32 %s66, 1
      %p70 = scmp.eq.s32.totalorder %s16, 4
      %p71 = scmp.ne.s32.totalorder %s66, %s68
      %p72 = scmp.eq.s32.totalorder %s16, 0
      %p73 = por %p71, %p72
      %p74 = scmp.ne.s32.totalorder %s66, %s68
      %p75 = scmp.eq.s32.totalorder %s21, 4
      %p76 = por %p74, %p75
      %p77 = scmp.ne.s32.totalorder %s68, %s69
      %p78 = scmp.eq.s32.totalorder %s21, 0
      %p79 = por %p77, %p78
      %p80 = scmp.ne.s32.totalorder %s68, %s69
      %p81 = scmp.eq.s32.totalorder %s22, 4
      %p82 = por %p80, %p81
      %p84 = scmp.ne.s32.totalorder %s69, %s83
      %p85 = scmp.eq.s32.totalorder %s22, 0
      %p86 = por %p84, %p85
      %s88 = sadd.s32 %s87, 1
      %p91 = scmp.eq.s32.totalorder %s16, 4
      %p92 = scmp.ne.s32.totalorder %s87, %s89
      %p93 = scmp.eq.s32.totalorder %s16, 0
      %p94 = por %p92, %p93
      %p95 = scmp.ne.s32.totalorder %s87, %s89
      %p96 = scmp.eq.s32.totalorder %s21, 4
      %p97 = por %p95, %p96
      %p98 = scmp.ne.s32.totalorder %s89, %s90
      %p99 = scmp.eq.s32.totalorder %s21, 0
      %p100 = por %p98, %p99
      %p101 = scmp.ne.s32.totalorder %s89, %s90
      %p102 = scmp.eq.s32.totalorder %s22, 4
      %p103 = por %p101, %p102
      %p105 = scmp.ne.s32.totalorder %s90, %s104
      %p106 = scmp.eq.s32.totalorder %s22, 0
      %p107 = por %p105, %p106
      %s108 = ssub.s32 %s24, %s31
      %p109 = scmp.eq.s32.totalorder %s108, 0
      %s111 = sadd.s32 %s110, 1
      %s112 = scalar_select %p109, %s110, %s111
      %p115 = pneg %p109
      %p116 = scmp.eq.s32.totalorder %s16, 4
      %p117 = por %p115, %p116
      %p118 = scmp.ne.s32.totalorder %s110, %s113
      %p119 = scmp.eq.s32.totalorder %s16, 0
      %p120 = por %p118, %p119
      %p121 = scmp.ne.s32.totalorder %s110, %s113
      %p122 = scmp.eq.s32.totalorder %s21, 4
      %p123 = por %p121, %p122
      %p124 = scmp.ne.s32.totalorder %s113, %s114
      %p125 = scmp.eq.s32.totalorder %s21, 0
      %p126 = por %p124, %p125
      %p127 = scmp.ne.s32.totalorder %s113, %s114
      %p128 = scmp.eq.s32.totalorder %s22, 4
      %p129 = por %p127, %p128
      %p131 = scmp.ne.s32.totalorder %s114, %s130
      %p132 = scmp.eq.s32.totalorder %s22, 0
      %p133 = por %p131, %p132
      %s135 = sadd.s32 %s134, 1
      %p138 = scmp.eq.s32.totalorder %s16, 4
      %p139 = scmp.ne.s32.totalorder %s134, %s136
      %p140 = scmp.eq.s32.totalorder %s16, 0
      %p141 = por %p139, %p140
      %p142 = scmp.ne.s32.totalorder %s134, %s136
      %p143 = scmp.eq.s32.totalorder %s21, 4
      %p144 = por %p142, %p143
      %p145 = scmp.ne.s32.totalorder %s136, %s137
      %p146 = scmp.eq.s32.totalorder %s21, 0
      %p147 = por %p145, %p146
      %p148 = scmp.ne.s32.totalorder %s136, %s137
      %p149 = scmp.eq.s32.totalorder %s22, 4
      %p150 = por %p148, %p149
      %p152 = scmp.ne.s32.totalorder %s137, %s151
      %p153 = scmp.eq.s32.totalorder %s22, 0
      %p154 = por %p152, %p153
      %s156 = sadd.s32 %s155, 1
      %p159 = scmp.eq.s32.totalorder %s16, 4
      %p160 = scmp.ne.s32.totalorder %s155, %s157
      %p161 = scmp.eq.s32.totalorder %s16, 0
      %p162 = por %p160, %p161
      %p163 = scmp.ne.s32.totalorder %s155, %s157
      %p164 = scmp.eq.s32.totalorder %s21, 4
      %p165 = por %p163, %p164
      %p166 = scmp.ne.s32.totalorder %s157, %s158
      %p167 = scmp.eq.s32.totalorder %s21, 0
      %p168 = por %p166, %p167
      %p169 = scmp.ne.s32.totalorder %s157, %s158
      %p170 = scmp.eq.s32.totalorder %s22, 4
      %p171 = por %p169, %p170
      %p173 = scmp.ne.s32.totalorder %s158, %s172
      %p174 = scmp.eq.s32.totalorder %s22, 0
      %p175 = por %p173, %p174
      %s177 = sadd.s32 %s176, 1
      %p180 = scmp.eq.s32.totalorder %s16, 4
      %p181 = scmp.ne.s32.totalorder %s176, %s178
      %p182 = scmp.eq.s32.totalorder %s16, 0
      %p183 = por %p181, %p182
      %p184 = scmp.ne.s32.totalorder %s176, %s178
      %p185 = scmp.eq.s32.totalorder %s21, 4
      %p186 = por %p184, %p185
      %p187 = scmp.ne.s32.totalorder %s178, %s179
      %p188 = scmp.eq.s32.totalorder %s21, 0
      %p189 = por %p187, %p188
      %p190 = scmp.ne.s32.totalorder %s178, %s179
      %p191 = scmp.eq.s32.totalorder %s22, 4
      %p192 = por %p190, %p191
      %p194 = scmp.ne.s32.totalorder %s179, %s193
      %p195 = scmp.eq.s32.totalorder %s22, 0
      %p196 = por %p194, %p195
      %s198 = sadd.s32 %s197, 1
      %p201 = scmp.eq.s32.totalorder %s16, 4
      %p202 = scmp.ne.s32.totalorder %s197, %s199
      %p203 = scmp.eq.s32.totalorder %s16, 0
      %p204 = por %p202, %p203
      %p205 = scmp.ne.s32.totalorder %s197, %s199
      %p206 = scmp.eq.s32.totalorder %s21, 4
      %p207 = por %p205, %p206
      %p208 = scmp.ne.s32.totalorder %s199, %s200
      %p209 = scmp.eq.s32.totalorder %s21, 0
      %p210 = por %p208, %p209
      %p211 = scmp.ne.s32.totalorder %s199, %s200
      %p212 = scmp.eq.s32.totalorder %s22, 4
      %p213 = por %p211, %p212
      %p215 = scmp.ne.s32.totalorder %s200, %s214
      %p216 = scmp.eq.s32.totalorder %s22, 0
      %p217 = por %p215, %p216
      %s219 = sadd.s32 %s218, 1
      %p222 = scmp.eq.s32.totalorder %s16, 4
      %p223 = scmp.ne.s32.totalorder %s218, %s220
      %p224 = scmp.eq.s32.totalorder %s16, 0
      %p225 = por %p223, %p224
      %p226 = scmp.ne.s32.totalorder %s218, %s220
      %p227 = scmp.eq.s32.totalorder %s21, 4
      %p228 = por %p226, %p227
      %p229 = scmp.ne.s32.totalorder %s220, %s221
      %p230 = scmp.eq.s32.totalorder %s21, 0
      %p231 = por %p229, %p230
      %p232 = scmp.ne.s32.totalorder %s220, %s221
      %p233 = scmp.eq.s32.totalorder %s22, 4
      %p234 = por %p232, %p233
      %p236 = scmp.ne.s32.totalorder %s221, %s235
      %p237 = scmp.eq.s32.totalorder %s22, 0
      %p238 = por %p236, %p237
      %s239 = ssub.s32 %s23, %s35
      %p240 = scmp.eq.s32.totalorder %s239, 0
      %s242 = sadd.s32 %s241, 1
      %s243 = scalar_select %p240, %s241, %s242
      %p246 = pneg %p240
      %p247 = scmp.eq.s32.totalorder %s16, 4
      %p248 = por %p246, %p247
      %p249 = scmp.ne.s32.totalorder %s241, %s244
      %p250 = scmp.eq.s32.totalorder %s16, 0
      %p251 = por %p249, %p250
      %p252 = scmp.ne.s32.totalorder %s241, %s244
      %p253 = scmp.eq.s32.totalorder %s21, 4
      %p254 = por %p252, %p253
      %p255 = scmp.ne.s32.totalorder %s244, %s245
      %p256 = scmp.eq.s32.totalorder %s21, 0
      %p257 = por %p255, %p256
      %p258 = scmp.ne.s32.totalorder %s244, %s245
      %p259 = scmp.eq.s32.totalorder %s22, 4
      %p260 = por %p258, %p259
      %p262 = scmp.ne.s32.totalorder %s245, %s261
      %p263 = scmp.eq.s32.totalorder %s22, 0
      %p264 = por %p262, %p263
      %p265 = scmp.le.s32.totalorder 1, %s16
      %p266 = scmp.lt.s32.totalorder %s16, 6
      %p267 = pnand %p265, %p266
      %p268 = pneg %p267
      // Predicated region
      $region9: #{dqn_conv_forward.1} parent=5 // pred_check
        _
      $region10: #{dqn_conv_forward.1} parent=5 // pred_check_branch
        %270 = sbr.rel (%p267) target = $region12
      $region11: #{dqn_conv_forward.1} parent=5 // pred_region
        %s271 = ssub.s32 %s16, 1
        // Predicated region
        $region13: #{dqn_conv_forward.1} parent=11 // pred_check
          %p272 = pneg %p79
        $region14: #{dqn_conv_forward.1} parent=11 // pred_check_branch
          %274 = sbr.rel (%p272) target = $region16
        $region15: #{dqn_conv_forward.1} parent=11 // pred_region
          _
        $region16: #{dqn_conv_forward.1} parent=11 // pred_fallthru
          _
        // Predicated region
        $region17: #{dqn_conv_forward.1} parent=11 // pred_check
          %p275 = pneg %p100
        $region18: #{dqn_conv_forward.1} parent=11 // pred_check_branch
          %277 = sbr.rel (%p275) target = $region20
        $region19: #{dqn_conv_forward.1} parent=11 // pred_region
          _
        $region20: #{dqn_conv_forward.1} parent=11 // pred_fallthru
          _
        // Predicated region
        $region21: #{dqn_conv_forward.1} parent=11 // pred_check
          %p278 = pneg %p147
        $region22: #{dqn_conv_forward.1} parent=11 // pred_check_branch
          %280 = sbr.rel (%p278) target = $region24
        $region23: #{dqn_conv_forward.1} parent=11 // pred_region
          _
        $region24: #{dqn_conv_forward.1} parent=11 // pred_fallthru
          _
        // Predicated region
        $region25: #{dqn_conv_forward.1} parent=11 // pred_check
          %p281 = pneg %p168
        $region26: #{dqn_conv_forward.1} parent=11 // pred_check_branch
          %283 = sbr.rel (%p281) target = $region28
        $region27: #{dqn_conv_forward.1} parent=11 // pred_region
          _
        $region28: #{dqn_conv_forward.1} parent=11 // pred_fallthru
          _
        // Predicated region
        $region29: #{dqn_conv_forward.1} parent=11 // pred_check
          %p284 = pneg %p189
        $region30: #{dqn_conv_forward.1} parent=11 // pred_check_branch
          %286 = sbr.rel (%p284) target = $region32
        $region31: #{dqn_conv_forward.1} parent=11 // pred_region
          _
        $region32: #{dqn_conv_forward.1} parent=11 // pred_fallthru
          _
        // Predicated region
        $region33: #{dqn_conv_forward.1} parent=11 // pred_check
          %p287 = pneg %p210
        $region34: #{dqn_conv_forward.1} parent=11 // pred_check_branch
          %289 = sbr.rel (%p287) target = $region36
        $region35: #{dqn_conv_forward.1} parent=11 // pred_region
          _
        $region36: #{dqn_conv_forward.1} parent=11 // pred_fallthru
          _
        // Predicated region
        $region37: #{dqn_conv_forward.1} parent=11 // pred_check
          %p290 = pneg %p231
        $region38: #{dqn_conv_forward.1} parent=11 // pred_check_branch
          %292 = sbr.rel (%p290) target = $region40
        $region39: #{dqn_conv_forward.1} parent=11 // pred_region
          _
        $region40: #{dqn_conv_forward.1} parent=11 // pred_fallthru
          _
      $region12: #{dqn_conv_forward.1} parent=5 // pred_fallthru
        _
      %p293 = scmp.lt.s32.totalorder %s16, 5
      // Predicated region
      $region41: #{dqn_conv_forward.1} parent=5 // pred_check
        %p294 = pneg %p293
      $region42: #{dqn_conv_forward.1} parent=5 // pred_check_branch
        %296 = sbr.rel (%p294) target = $region44
      $region43: #{dqn_conv_forward.1} parent=5 // pred_region
        // Predicated region
        $region45: #{dqn_conv_forward.1} parent=43 // pred_check
          %p297 = pneg %p52
        $region46: #{dqn_conv_forward.1} parent=43 // pred_check_branch
          %299 = sbr.rel (%p297) target = $region48
        $region47: #{dqn_conv_forward.1} parent=43 // pred_region
          %s300 = smul.u32 %s23, 5
          %s301 = sadd.s32 %s300, %s24
          %s302 = smul.u32 5, %s301
          %p303 = scmp.lt.s32.totalorder %s302, 24
          %s304 = scalar_select %p303, %s302, 24
          %s305 = smul.addr %s304, 7
          %s306 = smul.addr %s305, 4
          %s307 = scalar_lea.vmem %s0, %s306
          %s308 = smul.u32 %s23, 5
          %s309 = sadd.s32 %s308, %s24
          %s310 = smul.u32 5, %s309
        $region48: #{dqn_conv_forward.1} parent=43 // pred_fallthru
          _
        // Predicated region
        $region49: #{dqn_conv_forward.1} parent=43 // pred_check
          %p311 = pneg %p120
        $region50: #{dqn_conv_forward.1} parent=43 // pred_check_branch
          %313 = sbr.rel (%p311) target = $region52
        $region51: #{dqn_conv_forward.1} parent=43 // pred_region
          %s314 = smul.u32 5, %s24
          %p315 = scmp.lt.s32.totalorder %s314, 24
          %s316 = scalar_select %p315, %s314, 24
          %s317 = smul.addr %s316, 2
          %s318 = smul.addr %s317, 4
          %s319 = scalar_lea.vmem %s3, %s318
          %s320 = smul.u32 5, %s24
        $region52: #{dqn_conv_forward.1} parent=43 // pred_fallthru
          _
      $region44: #{dqn_conv_forward.1} parent=5 // pred_fallthru
        _
      %p321 = scmp.le.s32.totalorder 1, %s16
      %p322 = scmp.lt.s32.totalorder %s16, 6
      %p323 = pnand %p321, %p322
      %p324 = pneg %p323
      // Predicated region
      $region53: #{dqn_conv_forward.1} parent=5 // pred_check
        _
      $region54: #{dqn_conv_forward.1} parent=5 // pred_check_branch
        %326 = sbr.rel (%p323) target = $region56
      $region55: #{dqn_conv_forward.1} parent=5 // pred_region
        %s327 = ssub.s32 %s16, 1
        %s328 = smul.u32 %s25, 5
        %s329 = sadd.s32 %s328, %s26
        %s330 = smul.u32 5, %s329
        %p331 = scmp.lt.s32.totalorder %s330, 24
        %s332 = scalar_select %p331, %s330, 24
        %s333 = smul.addr %s332, 7
        %s334 = smul.addr %s333, 4
        %s335 = scalar_lea.vmem %s0, %s334
        %p336 = pneg %p58
        %p337 = pneg %p55
        %p338 = pneg %p79
        %p339 = pneg %p76
        %p340 = pneg %p100
        %p341 = pneg %p97
        %s342 = smul.u32 5, %s26
        %p343 = scmp.lt.s32.totalorder %s342, 24
        %s344 = scalar_select %p343, %s342, 24
        %s345 = smul.addr %s344, 2
        %s346 = smul.addr %s345, 4
        %s347 = scalar_lea.vmem %s3, %s346
        %p348 = pneg %p126
        %p349 = pneg %p123
        %p350 = pneg %p147
        %p351 = pneg %p144
        %p352 = pneg %p168
        %p353 = pneg %p165
        %p354 = pneg %p189
        %p355 = pneg %p186
        %p356 = pneg %p210
        %p357 = pneg %p207
        %p358 = pneg %p231
        %p359 = pneg %p228
        %p360 = pneg %p257
        %p361 = pneg %p254
        %s362 = smul.u32 %s25, 5
        %s363 = sadd.s32 %s362, %s26
        %s364 = smul.u32 5, %s363
        %p365 = scmp.lt.s32.totalorder %s364, 24
        %s366 = scalar_select %p365, %s364, 24
        %s367 = smul.addr %s366, 7
        %s368 = smul.addr %s367, 4
        %s369 = scalar_lea.vmem %s0, %s368
        %s370 = smul.u32 %s25, 5
        %s371 = sadd.s32 %s370, %s26
        %s372 = smul.u32 5, %s371
        %s373 = smul.u32 5, %s26
        %p374 = scmp.lt.s32.totalorder %s373, 24
        %s375 = scalar_select %p374, %s373, 24
        %s376 = smul.addr %s375, 2
        %s377 = smul.addr %s376, 4
        %s378 = scalar_lea.vmem %s3, %s377
        %s379 = smul.u32 5, %s26
        %p381 = scmp.eq.s32.totalorder %s26, 0
        // Predicated region
        $region57: #{dqn_conv_forward.1} parent=55 // pred_check
          %p382 = pneg %p381
        $region58: #{dqn_conv_forward.1} parent=55 // pred_check_branch
          %384 = sbr.rel (%p382) target = $region60
        $region59: #{dqn_conv_forward.1} parent=55 // pred_region
          %vm385 = vcmask 261120
          %386 = vst.msk [vmem:[#allocation2] sm:$0xff] %vm385, 0.0
          %387 = vst.msk [vmem:[#allocation2 + $0x8] sm:$0xff] %vm385, 0.0
          %388 = vst.msk [vmem:[#allocation2 + $0x10] sm:$0xff] %vm385, 0.0
          %389 = vst.msk [vmem:[#allocation2 + $0x18] sm:$0xff] %vm385, 0.0
          %390 = vst.msk [vmem:[#allocation2 + $0x20] sm:$0xff] %vm385, 0.0
          %391 = vst.msk [vmem:[#allocation2 + $0x28] sm:$0xff] %vm385, 0.0
          %vm392 = vcmask 254976
          %393 = vst.msk [vmem:[#allocation2 + $0x30] sm:$0x3] %vm392, 0.0
        $region60: #{dqn_conv_forward.1} parent=55 // pred_fallthru
          _
        %v394 = vld [vmem:[%s1] sm:$0xf]
        %v395 = vld [vmem:[%s1 + $0x4] sm:$0xf]
        %v396 = vld [vmem:[%s1 + $0x8] sm:$0xf]
        %v397 = vld [vmem:[%s1 + $0xc] sm:$0xf]
        %v398 = vld [vmem:[%s1 + $0x10] sm:$0xf]
        %v399 = vld [vmem:[%s1 + $0x14] sm:$0xf]
        %v400 = vld [vmem:[%s1 + $0x18] sm:$0xf]
        %v401 = vld [vmem:[%s1 + $0x1c] sm:$0xf]
        %v402 = vld [vmem:[%s1 + $0x20] sm:$0xf]
        %v403 = vld [vmem:[%s1 + $0x24] sm:$0xf]
        %v404 = vld [vmem:[%s1 + $0x28] sm:$0xf]
        %v405 = vld [vmem:[%s1 + $0x2c] sm:$0xf]
        %v406 = vld [vmem:[%s1 + $0x30] sm:$0xf]
        %v407 = vld [vmem:[%s1 + $0x34] sm:$0xf]
        %v408 = vld [vmem:[%s1 + $0x38] sm:$0xf]
        %v409 = vld [vmem:[%s1 + $0x3c] sm:$0xf]
        %v410 = vld [vmem:[%s2] sm:$0x1]
        %v411 = vld [vmem:[#allocation2] sm:$0xff]
        %v412 = vld [vmem:[#allocation2 + $0x8] sm:$0xff]
        %v413 = vld [vmem:[#allocation2 + $0x10] sm:$0xff]
        %v414 = vld [vmem:[#allocation2 + $0x18] sm:$0xff]
        %v415 = vld [vmem:[#allocation2 + $0x20] sm:$0xff]
        %v416 = vld [vmem:[#allocation2 + $0x28] sm:$0xff]
        %v417 = vld [vmem:[#allocation2 + $0x30] sm:$0x3]
        %v418 = vld [vmem:[%s369] sm:$0xf]
        %v419 = vld [vmem:[%s369 + $0x4] sm:$0xf]
        %v420 = vld [vmem:[%s369 + $0x8] sm:$0xf]
        %v421 = vld [vmem:[%s369 + $0xc] sm:$0xf]
        %v422 = vld [vmem:[%s369 + $0x10] sm:$0xf]
        %v423 = vld [vmem:[%s369 + $0x14] sm:$0xf]
        %v424 = vld [vmem:[%s369 + $0x18] sm:$0x1]
        %v426 = vlaneseq
        %v427 = vshrl.u32 %v426, 7
        %v428 = vsub.s32 0, %v427
        %v429 = vrot.slane %v410, %v428
        %v438 = vunpack.c.l.b16 %v418
        %v439 = vunpack.c.l.b16 %v419
        %v440 = vunpack.c.l.b16 %v420
        %v441 = vunpack.c.l.b16 %v421
        %v442 = vunpack.c.l.b16 %v422
        %v443 = vunpack.c.l.b16 %v423
        %v444 = vunpack.c.l.b16 %v424
        %v445 = vpack.c.b16 %v439, %v438
        %v446 = vpack.c.b16 %v441, %v440
        %v447 = vpack.c.b16 %v443, %v442
        %v448 = vpack.c.b16 %v444, %v444
        %v469 = vunpack.c.l.b16 %v394
        %v470 = vunpack.c.l.b16 %v395
        %v471 = vunpack.c.l.b16 %v396
        %v472 = vunpack.c.l.b16 %v397
        %v473 = vunpack.c.l.b16 %v398
        %v474 = vunpack.c.l.b16 %v399
        %v475 = vunpack.c.l.b16 %v400
        %v476 = vunpack.c.l.b16 %v401
        %v477 = vunpack.c.l.b16 %v402
        %v478 = vunpack.c.l.b16 %v403
        %v479 = vunpack.c.l.b16 %v404
        %v480 = vunpack.c.l.b16 %v405
        %v481 = vunpack.c.l.b16 %v406
        %v482 = vunpack.c.l.b16 %v407
        %v483 = vunpack.c.l.b16 %v408
        %v484 = vunpack.c.l.b16 %v409
        %v485 = vpack.c.b16 %v470, %v469
        %v486 = vpack.c.b16 %v472, %v471
        %v487 = vpack.c.b16 %v474, %v473
        %v488 = vpack.c.b16 %v476, %v475
        %v489 = vpack.c.b16 %v478, %v477
        %v490 = vpack.c.b16 %v480, %v479
        %v491 = vpack.c.b16 %v482, %v481
        %v492 = vpack.c.b16 %v484, %v483
        %501 = vmatprep.subr.bf16.mxu0 0
        %502 = vmatpush1.bf16.msra.mxu0 %v485
        %503 = vmatprep.subr.bf16.mxu0 0
        %504 = vmatpush1.bf16.msra.mxu0 %v486
        %505 = vmatprep.subr.bf16.mxu0 0
        %506 = vmatpush1.bf16.msra.mxu0 %v487
        %507 = vmatprep.subr.bf16.mxu0 0
        %508 = vmatpush1.bf16.msra.mxu0 %v488
        %509 = vmatprep.subr.bf16.mxu0 0
        %510 = vmatpush1.bf16.msra.mxu0 %v489
        %511 = vmatprep.subr.bf16.mxu0 0
        %512 = vmatpush1.bf16.msra.mxu0 %v490
        %513 = vmatprep.subr.bf16.mxu0 0
        %514 = vmatpush1.bf16.msra.mxu0 %v491
        %515 = vmatprep.subr.bf16.mxu0 0
        %516 = vmatpush1.bf16.msra.mxu0 %v492
        %517 = vmatprep.subr.bf16.mxu0 0
        %518 = vmatpush1.bf16.msra.mxu0 0
        %519 = vmatprep.subr.bf16.mxu0 0
        %520 = vmatpush1.bf16.msra.mxu0 0
        %521 = vmatprep.subr.bf16.mxu0 0
        %522 = vmatpush1.bf16.msra.mxu0 0
        %523 = vmatprep.subr.bf16.mxu0 0
        %524 = vmatpush1.bf16.msra.mxu0 0
        %525 = vmatprep.subr.bf16.mxu0 0
        %526 = vmatpush1.bf16.msra.mxu0 0
        %527 = vmatprep.subr.bf16.mxu0 0
        %528 = vmatpush1.bf16.msra.mxu0 0
        %529 = vmatprep.subr.bf16.mxu0 0
        %530 = vmatpush1.bf16.msra.mxu0 0
        %531 = vmatprep.subr.bf16.mxu0 0
        %532 = vmatpush1.bf16.msra.mxu0 0
        %533 = vmatprep.mubr.bf16.mxu0 0
        %534 = vmatmul.mubr.bf16.gmra.mrb[0].mxu0 %v445
        %v535 = vpop.f32.mrb[0].mxu0
        %v536 = vadd.f32 %v429, %v535
        %v537 = vpop.f32.mrb[0].mxu0
        %v538 = vpop.f32.mrb[0].mxu0
        %v539 = vadd.f32 %v429, %v538
        %v540 = vpop.f32.mrb[0].mxu0
        %541 = vmatprep.mubr.bf16.mxu0 0
        %542 = vmatmul.mubr.bf16.gmra.mrb[0].mxu0 %v446
        %v543 = vpop.f32.mrb[0].mxu0
        %v544 = vadd.f32 %v429, %v543
        %v545 = vpop.f32.mrb[0].mxu0
        %v546 = vpop.f32.mrb[0].mxu0
        %v547 = vadd.f32 %v429, %v546
        %v548 = vpop.f32.mrb[0].mxu0
        %549 = vmatprep.mubr.bf16.mxu0 0
        %550 = vmatmul.mubr.bf16.gmra.mrb[0].mxu0 %v447
        %v551 = vpop.f32.mrb[0].mxu0
        %v552 = vadd.f32 %v429, %v551
        %v553 = vpop.f32.mrb[0].mxu0
        %v554 = vpop.f32.mrb[0].mxu0
        %v555 = vadd.f32 %v429, %v554
        %v556 = vpop.f32.mrb[0].mxu0
        %557 = vmatprep.mubr.bf16.mxu0 0
        %558 = vmatmul.mubr.bf16.gmra.mrb[0].mxu0 %v448
        %v559 = vpop.f32.mrb[0].mxu0
        %v560 = vadd.f32 %v429, %v559
        %v561 = vpop.f32.mrb[0].mxu0
        %v562 = vpop.f32.mrb[0].mxu0
        %v563 = vpop.f32.mrb[0].mxu0
        %564 = vdwg.mxu0
        %v565 = vmax.f32 %v536, 0.0
        %v566 = vmax.f32 %v539, 0.0
        %v567 = vmax.f32 %v544, 0.0
        %v568 = vmax.f32 %v547, 0.0
        %v569 = vmax.f32 %v552, 0.0
        %v570 = vmax.f32 %v555, 0.0
        %v571 = vmax.f32 %v560, 0.0
        %v572 = vpack.c.bf16 %v566, %v565
        %v573 = vpack.c.bf16 %v568, %v567
        %v574 = vpack.c.bf16 %v570, %v569
        %v575 = vpack.c.bf16 %v571, %v571
        %v576 = vld [vmem:[%s378] sm:$0xf]
        %v577 = vld [vmem:[%s378 + $0x4] sm:$0xf]
        %v580 = vunpack.c.l.b16 %v576
        %v581 = vunpack.c.l.b16 %v577
        %v582 = vpack.c.b16 %v581, %v580
        %vm584 = vcmask 130048
        %v586 = vsel %vm584, %v572, 0
        %v589 = vsel %vm584, %v573, 0
        %v592 = vsel %vm584, %v574, 0
        %v595 = vsel %vm584, %v575, 0
        %597 = vmatprep.subr.bf16.mxu0 0
        %598 = vmatpush1.bf16.msra.mxu0 %v582
        %599 = vmatprep.subr.bf16.mxu0 0
        %600 = vmatpush1.bf16.msra.mxu0 0
        %601 = vmatprep.subr.bf16.mxu0 0
        %602 = vmatpush1.bf16.msra.mxu0 0
        %603 = vmatprep.subr.bf16.mxu0 0
        %604 = vmatpush1.bf16.msra.mxu0 0
        %605 = vmatprep.subr.bf16.mxu0 0
        %606 = vmatpush1.bf16.msra.mxu0 0
        %607 = vmatprep.subr.bf16.mxu0 0
        %608 = vmatpush1.bf16.msra.mxu0 0
        %609 = vmatprep.subr.bf16.mxu0 0
        %610 = vmatpush1.bf16.msra.mxu0 0
        %611 = vmatprep.subr.bf16.mxu0 0
        %612 = vmatpush1.bf16.msra.mxu0 0
        %613 = vmatprep.subr.bf16.mxu0 0
        %614 = vmatpush1.bf16.msra.mxu0 0
        %615 = vmatprep.subr.bf16.mxu0 0
        %616 = vmatpush1.bf16.msra.mxu0 0
        %617 = vmatprep.subr.bf16.mxu0 0
        %618 = vmatpush1.bf16.msra.mxu0 0
        %619 = vmatprep.subr.bf16.mxu0 0
        %620 = vmatpush1.bf16.msra.mxu0 0
        %621 = vmatprep.subr.bf16.mxu0 0
        %622 = vmatpush1.bf16.msra.mxu0 0
        %623 = vmatprep.subr.bf16.mxu0 0
        %624 = vmatpush1.bf16.msra.mxu0 0
        %625 = vmatprep.subr.bf16.mxu0 0
        %626 = vmatpush1.bf16.msra.mxu0 0
        %627 = vmatprep.subr.bf16.mxu0 0
        %628 = vmatpush1.bf16.msra.mxu0 0
        %629 = vmatprep.mubr.bf16.mxu0 0
        %630 = vmatmul.mubr.bf16.gmra.mrb[0].mxu0 %v586
        %v631 = vpop.f32.mrb[0].mxu0
        %v632 = vadd.f32 0.0, %v631
        %v633 = vpop.f32.mrb[0].mxu0
        %v634 = vpop.f32.mrb[0].mxu0
        %v635 = vadd.f32 0.0, %v634
        %v636 = vpop.f32.mrb[0].mxu0
        %637 = vmatprep.mubr.bf16.mxu0 0
        %638 = vmatmul.mubr.bf16.gmra.mrb[0].mxu0 %v589
        %v639 = vpop.f32.mrb[0].mxu0
        %v640 = vadd.f32 0.0, %v639
        %v641 = vpop.f32.mrb[0].mxu0
        %v642 = vpop.f32.mrb[0].mxu0
        %v643 = vadd.f32 0.0, %v642
        %v644 = vpop.f32.mrb[0].mxu0
        %645 = vmatprep.mubr.bf16.mxu0 0
        %646 = vmatmul.mubr.bf16.gmra.mrb[0].mxu0 %v592
        %v647 = vpop.f32.mrb[0].mxu0
        %v648 = vadd.f32 0.0, %v647
        %v649 = vpop.f32.mrb[0].mxu0
        %v650 = vpop.f32.mrb[0].mxu0
        %v651 = vadd.f32 0.0, %v650
        %v652 = vpop.f32.mrb[0].mxu0
        %653 = vmatprep.mubr.bf16.mxu0 0
        %654 = vmatmul.mubr.bf16.gmra.mrb[0].mxu0 %v595
        %v655 = vpop.f32.mrb[0].mxu0
        %v656 = vadd.f32 0.0, %v655
        %v657 = vpop.f32.mrb[0].mxu0
        %v658 = vpop.f32.mrb[0].mxu0
        %v659 = vpop.f32.mrb[0].mxu0
        %660 = vdwg.mxu0
        %v661 = vadd.f32 %v411, %v632
        %v662 = vadd.f32 %v412, %v635
        %v663 = vadd.f32 %v413, %v640
        %v664 = vadd.f32 %v414, %v643
        %v665 = vadd.f32 %v415, %v648
        %v666 = vadd.f32 %v416, %v651
        %v667 = vadd.f32 %v417, %v656
        %s668 = scalar_lea.vmem %s369, 28
        %v669 = vld [vmem:[%s668] sm:$0xf]
        %v670 = vld [vmem:[%s668 + $0x4] sm:$0xf]
        %v671 = vld [vmem:[%s668 + $0x8] sm:$0xf]
        %v672 = vld [vmem:[%s668 + $0xc] sm:$0xf]
        %v673 = vld [vmem:[%s668 + $0x10] sm:$0xf]
        %v674 = vld [vmem:[%s668 + $0x14] sm:$0xf]
        %v675 = vld [vmem:[%s668 + $0x18] sm:$0x1]
        %v683 = vunpack.c.l.b16 %v669
        %v684 = vunpack.c.l.b16 %v670
        %v685 = vunpack.c.l.b16 %v671
        %v686 = vunpack.c.l.b16 %v672
        %v687 = vunpack.c.l.b16 %v673
        %v688 = vunpack.c.l.b16 %v674
        %v689 = vunpack.c.l.b16 %v675
        %v690 = vpack.c.b16 %v684, %v683
        %v691 = vpack.c.b16 %v686, %v685
        %v692 = vpack.c.b16 %v688, %v687
        %v693 = vpack.c.b16 %v689, %v689
        %698 = vmatprep.subr.bf16.mxu0 0
        %699 = vmatpush1.bf16.msra.mxu0 %v485
        %700 = vmatprep.subr.bf16.mxu0 0
        %701 = vmatpush1.bf16.msra.mxu0 %v486
        %702 = vmatprep.subr.bf16.mxu0 0
        %703 = vmatpush1.bf16.msra.mxu0 %v487
        %704 = vmatprep.subr.bf16.mxu0 0
        %705 = vmatpush1.bf16.msra.mxu0 %v488
        %706 = vmatprep.subr.bf16.mxu0 0
        %707 = vmatpush1.bf16.msra.mxu0 %v489
        %708 = vmatprep.subr.bf16.mxu0 0
        %709 = vmatpush1.bf16.msra.mxu0 %v490
        %710 = vmatprep.subr.bf16.mxu0 0
        %711 = vmatpush1.bf16.msra.mxu0 %v491
        %712 = vmatprep.subr.bf16.mxu0 0
        %713 = vmatpush1.bf16.msra.mxu0 %v492
        %714 = vmatprep.subr.bf16.mxu0 0
        %715 = vmatpush1.bf16.msra.mxu0 0
        %716 = vmatprep.subr.bf16.mxu0 0
        %717 = vmatpush1.bf16.msra.mxu0 0
        %718 = vmatprep.subr.bf16.mxu0 0
        %719 = vmatpush1.bf16.msra.mxu0 0
        %720 = vmatprep.subr.bf16.mxu0 0
        %721 = vmatpush1.bf16.msra.mxu0 0
        %722 = vmatprep.subr.bf16.mxu0 0
        %723 = vmatpush1.bf16.msra.mxu0 0
        %724 = vmatprep.subr.bf16.mxu0 0
        %725 = vmatpush1.bf16.msra.mxu0 0
        %726 = vmatprep.subr.bf16.mxu0 0
        %727 = vmatpush1.bf16.msra.mxu0 0
        %728 = vmatprep.subr.bf16.mxu0 0
        %729 = vmatpush1.bf16.msra.mxu0 0
        %730 = vmatprep.mubr.bf16.mxu0 0
        %731 = vmatmul.mubr.bf16.gmra.mrb[0].mxu0 %v690
        %v732 = vpop.f32.mrb[0].mxu0
        %v733 = vadd.f32 %v429, %v732
        %v734 = vpop.f32.mrb[0].mxu0
        %v735 = vpop.f32.mrb[0].mxu0
        %v736 = vadd.f32 %v429, %v735
        %v737 = vpop.f32.mrb[0].mxu0
        %738 = vmatprep.mubr.bf16.mxu0 0
        %739 = vmatmul.mubr.bf16.gmra.mrb[0].mxu0 %v691
        %v740 = vpop.f32.mrb[0].mxu0
        %v741 = vadd.f32 %v429, %v740
        %v742 = vpop.f32.mrb[0].mxu0
        %v743 = vpop.f32.mrb[0].mxu0
        %v744 = vadd.f32 %v429, %v743
        %v745 = vpop.f32.mrb[0].mxu0
        %746 = vmatprep.mubr.bf16.mxu0 0
        %747 = vmatmul.mubr.bf16.gmra.mrb[0].mxu0 %v692
        %v748 = vpop.f32.mrb[0].mxu0
        %v749 = vadd.f32 %v429, %v748
        %v750 = vpop.f32.mrb[0].mxu0
        %v751 = vpop.f32.mrb[0].mxu0
        %v752 = vadd.f32 %v429, %v751
        %v753 = vpop.f32.mrb[0].mxu0
        %754 = vmatprep.mubr.bf16.mxu0 0
        %755 = vmatmul.mubr.bf16.gmra.mrb[0].mxu0 %v693
        %v756 = vpop.f32.mrb[0].mxu0
        %v757 = vadd.f32 %v429, %v756
        %v758 = vpop.f32.mrb[0].mxu0
        %v759 = vpop.f32.mrb[0].mxu0
        %v760 = vpop.f32.mrb[0].mxu0
        %761 = vdwg.mxu0
        %v762 = vmax.f32 %v733, 0.0
        %v763 = vmax.f32 %v736, 0.0
        %v764 = vmax.f32 %v741, 0.0
        %v765 = vmax.f32 %v744, 0.0
        %v766 = vmax.f32 %v749, 0.0
        %v767 = vmax.f32 %v752, 0.0
        %v768 = vmax.f32 %v757, 0.0
        %v769 = vpack.c.bf16 %v763, %v762
        %v770 = vpack.c.bf16 %v765, %v764
        %v771 = vpack.c.bf16 %v767, %v766
        %v772 = vpack.c.bf16 %v768, %v768
        %s773 = scalar_lea.vmem %s378, 8
        %v774 = vld [vmem:[%s773] sm:$0xf]
        %v775 = vld [vmem:[%s773 + $0x4] sm:$0xf]
        %v778 = vunpack.c.l.b16 %v774
        %v779 = vunpack.c.l.b16 %v775
        %v780 = vpack.c.b16 %v779, %v778
        %v783 = vsel %vm584, %v769, 0
        %v786 = vsel %vm584, %v770, 0
        %v789 = vsel %vm584, %v771, 0
        %v792 = vsel %vm584, %v772, 0
        %794 = vmatprep.subr.bf16.mxu0 0
        %795 = vmatpush1.bf16.msra.mxu0 %v780
        %796 = vmatprep.subr.bf16.mxu0 0
        %797 = vmatpush1.bf16.msra.mxu0 0
        %798 = vmatprep.subr.bf16.mxu0 0
        %799 = vmatpush1.bf16.msra.mxu0 0
        %800 = vmatprep.subr.bf16.mxu0 0
        %801 = vmatpush1.bf16.msra.mxu0 0
        %802 = vmatprep.subr.bf16.mxu0 0
        %803 = vmatpush1.bf16.msra.mxu0 0
        %804 = vmatprep.subr.bf16.mxu0 0
        %805 = vmatpush1.bf16.msra.mxu0 0
        %806 = vmatprep.subr.bf16.mxu0 0
        %807 = vmatpush1.bf16.msra.mxu0 0
        %808 = vmatprep.subr.bf16.mxu0 0
        %809 = vmatpush1.bf16.msra.mxu0 0
        %810 = vmatprep.subr.bf16.mxu0 0
        %811 = vmatpush1.bf16.msra.mxu0 0
        %812 = vmatprep.subr.bf16.mxu0 0
        %813 = vmatpush1.bf16.msra.mxu0 0
        %814 = vmatprep.subr.bf16.mxu0 0
        %815 = vmatpush1.bf16.msra.mxu0 0
        %816 = vmatprep.subr.bf16.mxu0 0
        %817 = vmatpush1.bf16.msra.mxu0 0
        %818 = vmatprep.subr.bf16.mxu0 0
        %819 = vmatpush1.bf16.msra.mxu0 0
        %820 = vmatprep.subr.bf16.mxu0 0
        %821 = vmatpush1.bf16.msra.mxu0 0
        %822 = vmatprep.subr.bf16.mxu0 0
        %823 = vmatpush1.bf16.msra.mxu0 0
        %824 = vmatprep.subr.bf16.mxu0 0
        %825 = vmatpush1.bf16.msra.mxu0 0
        %826 = vmatprep.mubr.bf16.mxu0 0
        %827 = vmatmul.mubr.bf16.gmra.mrb[0].mxu0 %v783
        %v828 = vpop.f32.mrb[0].mxu0
        %v829 = vadd.f32 0.0, %v828
        %v830 = vpop.f32.mrb[0].mxu0
        %v831 = vpop.f32.mrb[0].mxu0
        %v832 = vadd.f32 0.0, %v831
        %v833 = vpop.f32.mrb[0].mxu0
        %834 = vmatprep.mubr.bf16.mxu0 0
        %835 = vmatmul.mubr.bf16.gmra.mrb[0].mxu0 %v786
        %v836 = vpop.f32.mrb[0].mxu0
        %v837 = vadd.f32 0.0, %v836
        %v838 = vpop.f32.mrb[0].mxu0
        %v839 = vpop.f32.mrb[0].mxu0
        %v840 = vadd.f32 0.0, %v839
        %v841 = vpop.f32.mrb[0].mxu0
        %842 = vmatprep.mubr.bf16.mxu0 0
        %843 = vmatmul.mubr.bf16.gmra.mrb[0].mxu0 %v789
        %v844 = vpop.f32.mrb[0].mxu0
        %v845 = vadd.f32 0.0, %v844
        %v846 = vpop.f32.mrb[0].mxu0
        %v847 = vpop.f32.mrb[0].mxu0
        %v848 = vadd.f32 0.0, %v847
        %v849 = vpop.f32.mrb[0].mxu0
        %850 = vmatprep.mubr.bf16.mxu0 0
        %851 = vmatmul.mubr.bf16.gmra.mrb[0].mxu0 %v792
        %v852 = vpop.f32.mrb[0].mxu0
        %v853 = vadd.f32 0.0, %v852
        %v854 = vpop.f32.mrb[0].mxu0
        %v855 = vpop.f32.mrb[0].mxu0
        %v856 = vpop.f32.mrb[0].mxu0
        %857 = vdwg.mxu0
        %v858 = vadd.f32 %v661, %v829
        %v859 = vadd.f32 %v662, %v832
        %v860 = vadd.f32 %v663, %v837
        %v861 = vadd.f32 %v664, %v840
        %v862 = vadd.f32 %v665, %v845
        %v863 = vadd.f32 %v666, %v848
        %v864 = vadd.f32 %v667, %v853
        %s865 = scalar_lea.vmem %s369, 56
        %v866 = vld [vmem:[%s865] sm:$0xf]
        %v867 = vld [vmem:[%s865 + $0x4] sm:$0xf]
        %v868 = vld [vmem:[%s865 + $0x8] sm:$0xf]
        %v869 = vld [vmem:[%s865 + $0xc] sm:$0xf]
        %v870 = vld [vmem:[%s865 + $0x10] sm:$0xf]
        %v871 = vld [vmem:[%s865 + $0x14] sm:$0xf]
        %v872 = vld [vmem:[%s865 + $0x18] sm:$0x1]
        %v880 = vunpack.c.l.b16 %v866
        %v881 = vunpack.c.l.b16 %v867
        %v882 = vunpack.c.l.b16 %v868
        %v883 = vunpack.c.l.b16 %v869
        %v884 = vunpack.c.l.b16 %v870
        %v885 = vunpack.c.l.b16 %v871
        %v886 = vunpack.c.l.b16 %v872
        %v887 = vpack.c.b16 %v881, %v880
        %v888 = vpack.c.b16 %v883, %v882
        %v889 = vpack.c.b16 %v885, %v884
        %v890 = vpack.c.b16 %v886, %v886
        %895 = vmatprep.subr.bf16.mxu0 0
        %896 = vmatpush1.bf16.msra.mxu0 %v485
        %897 = vmatprep.subr.bf16.mxu0 0
        %898 = vmatpush1.bf16.msra.mxu0 %v486
        %899 = vmatprep.subr.bf16.mxu0 0
        %900 = vmatpush1.bf16.msra.mxu0 %v487
        %901 = vmatprep.subr.bf16.mxu0 0
        %902 = vmatpush1.bf16.msra.mxu0 %v488
        %903 = vmatprep.subr.bf16.mxu0 0
        %904 = vmatpush1.bf16.msra.mxu0 %v489
        %905 = vmatprep.subr.bf16.mxu0 0
        %906 = vmatpush1.bf16.msra.mxu0 %v490
        %907 = vmatprep.subr.bf16.mxu0 0
        %908 = vmatpush1.bf16.msra.mxu0 %v491
        %909 = vmatprep.subr.bf16.mxu0 0
        %910 = vmatpush1.bf16.msra.mxu0 %v492
        %911 = vmatprep.subr.bf16.mxu0 0
        %912 = vmatpush1.bf16.msra.mxu0 0
        %913 = vmatprep.subr.bf16.mxu0 0
        %914 = vmatpush1.bf16.msra.mxu0 0
        %915 = vmatprep.subr.bf16.mxu0 0
        %916 = vmatpush1.bf16.msra.mxu0 0
        %917 = vmatprep.subr.bf16.mxu0 0
        %918 = vmatpush1.bf16.msra.mxu0 0
        %919 = vmatprep.subr.bf16.mxu0 0
        %920 = vmatpush1.bf16.msra.mxu0 0
        %921 = vmatprep.subr.bf16.mxu0 0
        %922 = vmatpush1.bf16.msra.mxu0 0
        %923 = vmatprep.subr.bf16.mxu0 0
        %924 = vmatpush1.bf16.msra.mxu0 0
        %925 = vmatprep.subr.bf16.mxu0 0
        %926 = vmatpush1.bf16.msra.mxu0 0
        %927 = vmatprep.mubr.bf16.mxu0 0
        %928 = vmatmul.mubr.bf16.gmra.mrb[0].mxu0 %v887
        %v929 = vpop.f32.mrb[0].mxu0
        %v930 = vadd.f32 %v429, %v929
        %v931 = vpop.f32.mrb[0].mxu0
        %v932 = vpop.f32.mrb[0].mxu0
        %v933 = vadd.f32 %v429, %v932
        %v934 = vpop.f32.mrb[0].mxu0
        %935 = vmatprep.mubr.bf16.mxu0 0
        %936 = vmatmul.mubr.bf16.gmra.mrb[0].mxu0 %v888
        %v937 = vpop.f32.mrb[0].mxu0
        %v938 = vadd.f32 %v429, %v937
        %v939 = vpop.f32.mrb[0].mxu0
        %v940 = vpop.f32.mrb[0].mxu0
        %v941 = vadd.f32 %v429, %v940
        %v942 = vpop.f32.mrb[0].mxu0
        %943 = vmatprep.mubr.bf16.mxu0 0
        %944 = vmatmul.mubr.bf16.gmra.mrb[0].mxu0 %v889
        %v945 = vpop.f32.mrb[0].mxu0
        %v946 = vadd.f32 %v429, %v945
        %v947 = vpop.f32.mrb[0].mxu0
        %v948 = vpop.f32.mrb[0].mxu0
        %v949 = vadd.f32 %v429, %v948
        %v950 = vpop.f32.mrb[0].mxu0
        %951 = vmatprep.mubr.bf16.mxu0 0
        %952 = vmatmul.mubr.bf16.gmra.mrb[0].mxu0 %v890
        %v953 = vpop.f32.mrb[0].mxu0
        %v954 = vadd.f32 %v429, %v953
        %v955 = vpop.f32.mrb[0].mxu0
        %v956 = vpop.f32.mrb[0].mxu0
        %v957 = vpop.f32.mrb[0].mxu0
        %958 = vdwg.mxu0
        %v959 = vmax.f32 %v930, 0.0
        %v960 = vmax.f32 %v933, 0.0
        %v961 = vmax.f32 %v938, 0.0
        %v962 = vmax.f32 %v941, 0.0
        %v963 = vmax.f32 %v946, 0.0
        %v964 = vmax.f32 %v949, 0.0
        %v965 = vmax.f32 %v954, 0.0
        %v966 = vpack.c.bf16 %v960, %v959
        %v967 = vpack.c.bf16 %v962, %v961
        %v968 = vpack.c.bf16 %v964, %v963
        %v969 = vpack.c.bf16 %v965, %v965
        %s970 = scalar_lea.vmem %s378, 16
        %v971 = vld [vmem:[%s970] sm:$0xf]
        %v972 = vld [vmem:[%s970 + $0x4] sm:$0xf]
        %v975 = vunpack.c.l.b16 %v971
        %v976 = vunpack.c.l.b16 %v972
        %v977 = vpack.c.b16 %v976, %v975
        %v980 = vsel %vm584, %v966, 0
        %v983 = vsel %vm584, %v967, 0
        %v986 = vsel %vm584, %v968, 0
        %v989 = vsel %vm584, %v969, 0
        %991 = vmatprep.subr.bf16.mxu0 0
        %992 = vmatpush1.bf16.msra.mxu0 %v977
        %993 = vmatprep.subr.bf16.mxu0 0
        %994 = vmatpush1.bf16.msra.mxu0 0
        %995 = vmatprep.subr.bf16.mxu0 0
        %996 = vmatpush1.bf16.msra.mxu0 0
        %997 = vmatprep.subr.bf16.mxu0 0
        %998 = vmatpush1.bf16.msra.mxu0 0
        %999 = vmatprep.subr.bf16.mxu0 0
        %1000 = vmatpush1.bf16.msra.mxu0 0
        %1001 = vmatprep.subr.bf16.mxu0 0
        %1002 = vmatpush1.bf16.msra.mxu0 0
        %1003 = vmatprep.subr.bf16.mxu0 0
        %1004 = vmatpush1.bf16.msra.mxu0 0
        %1005 = vmatprep.subr.bf16.mxu0 0
        %1006 = vmatpush1.bf16.msra.mxu0 0
        %1007 = vmatprep.subr.bf16.mxu0 0
        %1008 = vmatpush1.bf16.msra.mxu0 0
        %1009 = vmatprep.subr.bf16.mxu0 0
        %1010 = vmatpush1.bf16.msra.mxu0 0
        %1011 = vmatprep.subr.bf16.mxu0 0
        %1012 = vmatpush1.bf16.msra.mxu0 0
        %1013 = vmatprep.subr.bf16.mxu0 0
        %1014 = vmatpush1.bf16.msra.mxu0 0
        %1015 = vmatprep.subr.bf16.mxu0 0
        %1016 = vmatpush1.bf16.msra.mxu0 0
        %1017 = vmatprep.subr.bf16.mxu0 0
        %1018 = vmatpush1.bf16.msra.mxu0 0
        %1019 = vmatprep.subr.bf16.mxu0 0
        %1020 = vmatpush1.bf16.msra.mxu0 0
        %1021 = vmatprep.subr.bf16.mxu0 0
        %1022 = vmatpush1.bf16.msra.mxu0 0
        %1023 = vmatprep.mubr.bf16.mxu0 0
        %1024 = vmatmul.mubr.bf16.gmra.mrb[0].mxu0 %v980
        %v1025 = vpop.f32.mrb[0].mxu0
        %v1026 = vadd.f32 0.0, %v1025
        %v1027 = vpop.f32.mrb[0].mxu0
        %v1028 = vpop.f32.mrb[0].mxu0
        %v1029 = vadd.f32 0.0, %v1028
        %v1030 = vpop.f32.mrb[0].mxu0
        %1031 = vmatprep.mubr.bf16.mxu0 0
        %1032 = vmatmul.mubr.bf16.gmra.mrb[0].mxu0 %v983
        %v1033 = vpop.f32.mrb[0].mxu0
        %v1034 = vadd.f32 0.0, %v1033
        %v1035 = vpop.f32.mrb[0].mxu0
        %v1036 = vpop.f32.mrb[0].mxu0
        %v1037 = vadd.f32 0.0, %v1036
        %v1038 = vpop.f32.mrb[0].mxu0
        %1039 = vmatprep.mubr.bf16.mxu0 0
        %1040 = vmatmul.mubr.bf16.gmra.mrb[0].mxu0 %v986
        %v1041 = vpop.f32.mrb[0].mxu0
        %v1042 = vadd.f32 0.0, %v1041
        %v1043 = vpop.f32.mrb[0].mxu0
        %v1044 = vpop.f32.mrb[0].mxu0
        %v1045 = vadd.f32 0.0, %v1044
        %v1046 = vpop.f32.mrb[0].mxu0
        %1047 = vmatprep.mubr.bf16.mxu0 0
        %1048 = vmatmul.mubr.bf16.gmra.mrb[0].mxu0 %v989
        %v1049 = vpop.f32.mrb[0].mxu0
        %v1050 = vadd.f32 0.0, %v1049
        %v1051 = vpop.f32.mrb[0].mxu0
        %v1052 = vpop.f32.mrb[0].mxu0
        %v1053 = vpop.f32.mrb[0].mxu0
        %1054 = vdwg.mxu0
        %v1055 = vadd.f32 %v858, %v1026
        %v1056 = vadd.f32 %v859, %v1029
        %v1057 = vadd.f32 %v860, %v1034
        %v1058 = vadd.f32 %v861, %v1037
        %v1059 = vadd.f32 %v862, %v1042
        %v1060 = vadd.f32 %v863, %v1045
        %v1061 = vadd.f32 %v864, %v1050
        %s1062 = scalar_lea.vmem %s369, 84
        %v1063 = vld [vmem:[%s1062] sm:$0xf]
        %v1064 = vld [vmem:[%s1062 + $0x4] sm:$0xf]
        %v1065 = vld [vmem:[%s1062 + $0x8] sm:$0xf]
        %v1066 = vld [vmem:[%s1062 + $0xc] sm:$0xf]
        %v1067 = vld [vmem:[%s1062 + $0x10] sm:$0xf]
        %v1068 = vld [vmem:[%s1062 + $0x14] sm:$0xf]
        %v1069 = vld [vmem:[%s1062 + $0x18] sm:$0x1]
        %v1077 = vunpack.c.l.b16 %v1063
        %v1078 = vunpack.c.l.b16 %v1064
        %v1079 = vunpack.c.l.b16 %v1065
        %v1080 = vunpack.c.l.b16 %v1066
        %v1081 = vunpack.c.l.b16 %v1067
        %v1082 = vunpack.c.l.b16 %v1068
        %v1083 = vunpack.c.l.b16 %v1069
        %v1084 = vpack.c.b16 %v1078, %v1077
        %v1085 = vpack.c.b16 %v1080, %v1079
        %v1086 = vpack.c.b16 %v1082, %v1081
        %v1087 = vpack.c.b16 %v1083, %v1083
        %1092 = vmatprep.subr.bf16.mxu0 0
        %1093 = vmatpush1.bf16.msra.mxu0 %v485
        %1094 = vmatprep.subr.bf16.mxu0 0
        %1095 = vmatpush1.bf16.msra.mxu0 %v486
        %1096 = vmatprep.subr.bf16.mxu0 0
        %1097 = vmatpush1.bf16.msra.mxu0 %v487
        %1098 = vmatprep.subr.bf16.mxu0 0
        %1099 = vmatpush1.bf16.msra.mxu0 %v488
        %1100 = vmatprep.subr.bf16.mxu0 0
        %1101 = vmatpush1.bf16.msra.mxu0 %v489
        %1102 = vmatprep.subr.bf16.mxu0 0
        %1103 = vmatpush1.bf16.msra.mxu0 %v490
        %1104 = vmatprep.subr.bf16.mxu0 0
        %1105 = vmatpush1.bf16.msra.mxu0 %v491
        %1106 = vmatprep.subr.bf16.mxu0 0
        %1107 = vmatpush1.bf16.msra.mxu0 %v492
        %1108 = vmatprep.subr.bf16.mxu0 0
        %1109 = vmatpush1.bf16.msra.mxu0 0
        %1110 = vmatprep.subr.bf16.mxu0 0
        %1111 = vmatpush1.bf16.msra.mxu0 0
        %1112 = vmatprep.subr.bf16.mxu0 0
        %1113 = vmatpush1.bf16.msra.mxu0 0
        %1114 = vmatprep.subr.bf16.mxu0 0
        %1115 = vmatpush1.bf16.msra.mxu0 0
        %1116 = vmatprep.subr.bf16.mxu0 0
        %1117 = vmatpush1.bf16.msra.mxu0 0
        %1118 = vmatprep.subr.bf16.mxu0 0
        %1119 = vmatpush1.bf16.msra.mxu0 0
        %1120 = vmatprep.subr.bf16.mxu0 0
        %1121 = vmatpush1.bf16.msra.mxu0 0
        %1122 = vmatprep.subr.bf16.mxu0 0
        %1123 = vmatpush1.bf16.msra.mxu0 0
        %1124 = vmatprep.mubr.bf16.mxu0 0
        %1125 = vmatmul.mubr.bf16.gmra.mrb[0].mxu0 %v1084
        %v1126 = vpop.f32.mrb[0].mxu0
        %v1127 = vadd.f32 %v429, %v1126
        %v1128 = vpop.f32.mrb[0].mxu0
        %v1129 = vpop.f32.mrb[0].mxu0
        %v1130 = vadd.f32 %v429, %v1129
        %v1131 = vpop.f32.mrb[0].mxu0
        %1132 = vmatprep.mubr.bf16.mxu0 0
        %1133 = vmatmul.mubr.bf16.gmra.mrb[0].mxu0 %v1085
        %v1134 = vpop.f32.mrb[0].mxu0
        %v1135 = vadd.f32 %v429, %v1134
        %v1136 = vpop.f32.mrb[0].mxu0
        %v1137 = vpop.f32.mrb[0].mxu0
        %v1138 = vadd.f32 %v429, %v1137
        %v1139 = vpop.f32.mrb[0].mxu0
        %1140 = vmatprep.mubr.bf16.mxu0 0
        %1141 = vmatmul.mubr.bf16.gmra.mrb[0].mxu0 %v1086
        %v1142 = vpop.f32.mrb[0].mxu0
        %v1143 = vadd.f32 %v429, %v1142
        %v1144 = vpop.f32.mrb[0].mxu0
        %v1145 = vpop.f32.mrb[0].mxu0
        %v1146 = vadd.f32 %v429, %v1145
        %v1147 = vpop.f32.mrb[0].mxu0
        %1148 = vmatprep.mubr.bf16.mxu0 0
        %1149 = vmatmul.mubr.bf16.gmra.mrb[0].mxu0 %v1087
        %v1150 = vpop.f32.mrb[0].mxu0
        %v1151 = vadd.f32 %v429, %v1150
        %v1152 = vpop.f32.mrb[0].mxu0
        %v1153 = vpop.f32.mrb[0].mxu0
        %v1154 = vpop.f32.mrb[0].mxu0
        %1155 = vdwg.mxu0
        %v1156 = vmax.f32 %v1127, 0.0
        %v1157 = vmax.f32 %v1130, 0.0
        %v1158 = vmax.f32 %v1135, 0.0
        %v1159 = vmax.f32 %v1138, 0.0
        %v1160 = vmax.f32 %v1143, 0.0
        %v1161 = vmax.f32 %v1146, 0.0
        %v1162 = vmax.f32 %v1151, 0.0
        %v1163 = vpack.c.bf16 %v1157, %v1156
        %v1164 = vpack.c.bf16 %v1159, %v1158
        %v1165 = vpack.c.bf16 %v1161, %v1160
        %v1166 = vpack.c.bf16 %v1162, %v1162
        %s1167 = scalar_lea.vmem %s378, 24
        %v1168 = vld [vmem:[%s1167] sm:$0xf]
        %v1169 = vld [vmem:[%s1167 + $0x4] sm:$0xf]
        %v1172 = vunpack.c.l.b16 %v1168
        %v1173 = vunpack.c.l.b16 %v1169
        %v1174 = vpack.c.b16 %v1173, %v1172
        %v1177 = vsel %vm584, %v1163, 0
        %v1180 = vsel %vm584, %v1164, 0
        %v1183 = vsel %vm584, %v1165, 0
        %v1186 = vsel %vm584, %v1166, 0
        %1188 = vmatprep.subr.bf16.mxu0 0
        %1189 = vmatpush1.bf16.msra.mxu0 %v1174
        %1190 = vmatprep.subr.bf16.mxu0 0
        %1191 = vmatpush1.bf16.msra.mxu0 0
        %1192 = vmatprep.subr.bf16.mxu0 0
        %1193 = vmatpush1.bf16.msra.mxu0 0
        %1194 = vmatprep.subr.bf16.mxu0 0
        %1195 = vmatpush1.bf16.msra.mxu0 0
        %1196 = vmatprep.subr.bf16.mxu0 0
        %1197 = vmatpush1.bf16.msra.mxu0 0
        %1198 = vmatprep.subr.bf16.mxu0 0
        %1199 = vmatpush1.bf16.msra.mxu0 0
        %1200 = vmatprep.subr.bf16.mxu0 0
        %1201 = vmatpush1.bf16.msra.mxu0 0
        %1202 = vmatprep.subr.bf16.mxu0 0
        %1203 = vmatpush1.bf16.msra.mxu0 0
        %1204 = vmatprep.subr.bf16.mxu0 0
        %1205 = vmatpush1.bf16.msra.mxu0 0
        %1206 = vmatprep.subr.bf16.mxu0 0
        %1207 = vmatpush1.bf16.msra.mxu0 0
        %1208 = vmatprep.subr.bf16.mxu0 0
        %1209 = vmatpush1.bf16.msra.mxu0 0
        %1210 = vmatprep.subr.bf16.mxu0 0
        %1211 = vmatpush1.bf16.msra.mxu0 0
        %1212 = vmatprep.subr.bf16.mxu0 0
        %1213 = vmatpush1.bf16.msra.mxu0 0
        %1214 = vmatprep.subr.bf16.mxu0 0
        %1215 = vmatpush1.bf16.msra.mxu0 0
        %1216 = vmatprep.subr.bf16.mxu0 0
        %1217 = vmatpush1.bf16.msra.mxu0 0
        %1218 = vmatprep.subr.bf16.mxu0 0
        %1219 = vmatpush1.bf16.msra.mxu0 0
        %1220 = vmatprep.mubr.bf16.mxu0 0
        %1221 = vmatmul.mubr.bf16.gmra.mrb[0].mxu0 %v1177
        %v1222 = vpop.f32.mrb[0].mxu0
        %v1223 = vadd.f32 0.0, %v1222
        %v1224 = vpop.f32.mrb[0].mxu0
        %v1225 = vpop.f32.mrb[0].mxu0
        %v1226 = vadd.f32 0.0, %v1225
        %v1227 = vpop.f32.mrb[0].mxu0
        %1228 = vmatprep.mubr.bf16.mxu0 0
        %1229 = vmatmul.mubr.bf16.gmra.mrb[0].mxu0 %v1180
        %v1230 = vpop.f32.mrb[0].mxu0
        %v1231 = vadd.f32 0.0, %v1230
        %v1232 = vpop.f32.mrb[0].mxu0
        %v1233 = vpop.f32.mrb[0].mxu0
        %v1234 = vadd.f32 0.0, %v1233
        %v1235 = vpop.f32.mrb[0].mxu0
        %1236 = vmatprep.mubr.bf16.mxu0 0
        %1237 = vmatmul.mubr.bf16.gmra.mrb[0].mxu0 %v1183
        %v1238 = vpop.f32.mrb[0].mxu0
        %v1239 = vadd.f32 0.0, %v1238
        %v1240 = vpop.f32.mrb[0].mxu0
        %v1241 = vpop.f32.mrb[0].mxu0
        %v1242 = vadd.f32 0.0, %v1241
        %v1243 = vpop.f32.mrb[0].mxu0
        %1244 = vmatprep.mubr.bf16.mxu0 0
        %1245 = vmatmul.mubr.bf16.gmra.mrb[0].mxu0 %v1186
        %v1246 = vpop.f32.mrb[0].mxu0
        %v1247 = vadd.f32 0.0, %v1246
        %v1248 = vpop.f32.mrb[0].mxu0
        %v1249 = vpop.f32.mrb[0].mxu0
        %v1250 = vpop.f32.mrb[0].mxu0
        %1251 = vdwg.mxu0
        %v1252 = vadd.f32 %v1055, %v1223
        %v1253 = vadd.f32 %v1056, %v1226
        %v1254 = vadd.f32 %v1057, %v1231
        %v1255 = vadd.f32 %v1058, %v1234
        %v1256 = vadd.f32 %v1059, %v1239
        %v1257 = vadd.f32 %v1060, %v1242
        %v1258 = vadd.f32 %v1061, %v1247
        %s1259 = scalar_lea.vmem %s369, 112
        %v1260 = vld [vmem:[%s1259] sm:$0xf]
        %v1261 = vld [vmem:[%s1259 + $0x4] sm:$0xf]
        %v1262 = vld [vmem:[%s1259 + $0x8] sm:$0xf]
        %v1263 = vld [vmem:[%s1259 + $0xc] sm:$0xf]
        %v1264 = vld [vmem:[%s1259 + $0x10] sm:$0xf]
        %v1265 = vld [vmem:[%s1259 + $0x14] sm:$0xf]
        %v1266 = vld [vmem:[%s1259 + $0x18] sm:$0x1]
        %v1274 = vunpack.c.l.b16 %v1260
        %v1275 = vunpack.c.l.b16 %v1261
        %v1276 = vunpack.c.l.b16 %v1262
        %v1277 = vunpack.c.l.b16 %v1263
        %v1278 = vunpack.c.l.b16 %v1264
        %v1279 = vunpack.c.l.b16 %v1265
        %v1280 = vunpack.c.l.b16 %v1266
        %v1281 = vpack.c.b16 %v1275, %v1274
        %v1282 = vpack.c.b16 %v1277, %v1276
        %v1283 = vpack.c.b16 %v1279, %v1278
        %v1284 = vpack.c.b16 %v1280, %v1280
        %1289 = vmatprep.subr.bf16.mxu0 0
        %1290 = vmatpush1.bf16.msra.mxu0 %v485
        %1291 = vmatprep.subr.bf16.mxu0 0
        %1292 = vmatpush1.bf16.msra.mxu0 %v486
        %1293 = vmatprep.subr.bf16.mxu0 0
        %1294 = vmatpush1.bf16.msra.mxu0 %v487
        %1295 = vmatprep.subr.bf16.mxu0 0
        %1296 = vmatpush1.bf16.msra.mxu0 %v488
        %1297 = vmatprep.subr.bf16.mxu0 0
        %1298 = vmatpush1.bf16.msra.mxu0 %v489
        %1299 = vmatprep.subr.bf16.mxu0 0
        %1300 = vmatpush1.bf16.msra.mxu0 %v490
        %1301 = vmatprep.subr.bf16.mxu0 0
        %1302 = vmatpush1.bf16.msra.mxu0 %v491
        %1303 = vmatprep.subr.bf16.mxu0 0
        %1304 = vmatpush1.bf16.msra.mxu0 %v492
        %1305 = vmatprep.subr.bf16.mxu0 0
        %1306 = vmatpush1.bf16.msra.mxu0 0
        %1307 = vmatprep.subr.bf16.mxu0 0
        %1308 = vmatpush1.bf16.msra.mxu0 0
        %1309 = vmatprep.subr.bf16.mxu0 0
        %1310 = vmatpush1.bf16.msra.mxu0 0
        %1311 = vmatprep.subr.bf16.mxu0 0
        %1312 = vmatpush1.bf16.msra.mxu0 0
        %1313 = vmatprep.subr.bf16.mxu0 0
        %1314 = vmatpush1.bf16.msra.mxu0 0
        %1315 = vmatprep.subr.bf16.mxu0 0
        %1316 = vmatpush1.bf16.msra.mxu0 0
        %1317 = vmatprep.subr.bf16.mxu0 0
        %1318 = vmatpush1.bf16.msra.mxu0 0
        %1319 = vmatprep.subr.bf16.mxu0 0
        %1320 = vmatpush1.bf16.msra.mxu0 0
        %1321 = vmatprep.mubr.bf16.mxu0 0
        %1322 = vmatmul.mubr.bf16.gmra.mrb[0].mxu0 %v1281
        %v1323 = vpop.f32.mrb[0].mxu0
        %v1324 = vadd.f32 %v429, %v1323
        %v1325 = vpop.f32.mrb[0].mxu0
        %v1326 = vpop.f32.mrb[0].mxu0
        %v1327 = vadd.f32 %v429, %v1326
        %v1328 = vpop.f32.mrb[0].mxu0
        %1329 = vmatprep.mubr.bf16.mxu0 0
        %1330 = vmatmul.mubr.bf16.gmra.mrb[0].mxu0 %v1282
        %v1331 = vpop.f32.mrb[0].mxu0
        %v1332 = vadd.f32 %v429, %v1331
        %v1333 = vpop.f32.mrb[0].mxu0
        %v1334 = vpop.f32.mrb[0].mxu0
        %v1335 = vadd.f32 %v429, %v1334
        %v1336 = vpop.f32.mrb[0].mxu0
        %1337 = vmatprep.mubr.bf16.mxu0 0
        %1338 = vmatmul.mubr.bf16.gmra.mrb[0].mxu0 %v1283
        %v1339 = vpop.f32.mrb[0].mxu0
        %v1340 = vadd.f32 %v429, %v1339
        %v1341 = vpop.f32.mrb[0].mxu0
        %v1342 = vpop.f32.mrb[0].mxu0
        %v1343 = vadd.f32 %v429, %v1342
        %v1344 = vpop.f32.mrb[0].mxu0
        %1345 = vmatprep.mubr.bf16.mxu0 0
        %1346 = vmatmul.mubr.bf16.gmra.mrb[0].mxu0 %v1284
        %v1347 = vpop.f32.mrb[0].mxu0
        %v1348 = vadd.f32 %v429, %v1347
        %v1349 = vpop.f32.mrb[0].mxu0
        %v1350 = vpop.f32.mrb[0].mxu0
        %v1351 = vpop.f32.mrb[0].mxu0
        %1352 = vdwg.mxu0
        %v1353 = vmax.f32 %v1324, 0.0
        %v1354 = vmax.f32 %v1327, 0.0
        %v1355 = vmax.f32 %v1332, 0.0
        %v1356 = vmax.f32 %v1335, 0.0
        %v1357 = vmax.f32 %v1340, 0.0
        %v1358 = vmax.f32 %v1343, 0.0
        %v1359 = vmax.f32 %v1348, 0.0
        %v1360 = vpack.c.bf16 %v1354, %v1353
        %v1361 = vpack.c.bf16 %v1356, %v1355
        %v1362 = vpack.c.bf16 %v1358, %v1357
        %v1363 = vpack.c.bf16 %v1359, %v1359
        %s1364 = scalar_lea.vmem %s378, 32
        %v1365 = vld [vmem:[%s1364] sm:$0xf]
        %v1366 = vld [vmem:[%s1364 + $0x4] sm:$0xf]
        %v1369 = vunpack.c.l.b16 %v1365
        %v1370 = vunpack.c.l.b16 %v1366
        %v1371 = vpack.c.b16 %v1370, %v1369
        %v1374 = vsel %vm584, %v1360, 0
        %v1377 = vsel %vm584, %v1361, 0
        %v1380 = vsel %vm584, %v1362, 0
        %v1383 = vsel %vm584, %v1363, 0
        %1385 = vmatprep.subr.bf16.mxu0 0
        %1386 = vmatpush1.bf16.msra.mxu0 %v1371
        %1387 = vmatprep.subr.bf16.mxu0 0
        %1388 = vmatpush1.bf16.msra.mxu0 0
        %1389 = vmatprep.subr.bf16.mxu0 0
        %1390 = vmatpush1.bf16.msra.mxu0 0
        %1391 = vmatprep.subr.bf16.mxu0 0
        %1392 = vmatpush1.bf16.msra.mxu0 0
        %1393 = vmatprep.subr.bf16.mxu0 0
        %1394 = vmatpush1.bf16.msra.mxu0 0
        %1395 = vmatprep.subr.bf16.mxu0 0
        %1396 = vmatpush1.bf16.msra.mxu0 0
        %1397 = vmatprep.subr.bf16.mxu0 0
        %1398 = vmatpush1.bf16.msra.mxu0 0
        %1399 = vmatprep.subr.bf16.mxu0 0
        %1400 = vmatpush1.bf16.msra.mxu0 0
        %1401 = vmatprep.subr.bf16.mxu0 0
        %1402 = vmatpush1.bf16.msra.mxu0 0
        %1403 = vmatprep.subr.bf16.mxu0 0
        %1404 = vmatpush1.bf16.msra.mxu0 0
        %1405 = vmatprep.subr.bf16.mxu0 0
        %1406 = vmatpush1.bf16.msra.mxu0 0
        %1407 = vmatprep.subr.bf16.mxu0 0
        %1408 = vmatpush1.bf16.msra.mxu0 0
        %1409 = vmatprep.subr.bf16.mxu0 0
        %1410 = vmatpush1.bf16.msra.mxu0 0
        %1411 = vmatprep.subr.bf16.mxu0 0
        %1412 = vmatpush1.bf16.msra.mxu0 0
        %1413 = vmatprep.subr.bf16.mxu0 0
        %1414 = vmatpush1.bf16.msra.mxu0 0
        %1415 = vmatprep.subr.bf16.mxu0 0
        %1416 = vmatpush1.bf16.msra.mxu0 0
        %1417 = vmatprep.mubr.bf16.mxu0 0
        %1418 = vmatmul.mubr.bf16.gmra.mrb[0].mxu0 %v1374
        %v1419 = vpop.f32.mrb[0].mxu0
        %v1420 = vadd.f32 0.0, %v1419
        %v1421 = vpop.f32.mrb[0].mxu0
        %v1422 = vpop.f32.mrb[0].mxu0
        %v1423 = vadd.f32 0.0, %v1422
        %v1424 = vpop.f32.mrb[0].mxu0
        %1425 = vmatprep.mubr.bf16.mxu0 0
        %1426 = vmatmul.mubr.bf16.gmra.mrb[0].mxu0 %v1377
        %v1427 = vpop.f32.mrb[0].mxu0
        %v1428 = vadd.f32 0.0, %v1427
        %v1429 = vpop.f32.mrb[0].mxu0
        %v1430 = vpop.f32.mrb[0].mxu0
        %v1431 = vadd.f32 0.0, %v1430
        %v1432 = vpop.f32.mrb[0].mxu0
        %1433 = vmatprep.mubr.bf16.mxu0 0
        %1434 = vmatmul.mubr.bf16.gmra.mrb[0].mxu0 %v1380
        %v1435 = vpop.f32.mrb[0].mxu0
        %v1436 = vadd.f32 0.0, %v1435
        %v1437 = vpop.f32.mrb[0].mxu0
        %v1438 = vpop.f32.mrb[0].mxu0
        %v1439 = vadd.f32 0.0, %v1438
        %v1440 = vpop.f32.mrb[0].mxu0
        %1441 = vmatprep.mubr.bf16.mxu0 0
        %1442 = vmatmul.mubr.bf16.gmra.mrb[0].mxu0 %v1383
        %v1443 = vpop.f32.mrb[0].mxu0
        %v1444 = vadd.f32 0.0, %v1443
        %v1445 = vpop.f32.mrb[0].mxu0
        %v1446 = vpop.f32.mrb[0].mxu0
        %v1447 = vpop.f32.mrb[0].mxu0
        %1448 = vdwg.mxu0
        %v1449 = vadd.f32 %v1252, %v1420
        %v1450 = vadd.f32 %v1253, %v1423
        %v1451 = vadd.f32 %v1254, %v1428
        %v1452 = vadd.f32 %v1255, %v1431
        %v1453 = vadd.f32 %v1256, %v1436
        %v1454 = vadd.f32 %v1257, %v1439
        %v1455 = vadd.f32 %v1258, %v1444
        %vm1456 = vcmask 261120
        %1457 = vst.msk [vmem:[#allocation2] sm:$0xff] %vm1456, %v1449
        %1458 = vst.msk [vmem:[#allocation2 + $0x8] sm:$0xff] %vm1456, %v1450
        %1459 = vst.msk [vmem:[#allocation2 + $0x10] sm:$0xff] %vm1456, %v1451
        %1460 = vst.msk [vmem:[#allocation2 + $0x18] sm:$0xff] %vm1456, %v1452
        %1461 = vst.msk [vmem:[#allocation2 + $0x20] sm:$0xff] %vm1456, %v1453
        %1462 = vst.msk [vmem:[#allocation2 + $0x28] sm:$0xff] %vm1456, %v1454
        %vm1463 = vcmask 254976
        %1464 = vst.msk [vmem:[#allocation2 + $0x30] sm:$0x3] %vm1463, %v1455
        %p1465 = scmp.eq.s32.totalorder %s26, 4
        // Predicated region
        $region61: #{dqn_conv_forward.1} parent=55 // pred_check
          %p1466 = pneg %p1465
        $region62: #{dqn_conv_forward.1} parent=55 // pred_check_branch
          %1468 = sbr.rel (%p1466) target = $region64
        $region63: #{dqn_conv_forward.1} parent=55 // pred_region
          %v1469 = vld [vmem:[#allocation2] sm:$0xff]
          %v1470 = vld [vmem:[#allocation2 + $0x8] sm:$0xff]
          %v1471 = vld [vmem:[#allocation2 + $0x10] sm:$0xff]
          %v1472 = vld [vmem:[#allocation2 + $0x18] sm:$0xff]
          %v1473 = vld [vmem:[#allocation2 + $0x20] sm:$0xff]
          %v1474 = vld [vmem:[#allocation2 + $0x28] sm:$0xff]
          %v1475 = vld [vmem:[#allocation2 + $0x30] sm:$0x3]
          %v1476 = vld [vmem:[%s4] sm:$0x1]
          %v1478 = vlaneseq
          %v1479 = vshrl.u32 %v1478, 7
          %v1480 = vsub.s32 0, %v1479
          %v1481 = vrot.slane %v1476, %v1480
          %v1483 = vadd.f32 %v1469, %v1481
          %v1484 = vadd.f32 %v1470, %v1481
          %v1485 = vadd.f32 %v1471, %v1481
          %v1486 = vadd.f32 %v1472, %v1481
          %v1487 = vadd.f32 %v1473, %v1481
          %v1488 = vadd.f32 %v1474, %v1481
          %v1489 = vadd.f32 %v1475, %v1481
          %v1490 = vmax.f32 %v1483, 0.0
          %v1491 = vmax.f32 %v1484, 0.0
          %v1492 = vmax.f32 %v1485, 0.0
          %v1493 = vmax.f32 %v1486, 0.0
          %v1494 = vmax.f32 %v1487, 0.0
          %v1495 = vmax.f32 %v1488, 0.0
          %v1496 = vmax.f32 %v1489, 0.0
          %v1497 = vpack.c.bf16 %v1491, %v1490
          %v1498 = vpack.c.bf16 %v1493, %v1492
          %v1499 = vpack.c.bf16 %v1495, %v1494
          %v1500 = vpack.c.bf16 %v1496, %v1496
          %v1501 = vld [vmem:[%s5] sm:$0xf]
          %v1502 = vld [vmem:[%s5 + $0x4] sm:$0xf]
          %v1503 = vld [vmem:[%s5 + $0x8] sm:$0xf]
          %v1504 = vld [vmem:[%s5 + $0xc] sm:$0xf]
          %s1505 = scalar_lea.vmem %s5, 16
          %v1506 = vld [vmem:[%s1505] sm:$0xf]
          %v1507 = vld [vmem:[%s1505 + $0x4] sm:$0xf]
          %v1508 = vld [vmem:[%s1505 + $0x8] sm:$0xf]
          %v1509 = vld [vmem:[%s1505 + $0xc] sm:$0xf]
          %v1511 = vrot.slane %v1497, 1
          %v1516 = vunpack.c.l.b16 %v1506
          %v1517 = vunpack.c.l.b16 %v1507
          %v1518 = vunpack.c.l.b16 %v1508
          %v1519 = vunpack.c.l.b16 %v1509
          %v1520 = vpack.c.b16 %v1517, %v1516
          %v1521 = vpack.c.b16 %v1519, %v1518
          %v1525 = vsel %vm1456, %v1511, 0
          %1527 = vmatprep.subr.bf16.mxu0 0
          %1528 = vmatpush1.bf16.msra.mxu0 %v1520
          %1529 = vmatprep.subr.bf16.mxu0 0
          %1530 = vmatpush1.bf16.msra.mxu0 %v1521
          %1531 = vmatprep.subr.bf16.mxu0 0
          %1532 = vmatpush1.bf16.msra.mxu0 0
          %1533 = vmatprep.subr.bf16.mxu0 0
          %1534 = vmatpush1.bf16.msra.mxu0 0
          %1535 = vmatprep.subr.bf16.mxu0 0
          %1536 = vmatpush1.bf16.msra.mxu0 0
          %1537 = vmatprep.subr.bf16.mxu0 0
          %1538 = vmatpush1.bf16.msra.mxu0 0
          %1539 = vmatprep.subr.bf16.mxu0 0
          %1540 = vmatpush1.bf16.msra.mxu0 0
          %1541 = vmatprep.subr.bf16.mxu0 0
          %1542 = vmatpush1.bf16.msra.mxu0 0
          %1543 = vmatprep.subr.bf16.mxu0 0
          %1544 = vmatpush1.bf16.msra.mxu0 0
          %1545 = vmatprep.subr.bf16.mxu0 0
          %1546 = vmatpush1.bf16.msra.mxu0 0
          %1547 = vmatprep.subr.bf16.mxu0 0
          %1548 = vmatpush1.bf16.msra.mxu0 0
          %1549 = vmatprep.subr.bf16.mxu0 0
          %1550 = vmatpush1.bf16.msra.mxu0 0
          %1551 = vmatprep.subr.bf16.mxu0 0
          %1552 = vmatpush1.bf16.msra.mxu0 0
          %1553 = vmatprep.subr.bf16.mxu0 0
          %1554 = vmatpush1.bf16.msra.mxu0 0
          %1555 = vmatprep.subr.bf16.mxu0 0
          %1556 = vmatpush1.bf16.msra.mxu0 0
          %1557 = vmatprep.subr.bf16.mxu0 0
          %1558 = vmatpush1.bf16.msra.mxu0 0
          %1559 = vmatprep.mubr.bf16.mxu0 0
          %1560 = vmatmul.mubr.bf16.gmra.mrb[0].mxu0 %v1525
          %v1561 = vpop.f32.mrb[0].mxu0
          %v1562 = vadd.f32 0.0, %v1561
          %v1563 = vpop.f32.mrb[0].mxu0
          %v1564 = vpop.f32.mrb[0].mxu0
          %v1565 = vpop.f32.mrb[0].mxu0
          %1566 = vdwg.mxu0
          %v1571 = vunpack.c.l.b16 %v1501
          %v1572 = vunpack.c.l.b16 %v1502
          %v1573 = vunpack.c.l.b16 %v1503
          %v1574 = vunpack.c.l.b16 %v1504
          %v1575 = vpack.c.b16 %v1572, %v1571
          %v1576 = vpack.c.b16 %v1574, %v1573
          %v1580 = vsel %vm1456, %v1497, 0
          %1582 = vmatprep.subr.bf16.mxu0 0
          %1583 = vmatpush1.bf16.msra.mxu0 %v1575
          %1584 = vmatprep.subr.bf16.mxu0 0
          %1585 = vmatpush1.bf16.msra.mxu0 %v1576
          %1586 = vmatprep.subr.bf16.mxu0 0
          %1587 = vmatpush1.bf16.msra.mxu0 0
          %1588 = vmatprep.subr.bf16.mxu0 0
          %1589 = vmatpush1.bf16.msra.mxu0 0
          %1590 = vmatprep.subr.bf16.mxu0 0
          %1591 = vmatpush1.bf16.msra.mxu0 0
          %1592 = vmatprep.subr.bf16.mxu0 0
          %1593 = vmatpush1.bf16.msra.mxu0 0
          %1594 = vmatprep.subr.bf16.mxu0 0
          %1595 = vmatpush1.bf16.msra.mxu0 0
          %1596 = vmatprep.subr.bf16.mxu0 0
          %1597 = vmatpush1.bf16.msra.mxu0 0
          %1598 = vmatprep.subr.bf16.mxu0 0
          %1599 = vmatpush1.bf16.msra.mxu0 0
          %1600 = vmatprep.subr.bf16.mxu0 0
          %1601 = vmatpush1.bf16.msra.mxu0 0
          %1602 = vmatprep.subr.bf16.mxu0 0
          %1603 = vmatpush1.bf16.msra.mxu0 0
          %1604 = vmatprep.subr.bf16.mxu0 0
          %1605 = vmatpush1.bf16.msra.mxu0 0
          %1606 = vmatprep.subr.bf16.mxu0 0
          %1607 = vmatpush1.bf16.msra.mxu0 0
          %1608 = vmatprep.subr.bf16.mxu0 0
          %1609 = vmatpush1.bf16.msra.mxu0 0
          %1610 = vmatprep.subr.bf16.mxu0 0
          %1611 = vmatpush1.bf16.msra.mxu0 0
          %1612 = vmatprep.subr.bf16.mxu0 0
          %1613 = vmatpush1.bf16.msra.mxu0 0
          %1614 = vmatprep.mubr.bf16.mxu0 0
          %1615 = vmatmul.mubr.bf16.gmra.mrb[0].mxu0 %v1580
          %v1616 = vpop.f32.mrb[0].mxu0
          %v1617 = vadd.f32 %v1562, %v1616
          %v1618 = vpop.f32.mrb[0].mxu0
          %v1619 = vpop.f32.mrb[0].mxu0
          %v1620 = vpop.f32.mrb[0].mxu0
          %1621 = vdwg.mxu0
          %s1622 = scalar_lea.vmem %s5, 32
          %v1623 = vld [vmem:[%s1622] sm:$0xf]
          %v1624 = vld [vmem:[%s1622 + $0x4] sm:$0xf]
          %v1625 = vld [vmem:[%s1622 + $0x8] sm:$0xf]
          %v1626 = vld [vmem:[%s1622 + $0xc] sm:$0xf]
          %v1627 = vrot.slane %v1497, 2
          %v1632 = vunpack.c.l.b16 %v1623
          %v1633 = vunpack.c.l.b16 %v1624
          %v1634 = vunpack.c.l.b16 %v1625
          %v1635 = vunpack.c.l.b16 %v1626
          %v1636 = vpack.c.b16 %v1633, %v1632
          %v1637 = vpack.c.b16 %v1635, %v1634
          %v1641 = vsel %vm1456, %v1627, 0
          %1643 = vmatprep.subr.bf16.mxu0 0
          %1644 = vmatpush1.bf16.msra.mxu0 %v1636
          %1645 = vmatprep.subr.bf16.mxu0 0
          %1646 = vmatpush1.bf16.msra.mxu0 %v1637
          %1647 = vmatprep.subr.bf16.mxu0 0
          %1648 = vmatpush1.bf16.msra.mxu0 0
          %1649 = vmatprep.subr.bf16.mxu0 0
          %1650 = vmatpush1.bf16.msra.mxu0 0
          %1651 = vmatprep.subr.bf16.mxu0 0
          %1652 = vmatpush1.bf16.msra.mxu0 0
          %1653 = vmatprep.subr.bf16.mxu0 0
          %1654 = vmatpush1.bf16.msra.mxu0 0
          %1655 = vmatprep.subr.bf16.mxu0 0
          %1656 = vmatpush1.bf16.msra.mxu0 0
          %1657 = vmatprep.subr.bf16.mxu0 0
          %1658 = vmatpush1.bf16.msra.mxu0 0
          %1659 = vmatprep.subr.bf16.mxu0 0
          %1660 = vmatpush1.bf16.msra.mxu0 0
          %1661 = vmatprep.subr.bf16.mxu0 0
          %1662 = vmatpush1.bf16.msra.mxu0 0
          %1663 = vmatprep.subr.bf16.mxu0 0
          %1664 = vmatpush1.bf16.msra.mxu0 0
          %1665 = vmatprep.subr.bf16.mxu0 0
          %1666 = vmatpush1.bf16.msra.mxu0 0
          %1667 = vmatprep.subr.bf16.mxu0 0
          %1668 = vmatpush1.bf16.msra.mxu0 0
          %1669 = vmatprep.subr.bf16.mxu0 0
          %1670 = vmatpush1.bf16.msra.mxu0 0
          %1671 = vmatprep.subr.bf16.mxu0 0
          %1672 = vmatpush1.bf16.msra.mxu0 0
          %1673 = vmatprep.subr.bf16.mxu0 0
          %1674 = vmatpush1.bf16.msra.mxu0 0
          %1675 = vmatprep.mubr.bf16.mxu0 0
          %1676 = vmatmul.mubr.bf16.gmra.mrb[0].mxu0 %v1641
          %v1677 = vpop.f32.mrb[0].mxu0
          %v1678 = vadd.f32 0.0, %v1677
          %v1679 = vpop.f32.mrb[0].mxu0
          %v1680 = vpop.f32.mrb[0].mxu0
          %v1681 = vpop.f32.mrb[0].mxu0
          %1682 = vdwg.mxu0
          %v1683 = vadd.f32 %v1617, %v1678
          %s1684 = scalar_lea.vmem %s5, 48
          %v1685 = vld [vmem:[%s1684] sm:$0xf]
          %v1686 = vld [vmem:[%s1684 + $0x4] sm:$0xf]
          %v1687 = vld [vmem:[%s1684 + $0x8] sm:$0xf]
          %v1688 = vld [vmem:[%s1684 + $0xc] sm:$0xf]
          %v1689 = vrot.slane %v1497, 3
          %v1694 = vunpack.c.l.b16 %v1685
          %v1695 = vunpack.c.l.b16 %v1686
          %v1696 = vunpack.c.l.b16 %v1687
          %v1697 = vunpack.c.l.b16 %v1688
          %v1698 = vpack.c.b16 %v1695, %v1694
          %v1699 = vpack.c.b16 %v1697, %v1696
          %v1703 = vsel %vm1456, %v1689, 0
          %1705 = vmatprep.subr.bf16.mxu0 0
          %1706 = vmatpush1.bf16.msra.mxu0 %v1698
          %1707 = vmatprep.subr.bf16.mxu0 0
          %1708 = vmatpush1.bf16.msra.mxu0 %v1699
          %1709 = vmatprep.subr.bf16.mxu0 0
          %1710 = vmatpush1.bf16.msra.mxu0 0
          %1711 = vmatprep.subr.bf16.mxu0 0
          %1712 = vmatpush1.bf16.msra.mxu0 0
          %1713 = vmatprep.subr.bf16.mxu0 0
          %1714 = vmatpush1.bf16.msra.mxu0 0
          %1715 = vmatprep.subr.bf16.mxu0 0
          %1716 = vmatpush1.bf16.msra.mxu0 0
          %1717 = vmatprep.subr.bf16.mxu0 0
          %1718 = vmatpush1.bf16.msra.mxu0 0
          %1719 = vmatprep.subr.bf16.mxu0 0
          %1720 = vmatpush1.bf16.msra.mxu0 0
          %1721 = vmatprep.subr.bf16.mxu0 0
          %1722 = vmatpush1.bf16.msra.mxu0 0
          %1723 = vmatprep.subr.bf16.mxu0 0
          %1724 = vmatpush1.bf16.msra.mxu0 0
          %1725 = vmatprep.subr.bf16.mxu0 0
          %1726 = vmatpush1.bf16.msra.mxu0 0
          %1727 = vmatprep.subr.bf16.mxu0 0
          %1728 = vmatpush1.bf16.msra.mxu0 0
          %1729 = vmatprep.subr.bf16.mxu0 0
          %1730 = vmatpush1.bf16.msra.mxu0 0
          %1731 = vmatprep.subr.bf16.mxu0 0
          %1732 = vmatpush1.bf16.msra.mxu0 0
          %1733 = vmatprep.subr.bf16.mxu0 0
          %1734 = vmatpush1.bf16.msra.mxu0 0
          %1735 = vmatprep.subr.bf16.mxu0 0
          %1736 = vmatpush1.bf16.msra.mxu0 0
          %1737 = vmatprep.mubr.bf16.mxu0 0
          %1738 = vmatmul.mubr.bf16.gmra.mrb[0].mxu0 %v1703
          %v1739 = vpop.f32.mrb[0].mxu0
          %v1740 = vadd.f32 0.0, %v1739
          %v1741 = vpop.f32.mrb[0].mxu0
          %v1742 = vpop.f32.mrb[0].mxu0
          %v1743 = vpop.f32.mrb[0].mxu0
          %1744 = vdwg.mxu0
          %v1745 = vadd.f32 %v1683, %v1740
          %s1746 = scalar_lea.vmem %s5, 64
          %v1747 = vld [vmem:[%s1746] sm:$0xf]
          %v1748 = vld [vmem:[%s1746 + $0x4] sm:$0xf]
          %v1749 = vld [vmem:[%s1746 + $0x8] sm:$0xf]
          %v1750 = vld [vmem:[%s1746 + $0xc] sm:$0xf]
          %v1751 = vrot.slane %v1497, 4
          %v1756 = vunpack.c.l.b16 %v1747
          %v1757 = vunpack.c.l.b16 %v1748
          %v1758 = vunpack.c.l.b16 %v1749
          %v1759 = vunpack.c.l.b16 %v1750
          %v1760 = vpack.c.b16 %v1757, %v1756
          %v1761 = vpack.c.b16 %v1759, %v1758
          %v1765 = vsel %vm1456, %v1751, 0
          %1767 = vmatprep.subr.bf16.mxu0 0
          %1768 = vmatpush1.bf16.msra.mxu0 %v1760
          %1769 = vmatprep.subr.bf16.mxu0 0
          %1770 = vmatpush1.bf16.msra.mxu0 %v1761
          %1771 = vmatprep.subr.bf16.mxu0 0
          %1772 = vmatpush1.bf16.msra.mxu0 0
          %1773 = vmatprep.subr.bf16.mxu0 0
          %1774 = vmatpush1.bf16.msra.mxu0 0
          %1775 = vmatprep.subr.bf16.mxu0 0
          %1776 = vmatpush1.bf16.msra.mxu0 0
          %1777 = vmatprep.subr.bf16.mxu0 0
          %1778 = vmatpush1.bf16.msra.mxu0 0
          %1779 = vmatprep.subr.bf16.mxu0 0
          %1780 = vmatpush1.bf16.msra.mxu0 0
          %1781 = vmatprep.subr.bf16.mxu0 0
          %1782 = vmatpush1.bf16.msra.mxu0 0
          %1783 = vmatprep.subr.bf16.mxu0 0
          %1784 = vmatpush1.bf16.msra.mxu0 0
          %1785 = vmatprep.subr.bf16.mxu0 0
          %1786 = vmatpush1.bf16.msra.mxu0 0
          %1787 = vmatprep.subr.bf16.mxu0 0
          %1788 = vmatpush1.bf16.msra.mxu0 0
          %1789 = vmatprep.subr.bf16.mxu0 0
          %1790 = vmatpush1.bf16.msra.mxu0 0
          %1791 = vmatprep.subr.bf16.mxu0 0
          %1792 = vmatpush1.bf16.msra.mxu0 0
          %1793 = vmatprep.subr.bf16.mxu0 0
          %1794 = vmatpush1.bf16.msra.mxu0 0
          %1795 = vmatprep.subr.bf16.mxu0 0
          %1796 = vmatpush1.bf16.msra.mxu0 0
          %1797 = vmatprep.subr.bf16.mxu0 0
          %1798 = vmatpush1.bf16.msra.mxu0 0
          %1799 = vmatprep.mubr.bf16.mxu0 0
          %1800 = vmatmul.mubr.bf16.gmra.mrb[0].mxu0 %v1765
          %v1801 = vpop.f32.mrb[0].mxu0
          %v1802 = vadd.f32 0.0, %v1801
          %v1803 = vpop.f32.mrb[0].mxu0
          %v1804 = vpop.f32.mrb[0].mxu0
          %v1805 = vpop.f32.mrb[0].mxu0
          %1806 = vdwg.mxu0
          %v1807 = vadd.f32 %v1745, %v1802
          %s1808 = scalar_lea.vmem %s5, 80
          %v1809 = vld [vmem:[%s1808] sm:$0xf]
          %v1810 = vld [vmem:[%s1808 + $0x4] sm:$0xf]
          %v1811 = vld [vmem:[%s1808 + $0x8] sm:$0xf]
          %v1812 = vld [vmem:[%s1808 + $0xc] sm:$0xf]
          %v1813 = vrot.slane %v1497, 5
          %v1818 = vunpack.c.l.b16 %v1809
          %v1819 = vunpack.c.l.b16 %v1810
          %v1820 = vunpack.c.l.b16 %v1811
          %v1821 = vunpack.c.l.b16 %v1812
          %v1822 = vpack.c.b16 %v1819, %v1818
          %v1823 = vpack.c.b16 %v1821, %v1820
          %v1827 = vsel %vm1456, %v1813, 0
          %1829 = vmatprep.subr.bf16.mxu0 0
          %1830 = vmatpush1.bf16.msra.mxu0 %v1822
          %1831 = vmatprep.subr.bf16.mxu0 0
          %1832 = vmatpush1.bf16.msra.mxu0 %v1823
          %1833 = vmatprep.subr.bf16.mxu0 0
          %1834 = vmatpush1.bf16.msra.mxu0 0
          %1835 = vmatprep.subr.bf16.mxu0 0
          %1836 = vmatpush1.bf16.msra.mxu0 0
          %1837 = vmatprep.subr.bf16.mxu0 0
          %1838 = vmatpush1.bf16.msra.mxu0 0
          %1839 = vmatprep.subr.bf16.mxu0 0
          %1840 = vmatpush1.bf16.msra.mxu0 0
          %1841 = vmatprep.subr.bf16.mxu0 0
          %1842 = vmatpush1.bf16.msra.mxu0 0
          %1843 = vmatprep.subr.bf16.mxu0 0
          %1844 = vmatpush1.bf16.msra.mxu0 0
          %1845 = vmatprep.subr.bf16.mxu0 0
          %1846 = vmatpush1.bf16.msra.mxu0 0
          %1847 = vmatprep.subr.bf16.mxu0 0
          %1848 = vmatpush1.bf16.msra.mxu0 0
          %1849 = vmatprep.subr.bf16.mxu0 0
          %1850 = vmatpush1.bf16.msra.mxu0 0
          %1851 = vmatprep.subr.bf16.mxu0 0
          %1852 = vmatpush1.bf16.msra.mxu0 0
          %1853 = vmatprep.subr.bf16.mxu0 0
          %1854 = vmatpush1.bf16.msra.mxu0 0
          %1855 = vmatprep.subr.bf16.mxu0 0
          %1856 = vmatpush1.bf16.msra.mxu0 0
          %1857 = vmatprep.subr.bf16.mxu0 0
          %1858 = vmatpush1.bf16.msra.mxu0 0
          %1859 = vmatprep.subr.bf16.mxu0 0
          %1860 = vmatpush1.bf16.msra.mxu0 0
          %1861 = vmatprep.mubr.bf16.mxu0 0
          %1862 = vmatmul.mubr.bf16.gmra.mrb[0].mxu0 %v1827
          %v1863 = vpop.f32.mrb[0].mxu0
          %v1864 = vadd.f32 0.0, %v1863
          %v1865 = vpop.f32.mrb[0].mxu0
          %v1866 = vpop.f32.mrb[0].mxu0
          %v1867 = vpop.f32.mrb[0].mxu0
          %1868 = vdwg.mxu0
          %v1869 = vadd.f32 %v1807, %v1864
          %s1870 = scalar_lea.vmem %s5, 96
          %v1871 = vld [vmem:[%s1870] sm:$0xf]
          %v1872 = vld [vmem:[%s1870 + $0x4] sm:$0xf]
          %v1873 = vld [vmem:[%s1870 + $0x8] sm:$0xf]
          %v1874 = vld [vmem:[%s1870 + $0xc] sm:$0xf]
          %v1875 = vrot.slane %v1497, 6
          %v1880 = vunpack.c.l.b16 %v1871
          %v1881 = vunpack.c.l.b16 %v1872
          %v1882 = vunpack.c.l.b16 %v1873
          %v1883 = vunpack.c.l.b16 %v1874
          %v1884 = vpack.c.b16 %v1881, %v1880
          %v1885 = vpack.c.b16 %v1883, %v1882
          %v1889 = vsel %vm1456, %v1875, 0
          %1891 = vmatprep.subr.bf16.mxu0 0
          %1892 = vmatpush1.bf16.msra.mxu0 %v1884
          %1893 = vmatprep.subr.bf16.mxu0 0
          %1894 = vmatpush1.bf16.msra.mxu0 %v1885
          %1895 = vmatprep.subr.bf16.mxu0 0
          %1896 = vmatpush1.bf16.msra.mxu0 0
          %1897 = vmatprep.subr.bf16.mxu0 0
          %1898 = vmatpush1.bf16.msra.mxu0 0
          %1899 = vmatprep.subr.bf16.mxu0 0
          %1900 = vmatpush1.bf16.msra.mxu0 0
          %1901 = vmatprep.subr.bf16.mxu0 0
          %1902 = vmatpush1.bf16.msra.mxu0 0
          %1903 = vmatprep.subr.bf16.mxu0 0
          %1904 = vmatpush1.bf16.msra.mxu0 0
          %1905 = vmatprep.subr.bf16.mxu0 0
          %1906 = vmatpush1.bf16.msra.mxu0 0
          %1907 = vmatprep.subr.bf16.mxu0 0
          %1908 = vmatpush1.bf16.msra.mxu0 0
          %1909 = vmatprep.subr.bf16.mxu0 0
          %1910 = vmatpush1.bf16.msra.mxu0 0
          %1911 = vmatprep.subr.bf16.mxu0 0
          %1912 = vmatpush1.bf16.msra.mxu0 0
          %1913 = vmatprep.subr.bf16.mxu0 0
          %1914 = vmatpush1.bf16.msra.mxu0 0
          %1915 = vmatprep.subr.bf16.mxu0 0
          %1916 = vmatpush1.bf16.msra.mxu0 0
          %1917 = vmatprep.subr.bf16.mxu0 0
          %1918 = vmatpush1.bf16.msra.mxu0 0
          %1919 = vmatprep.subr.bf16.mxu0 0
          %1920 = vmatpush1.bf16.msra.mxu0 0
          %1921 = vmatprep.subr.bf16.mxu0 0
          %1922 = vmatpush1.bf16.msra.mxu0 0
          %1923 = vmatprep.mubr.bf16.mxu0 0
          %1924 = vmatmul.mubr.bf16.gmra.mrb[0].mxu0 %v1889
          %v1925 = vpop.f32.mrb[0].mxu0
          %v1926 = vadd.f32 0.0, %v1925
          %v1927 = vpop.f32.mrb[0].mxu0
          %v1928 = vpop.f32.mrb[0].mxu0
          %v1929 = vpop.f32.mrb[0].mxu0
          %1930 = vdwg.mxu0
          %v1931 = vadd.f32 %v1869, %v1926
          %s1932 = scalar_lea.vmem %s5, 112
          %v1933 = vld [vmem:[%s1932] sm:$0xf]
          %v1934 = vld [vmem:[%s1932 + $0x4] sm:$0xf]
          %v1935 = vld [vmem:[%s1932 + $0x8] sm:$0xf]
          %v1936 = vld [vmem:[%s1932 + $0xc] sm:$0xf]
          %v1937 = vrot.slane %v1497, 7
          %v1942 = vunpack.c.l.b16 %v1933
          %v1943 = vunpack.c.l.b16 %v1934
          %v1944 = vunpack.c.l.b16 %v1935
          %v1945 = vunpack.c.l.b16 %v1936
          %v1946 = vpack.c.b16 %v1943, %v1942
          %v1947 = vpack.c.b16 %v1945, %v1944
          %v1951 = vsel %vm1456, %v1937, 0
          %1953 = vmatprep.subr.bf16.mxu0 0
          %1954 = vmatpush1.bf16.msra.mxu0 %v1946
          %1955 = vmatprep.subr.bf16.mxu0 0
          %1956 = vmatpush1.bf16.msra.mxu0 %v1947
          %1957 = vmatprep.subr.bf16.mxu0 0
          %1958 = vmatpush1.bf16.msra.mxu0 0
          %1959 = vmatprep.subr.bf16.mxu0 0
          %1960 = vmatpush1.bf16.msra.mxu0 0
          %1961 = vmatprep.subr.bf16.mxu0 0
          %1962 = vmatpush1.bf16.msra.mxu0 0
          %1963 = vmatprep.subr.bf16.mxu0 0
          %1964 = vmatpush1.bf16.msra.mxu0 0
          %1965 = vmatprep.subr.bf16.mxu0 0
          %1966 = vmatpush1.bf16.msra.mxu0 0
          %1967 = vmatprep.subr.bf16.mxu0 0
          %1968 = vmatpush1.bf16.msra.mxu0 0
          %1969 = vmatprep.subr.bf16.mxu0 0
          %1970 = vmatpush1.bf16.msra.mxu0 0
          %1971 = vmatprep.subr.bf16.mxu0 0
          %1972 = vmatpush1.bf16.msra.mxu0 0
          %1973 = vmatprep.subr.bf16.mxu0 0
          %1974 = vmatpush1.bf16.msra.mxu0 0
          %1975 = vmatprep.subr.bf16.mxu0 0
          %1976 = vmatpush1.bf16.msra.mxu0 0
          %1977 = vmatprep.subr.bf16.mxu0 0
          %1978 = vmatpush1.bf16.msra.mxu0 0
          %1979 = vmatprep.subr.bf16.mxu0 0
          %1980 = vmatpush1.bf16.msra.mxu0 0
          %1981 = vmatprep.subr.bf16.mxu0 0
          %1982 = vmatpush1.bf16.msra.mxu0 0
          %1983 = vmatprep.subr.bf16.mxu0 0
          %1984 = vmatpush1.bf16.msra.mxu0 0
          %1985 = vmatprep.mubr.bf16.mxu0 0
          %1986 = vmatmul.mubr.bf16.gmra.mrb[0].mxu0 %v1951
          %v1987 = vpop.f32.mrb[0].mxu0
          %v1988 = vadd.f32 0.0, %v1987
          %v1989 = vpop.f32.mrb[0].mxu0
          %v1990 = vpop.f32.mrb[0].mxu0
          %v1991 = vpop.f32.mrb[0].mxu0
          %1992 = vdwg.mxu0
          %v1993 = vadd.f32 %v1931, %v1988
          %s1994 = scalar_lea.vmem %s5, 128
          %v1995 = vld [vmem:[%s1994] sm:$0xf]
          %v1996 = vld [vmem:[%s1994 + $0x4] sm:$0xf]
          %v1997 = vld [vmem:[%s1994 + $0x8] sm:$0xf]
          %v1998 = vld [vmem:[%s1994 + $0xc] sm:$0xf]
          %v2003 = vunpack.c.l.b16 %v1995
          %v2004 = vunpack.c.l.b16 %v1996
          %v2005 = vunpack.c.l.b16 %v1997
          %v2006 = vunpack.c.l.b16 %v1998
          %v2007 = vpack.c.b16 %v2004, %v2003
          %v2008 = vpack.c.b16 %v2006, %v2005
          %v2012 = vsel %vm1456, %v1498, 0
          %2014 = vmatprep.subr.bf16.mxu0 0
          %2015 = vmatpush1.bf16.msra.mxu0 %v2007
          %2016 = vmatprep.subr.bf16.mxu0 0
          %2017 = vmatpush1.bf16.msra.mxu0 %v2008
          %2018 = vmatprep.subr.bf16.mxu0 0
          %2019 = vmatpush1.bf16.msra.mxu0 0
          %2020 = vmatprep.subr.bf16.mxu0 0
          %2021 = vmatpush1.bf16.msra.mxu0 0
          %2022 = vmatprep.subr.bf16.mxu0 0
          %2023 = vmatpush1.bf16.msra.mxu0 0
          %2024 = vmatprep.subr.bf16.mxu0 0
          %2025 = vmatpush1.bf16.msra.mxu0 0
          %2026 = vmatprep.subr.bf16.mxu0 0
          %2027 = vmatpush1.bf16.msra.mxu0 0
          %2028 = vmatprep.subr.bf16.mxu0 0
          %2029 = vmatpush1.bf16.msra.mxu0 0
          %2030 = vmatprep.subr.bf16.mxu0 0
          %2031 = vmatpush1.bf16.msra.mxu0 0
          %2032 = vmatprep.subr.bf16.mxu0 0
          %2033 = vmatpush1.bf16.msra.mxu0 0
          %2034 = vmatprep.subr.bf16.mxu0 0
          %2035 = vmatpush1.bf16.msra.mxu0 0
          %2036 = vmatprep.subr.bf16.mxu0 0
          %2037 = vmatpush1.bf16.msra.mxu0 0
          %2038 = vmatprep.subr.bf16.mxu0 0
          %2039 = vmatpush1.bf16.msra.mxu0 0
          %2040 = vmatprep.subr.bf16.mxu0 0
          %2041 = vmatpush1.bf16.msra.mxu0 0
          %2042 = vmatprep.subr.bf16.mxu0 0
          %2043 = vmatpush1.bf16.msra.mxu0 0
          %2044 = vmatprep.subr.bf16.mxu0 0
          %2045 = vmatpush1.bf16.msra.mxu0 0
          %2046 = vmatprep.mubr.bf16.mxu0 0
          %2047 = vmatmul.mubr.bf16.gmra.mrb[0].mxu0 %v2012
          %v2048 = vpop.f32.mrb[0].mxu0
          %v2049 = vadd.f32 0.0, %v2048
          %v2050 = vpop.f32.mrb[0].mxu0
          %v2051 = vpop.f32.mrb[0].mxu0
          %v2052 = vpop.f32.mrb[0].mxu0
          %2053 = vdwg.mxu0
          %v2054 = vadd.f32 %v1993, %v2049
          %s2055 = scalar_lea.vmem %s5, 144
          %v2056 = vld [vmem:[%s2055] sm:$0xf]
          %v2057 = vld [vmem:[%s2055 + $0x4] sm:$0xf]
          %v2058 = vld [vmem:[%s2055 + $0x8] sm:$0xf]
          %v2059 = vld [vmem:[%s2055 + $0xc] sm:$0xf]
          %v2061 = vrot.slane %v1498, 1
          %v2066 = vunpack.c.l.b16 %v2056
          %v2067 = vunpack.c.l.b16 %v2057
          %v2068 = vunpack.c.l.b16 %v2058
          %v2069 = vunpack.c.l.b16 %v2059
          %v2070 = vpack.c.b16 %v2067, %v2066
          %v2071 = vpack.c.b16 %v2069, %v2068
          %v2075 = vsel %vm1456, %v2061, 0
          %2077 = vmatprep.subr.bf16.mxu0 0
          %2078 = vmatpush1.bf16.msra.mxu0 %v2070
          %2079 = vmatprep.subr.bf16.mxu0 0
          %2080 = vmatpush1.bf16.msra.mxu0 %v2071
          %2081 = vmatprep.subr.bf16.mxu0 0
          %2082 = vmatpush1.bf16.msra.mxu0 0
          %2083 = vmatprep.subr.bf16.mxu0 0
          %2084 = vmatpush1.bf16.msra.mxu0 0
          %2085 = vmatprep.subr.bf16.mxu0 0
          %2086 = vmatpush1.bf16.msra.mxu0 0
          %2087 = vmatprep.subr.bf16.mxu0 0
          %2088 = vmatpush1.bf16.msra.mxu0 0
          %2089 = vmatprep.subr.bf16.mxu0 0
          %2090 = vmatpush1.bf16.msra.mxu0 0
          %2091 = vmatprep.subr.bf16.mxu0 0
          %2092 = vmatpush1.bf16.msra.mxu0 0
          %2093 = vmatprep.subr.bf16.mxu0 0
          %2094 = vmatpush1.bf16.msra.mxu0 0
          %2095 = vmatprep.subr.bf16.mxu0 0
          %2096 = vmatpush1.bf16.msra.mxu0 0
          %2097 = vmatprep.subr.bf16.mxu0 0
          %2098 = vmatpush1.bf16.msra.mxu0 0
          %2099 = vmatprep.subr.bf16.mxu0 0
          %2100 = vmatpush1.bf16.msra.mxu0 0
          %2101 = vmatprep.subr.bf16.mxu0 0
          %2102 = vmatpush1.bf16.msra.mxu0 0
          %2103 = vmatprep.subr.bf16.mxu0 0
          %2104 = vmatpush1.bf16.msra.mxu0 0
          %2105 = vmatprep.subr.bf16.mxu0 0
          %2106 = vmatpush1.bf16.msra.mxu0 0
          %2107 = vmatprep.subr.bf16.mxu0 0
          %2108 = vmatpush1.bf16.msra.mxu0 0
          %2109 = vmatprep.mubr.bf16.mxu0 0
          %2110 = vmatmul.mubr.bf16.gmra.mrb[0].mxu0 %v2075
          %v2111 = vpop.f32.mrb[0].mxu0
          %v2112 = vadd.f32 0.0, %v2111
          %v2113 = vpop.f32.mrb[0].mxu0
          %v2114 = vpop.f32.mrb[0].mxu0
          %v2115 = vpop.f32.mrb[0].mxu0
          %2116 = vdwg.mxu0
          %v2117 = vadd.f32 %v2054, %v2112
          %s2118 = scalar_lea.vmem %s5, 160
          %v2119 = vld [vmem:[%s2118] sm:$0xf]
          %v2120 = vld [vmem:[%s2118 + $0x4] sm:$0xf]
          %v2121 = vld [vmem:[%s2118 + $0x8] sm:$0xf]
          %v2122 = vld [vmem:[%s2118 + $0xc] sm:$0xf]
          %v2123 = vrot.slane %v1498, 2
          %v2128 = vunpack.c.l.b16 %v2119
          %v2129 = vunpack.c.l.b16 %v2120
          %v2130 = vunpack.c.l.b16 %v2121
          %v2131 = vunpack.c.l.b16 %v2122
          %v2132 = vpack.c.b16 %v2129, %v2128
          %v2133 = vpack.c.b16 %v2131, %v2130
          %v2137 = vsel %vm1456, %v2123, 0
          %2139 = vmatprep.subr.bf16.mxu0 0
          %2140 = vmatpush1.bf16.msra.mxu0 %v2132
          %2141 = vmatprep.subr.bf16.mxu0 0
          %2142 = vmatpush1.bf16.msra.mxu0 %v2133
          %2143 = vmatprep.subr.bf16.mxu0 0
          %2144 = vmatpush1.bf16.msra.mxu0 0
          %2145 = vmatprep.subr.bf16.mxu0 0
          %2146 = vmatpush1.bf16.msra.mxu0 0
          %2147 = vmatprep.subr.bf16.mxu0 0
          %2148 = vmatpush1.bf16.msra.mxu0 0
          %2149 = vmatprep.subr.bf16.mxu0 0
          %2150 = vmatpush1.bf16.msra.mxu0 0
          %2151 = vmatprep.subr.bf16.mxu0 0
          %2152 = vmatpush1.bf16.msra.mxu0 0
          %2153 = vmatprep.subr.bf16.mxu0 0
          %2154 = vmatpush1.bf16.msra.mxu0 0
          %2155 = vmatprep.subr.bf16.mxu0 0
          %2156 = vmatpush1.bf16.msra.mxu0 0
          %2157 = vmatprep.subr.bf16.mxu0 0
          %2158 = vmatpush1.bf16.msra.mxu0 0
          %2159 = vmatprep.subr.bf16.mxu0 0
          %2160 = vmatpush1.bf16.msra.mxu0 0
          %2161 = vmatprep.subr.bf16.mxu0 0
          %2162 = vmatpush1.bf16.msra.mxu0 0
          %2163 = vmatprep.subr.bf16.mxu0 0
          %2164 = vmatpush1.bf16.msra.mxu0 0
          %2165 = vmatprep.subr.bf16.mxu0 0
          %2166 = vmatpush1.bf16.msra.mxu0 0
          %2167 = vmatprep.subr.bf16.mxu0 0
          %2168 = vmatpush1.bf16.msra.mxu0 0
          %2169 = vmatprep.subr.bf16.mxu0 0
          %2170 = vmatpush1.bf16.msra.mxu0 0
          %2171 = vmatprep.mubr.bf16.mxu0 0
          %2172 = vmatmul.mubr.bf16.gmra.mrb[0].mxu0 %v2137
          %v2173 = vpop.f32.mrb[0].mxu0
          %v2174 = vadd.f32 0.0, %v2173
          %v2175 = vpop.f32.mrb[0].mxu0
          %v2176 = vpop.f32.mrb[0].mxu0
          %v2177 = vpop.f32.mrb[0].mxu0
          %2178 = vdwg.mxu0
          %v2179 = vadd.f32 %v2117, %v2174
          %s2180 = scalar_lea.vmem %s5, 176
          %v2181 = vld [vmem:[%s2180] sm:$0xf]
          %v2182 = vld [vmem:[%s2180 + $0x4] sm:$0xf]
          %v2183 = vld [vmem:[%s2180 + $0x8] sm:$0xf]
          %v2184 = vld [vmem:[%s2180 + $0xc] sm:$0xf]
          %v2185 = vrot.slane %v1498, 3
          %v2190 = vunpack.c.l.b16 %v2181
          %v2191 = vunpack.c.l.b16 %v2182
          %v2192 = vunpack.c.l.b16 %v2183
          %v2193 = vunpack.c.l.b16 %v2184
          %v2194 = vpack.c.b16 %v2191, %v2190
          %v2195 = vpack.c.b16 %v2193, %v2192
          %v2199 = vsel %vm1456, %v2185, 0
          %2201 = vmatprep.subr.bf16.mxu0 0
          %2202 = vmatpush1.bf16.msra.mxu0 %v2194
          %2203 = vmatprep.subr.bf16.mxu0 0
          %2204 = vmatpush1.bf16.msra.mxu0 %v2195
          %2205 = vmatprep.subr.bf16.mxu0 0
          %2206 = vmatpush1.bf16.msra.mxu0 0
          %2207 = vmatprep.subr.bf16.mxu0 0
          %2208 = vmatpush1.bf16.msra.mxu0 0
          %2209 = vmatprep.subr.bf16.mxu0 0
          %2210 = vmatpush1.bf16.msra.mxu0 0
          %2211 = vmatprep.subr.bf16.mxu0 0
          %2212 = vmatpush1.bf16.msra.mxu0 0
          %2213 = vmatprep.subr.bf16.mxu0 0
          %2214 = vmatpush1.bf16.msra.mxu0 0
          %2215 = vmatprep.subr.bf16.mxu0 0
          %2216 = vmatpush1.bf16.msra.mxu0 0
          %2217 = vmatprep.subr.bf16.mxu0 0
          %2218 = vmatpush1.bf16.msra.mxu0 0
          %2219 = vmatprep.subr.bf16.mxu0 0
          %2220 = vmatpush1.bf16.msra.mxu0 0
          %2221 = vmatprep.subr.bf16.mxu0 0
          %2222 = vmatpush1.bf16.msra.mxu0 0
          %2223 = vmatprep.subr.bf16.mxu0 0
          %2224 = vmatpush1.bf16.msra.mxu0 0
          %2225 = vmatprep.subr.bf16.mxu0 0
          %2226 = vmatpush1.bf16.msra.mxu0 0
          %2227 = vmatprep.subr.bf16.mxu0 0
          %2228 = vmatpush1.bf16.msra.mxu0 0
          %2229 = vmatprep.subr.bf16.mxu0 0
          %2230 = vmatpush1.bf16.msra.mxu0 0
          %2231 = vmatprep.subr.bf16.mxu0 0
          %2232 = vmatpush1.bf16.msra.mxu0 0
          %2233 = vmatprep.mubr.bf16.mxu0 0
          %2234 = vmatmul.mubr.bf16.gmra.mrb[0].mxu0 %v2199
          %v2235 = vpop.f32.mrb[0].mxu0
          %v2236 = vadd.f32 0.0, %v2235
          %v2237 = vpop.f32.mrb[0].mxu0
          %v2238 = vpop.f32.mrb[0].mxu0
          %v2239 = vpop.f32.mrb[0].mxu0
          %2240 = vdwg.mxu0
          %v2241 = vadd.f32 %v2179, %v2236
          %s2242 = scalar_lea.vmem %s5, 192
          %v2243 = vld [vmem:[%s2242] sm:$0xf]
          %v2244 = vld [vmem:[%s2242 + $0x4] sm:$0xf]
          %v2245 = vld [vmem:[%s2242 + $0x8] sm:$0xf]
          %v2246 = vld [vmem:[%s2242 + $0xc] sm:$0xf]
          %v2247 = vrot.slane %v1498, 4
          %v2252 = vunpack.c.l.b16 %v2243
          %v2253 = vunpack.c.l.b16 %v2244
          %v2254 = vunpack.c.l.b16 %v2245
          %v2255 = vunpack.c.l.b16 %v2246
          %v2256 = vpack.c.b16 %v2253, %v2252
          %v2257 = vpack.c.b16 %v2255, %v2254
          %v2261 = vsel %vm1456, %v2247, 0
          %2263 = vmatprep.subr.bf16.mxu0 0
          %2264 = vmatpush1.bf16.msra.mxu0 %v2256
          %2265 = vmatprep.subr.bf16.mxu0 0
          %2266 = vmatpush1.bf16.msra.mxu0 %v2257
          %2267 = vmatprep.subr.bf16.mxu0 0
          %2268 = vmatpush1.bf16.msra.mxu0 0
          %2269 = vmatprep.subr.bf16.mxu0 0
          %2270 = vmatpush1.bf16.msra.mxu0 0
          %2271 = vmatprep.subr.bf16.mxu0 0
          %2272 = vmatpush1.bf16.msra.mxu0 0
          %2273 = vmatprep.subr.bf16.mxu0 0
          %2274 = vmatpush1.bf16.msra.mxu0 0
          %2275 = vmatprep.subr.bf16.mxu0 0
          %2276 = vmatpush1.bf16.msra.mxu0 0
          %2277 = vmatprep.subr.bf16.mxu0 0
          %2278 = vmatpush1.bf16.msra.mxu0 0
          %2279 = vmatprep.subr.bf16.mxu0 0
          %2280 = vmatpush1.bf16.msra.mxu0 0
          %2281 = vmatprep.subr.bf16.mxu0 0
          %2282 = vmatpush1.bf16.msra.mxu0 0
          %2283 = vmatprep.subr.bf16.mxu0 0
          %2284 = vmatpush1.bf16.msra.mxu0 0
          %2285 = vmatprep.subr.bf16.mxu0 0
          %2286 = vmatpush1.bf16.msra.mxu0 0
          %2287 = vmatprep.subr.bf16.mxu0 0
          %2288 = vmatpush1.bf16.msra.mxu0 0
          %2289 = vmatprep.subr.bf16.mxu0 0
          %2290 = vmatpush1.bf16.msra.mxu0 0
          %2291 = vmatprep.subr.bf16.mxu0 0
          %2292 = vmatpush1.bf16.msra.mxu0 0
          %2293 = vmatprep.subr.bf16.mxu0 0
          %2294 = vmatpush1.bf16.msra.mxu0 0
          %2295 = vmatprep.mubr.bf16.mxu0 0
          %2296 = vmatmul.mubr.bf16.gmra.mrb[0].mxu0 %v2261
          %v2297 = vpop.f32.mrb[0].mxu0
          %v2298 = vadd.f32 0.0, %v2297
          %v2299 = vpop.f32.mrb[0].mxu0
          %v2300 = vpop.f32.mrb[0].mxu0
          %v2301 = vpop.f32.mrb[0].mxu0
          %2302 = vdwg.mxu0
          %v2303 = vadd.f32 %v2241, %v2298
          %s2304 = scalar_lea.vmem %s5, 208
          %v2305 = vld [vmem:[%s2304] sm:$0xf]
          %v2306 = vld [vmem:[%s2304 + $0x4] sm:$0xf]
          %v2307 = vld [vmem:[%s2304 + $0x8] sm:$0xf]
          %v2308 = vld [vmem:[%s2304 + $0xc] sm:$0xf]
          %v2309 = vrot.slane %v1498, 5
          %v2314 = vunpack.c.l.b16 %v2305
          %v2315 = vunpack.c.l.b16 %v2306
          %v2316 = vunpack.c.l.b16 %v2307
          %v2317 = vunpack.c.l.b16 %v2308
          %v2318 = vpack.c.b16 %v2315, %v2314
          %v2319 = vpack.c.b16 %v2317, %v2316
          %v2323 = vsel %vm1456, %v2309, 0
          %2325 = vmatprep.subr.bf16.mxu0 0
          %2326 = vmatpush1.bf16.msra.mxu0 %v2318
          %2327 = vmatprep.subr.bf16.mxu0 0
          %2328 = vmatpush1.bf16.msra.mxu0 %v2319
          %2329 = vmatprep.subr.bf16.mxu0 0
          %2330 = vmatpush1.bf16.msra.mxu0 0
          %2331 = vmatprep.subr.bf16.mxu0 0
          %2332 = vmatpush1.bf16.msra.mxu0 0
          %2333 = vmatprep.subr.bf16.mxu0 0
          %2334 = vmatpush1.bf16.msra.mxu0 0
          %2335 = vmatprep.subr.bf16.mxu0 0
          %2336 = vmatpush1.bf16.msra.mxu0 0
          %2337 = vmatprep.subr.bf16.mxu0 0
          %2338 = vmatpush1.bf16.msra.mxu0 0
          %2339 = vmatprep.subr.bf16.mxu0 0
          %2340 = vmatpush1.bf16.msra.mxu0 0
          %2341 = vmatprep.subr.bf16.mxu0 0
          %2342 = vmatpush1.bf16.msra.mxu0 0
          %2343 = vmatprep.subr.bf16.mxu0 0
          %2344 = vmatpush1.bf16.msra.mxu0 0
          %2345 = vmatprep.subr.bf16.mxu0 0
          %2346 = vmatpush1.bf16.msra.mxu0 0
          %2347 = vmatprep.subr.bf16.mxu0 0
          %2348 = vmatpush1.bf16.msra.mxu0 0
          %2349 = vmatprep.subr.bf16.mxu0 0
          %2350 = vmatpush1.bf16.msra.mxu0 0
          %2351 = vmatprep.subr.bf16.mxu0 0
          %2352 = vmatpush1.bf16.msra.mxu0 0
          %2353 = vmatprep.subr.bf16.mxu0 0
          %2354 = vmatpush1.bf16.msra.mxu0 0
          %2355 = vmatprep.subr.bf16.mxu0 0
          %2356 = vmatpush1.bf16.msra.mxu0 0
          %2357 = vmatprep.mubr.bf16.mxu0 0
          %2358 = vmatmul.mubr.bf16.gmra.mrb[0].mxu0 %v2323
          %v2359 = vpop.f32.mrb[0].mxu0
          %v2360 = vadd.f32 0.0, %v2359
          %v2361 = vpop.f32.mrb[0].mxu0
          %v2362 = vpop.f32.mrb[0].mxu0
          %v2363 = vpop.f32.mrb[0].mxu0
          %2364 = vdwg.mxu0
          %v2365 = vadd.f32 %v2303, %v2360
          %s2366 = scalar_lea.vmem %s5, 224
          %v2367 = vld [vmem:[%s2366] sm:$0xf]
          %v2368 = vld [vmem:[%s2366 + $0x4] sm:$0xf]
          %v2369 = vld [vmem:[%s2366 + $0x8] sm:$0xf]
          %v2370 = vld [vmem:[%s2366 + $0xc] sm:$0xf]
          %v2371 = vrot.slane %v1498, 6
          %v2376 = vunpack.c.l.b16 %v2367
          %v2377 = vunpack.c.l.b16 %v2368
          %v2378 = vunpack.c.l.b16 %v2369
          %v2379 = vunpack.c.l.b16 %v2370
          %v2380 = vpack.c.b16 %v2377, %v2376
          %v2381 = vpack.c.b16 %v2379, %v2378
          %v2385 = vsel %vm1456, %v2371, 0
          %2387 = vmatprep.subr.bf16.mxu0 0
          %2388 = vmatpush1.bf16.msra.mxu0 %v2380
          %2389 = vmatprep.subr.bf16.mxu0 0
          %2390 = vmatpush1.bf16.msra.mxu0 %v2381
          %2391 = vmatprep.subr.bf16.mxu0 0
          %2392 = vmatpush1.bf16.msra.mxu0 0
          %2393 = vmatprep.subr.bf16.mxu0 0
          %2394 = vmatpush1.bf16.msra.mxu0 0
          %2395 = vmatprep.subr.bf16.mxu0 0
          %2396 = vmatpush1.bf16.msra.mxu0 0
          %2397 = vmatprep.subr.bf16.mxu0 0
          %2398 = vmatpush1.bf16.msra.mxu0 0
          %2399 = vmatprep.subr.bf16.mxu0 0
          %2400 = vmatpush1.bf16.msra.mxu0 0
          %2401 = vmatprep.subr.bf16.mxu0 0
          %2402 = vmatpush1.bf16.msra.mxu0 0
          %2403 = vmatprep.subr.bf16.mxu0 0
          %2404 = vmatpush1.bf16.msra.mxu0 0
          %2405 = vmatprep.subr.bf16.mxu0 0
          %2406 = vmatpush1.bf16.msra.mxu0 0
          %2407 = vmatprep.subr.bf16.mxu0 0
          %2408 = vmatpush1.bf16.msra.mxu0 0
          %2409 = vmatprep.subr.bf16.mxu0 0
          %2410 = vmatpush1.bf16.msra.mxu0 0
          %2411 = vmatprep.subr.bf16.mxu0 0
          %2412 = vmatpush1.bf16.msra.mxu0 0
          %2413 = vmatprep.subr.bf16.mxu0 0
          %2414 = vmatpush1.bf16.msra.mxu0 0
          %2415 = vmatprep.subr.bf16.mxu0 0
          %2416 = vmatpush1.bf16.msra.mxu0 0
          %2417 = vmatprep.subr.bf16.mxu0 0
          %2418 = vmatpush1.bf16.msra.mxu0 0
          %2419 = vmatprep.mubr.bf16.mxu0 0
          %2420 = vmatmul.mubr.bf16.gmra.mrb[0].mxu0 %v2385
          %v2421 = vpop.f32.mrb[0].mxu0
          %v2422 = vadd.f32 0.0, %v2421
          %v2423 = vpop.f32.mrb[0].mxu0
          %v2424 = vpop.f32.mrb[0].mxu0
          %v2425 = vpop.f32.mrb[0].mxu0
          %2426 = vdwg.mxu0
          %v2427 = vadd.f32 %v2365, %v2422
          %s2428 = scalar_lea.vmem %s5, 240
          %v2429 = vld [vmem:[%s2428] sm:$0xf]
          %v2430 = vld [vmem:[%s2428 + $0x4] sm:$0xf]
          %v2431 = vld [vmem:[%s2428 + $0x8] sm:$0xf]
          %v2432 = vld [vmem:[%s2428 + $0xc] sm:$0xf]
          %v2433 = vrot.slane %v1498, 7
          %v2438 = vunpack.c.l.b16 %v2429
          %v2439 = vunpack.c.l.b16 %v2430
          %v2440 = vunpack.c.l.b16 %v2431
          %v2441 = vunpack.c.l.b16 %v2432
          %v2442 = vpack.c.b16 %v2439, %v2438
          %v2443 = vpack.c.b16 %v2441, %v2440
          %v2447 = vsel %vm1456, %v2433, 0
          %2449 = vmatprep.subr.bf16.mxu0 0
          %2450 = vmatpush1.bf16.msra.mxu0 %v2442
          %2451 = vmatprep.subr.bf16.mxu0 0
          %2452 = vmatpush1.bf16.msra.mxu0 %v2443
          %2453 = vmatprep.subr.bf16.mxu0 0
          %2454 = vmatpush1.bf16.msra.mxu0 0
          %2455 = vmatprep.subr.bf16.mxu0 0
          %2456 = vmatpush1.bf16.msra.mxu0 0
          %2457 = vmatprep.subr.bf16.mxu0 0
          %2458 = vmatpush1.bf16.msra.mxu0 0
          %2459 = vmatprep.subr.bf16.mxu0 0
          %2460 = vmatpush1.bf16.msra.mxu0 0
          %2461 = vmatprep.subr.bf16.mxu0 0
          %2462 = vmatpush1.bf16.msra.mxu0 0
          %2463 = vmatprep.subr.bf16.mxu0 0
          %2464 = vmatpush1.bf16.msra.mxu0 0
          %2465 = vmatprep.subr.bf16.mxu0 0
          %2466 = vmatpush1.bf16.msra.mxu0 0
          %2467 = vmatprep.subr.bf16.mxu0 0
          %2468 = vmatpush1.bf16.msra.mxu0 0
          %2469 = vmatprep.subr.bf16.mxu0 0
          %2470 = vmatpush1.bf16.msra.mxu0 0
          %2471 = vmatprep.subr.bf16.mxu0 0
          %2472 = vmatpush1.bf16.msra.mxu0 0
          %2473 = vmatprep.subr.bf16.mxu0 0
          %2474 = vmatpush1.bf16.msra.mxu0 0
          %2475 = vmatprep.subr.bf16.mxu0 0
          %2476 = vmatpush1.bf16.msra.mxu0 0
          %2477 = vmatprep.subr.bf16.mxu0 0
          %2478 = vmatpush1.bf16.msra.mxu0 0
          %2479 = vmatprep.subr.bf16.mxu0 0
          %2480 = vmatpush1.bf16.msra.mxu0 0
          %2481 = vmatprep.mubr.bf16.mxu0 0
          %2482 = vmatmul.mubr.bf16.gmra.mrb[0].mxu0 %v2447
          %v2483 = vpop.f32.mrb[0].mxu0
          %v2484 = vadd.f32 0.0, %v2483
          %v2485 = vpop.f32.mrb[0].mxu0
          %v2486 = vpop.f32.mrb[0].mxu0
          %v2487 = vpop.f32.mrb[0].mxu0
          %2488 = vdwg.mxu0
          %v2489 = vadd.f32 %v2427, %v2484
          %s2490 = scalar_lea.vmem %s5, 256
          %v2491 = vld [vmem:[%s2490] sm:$0xf]
          %v2492 = vld [vmem:[%s2490 + $0x4] sm:$0xf]
          %v2493 = vld [vmem:[%s2490 + $0x8] sm:$0xf]
          %v2494 = vld [vmem:[%s2490 + $0xc] sm:$0xf]
          %v2499 = vunpack.c.l.b16 %v2491
          %v2500 = vunpack.c.l.b16 %v2492
          %v2501 = vunpack.c.l.b16 %v2493
          %v2502 = vunpack.c.l.b16 %v2494
          %v2503 = vpack.c.b16 %v2500, %v2499
          %v2504 = vpack.c.b16 %v2502, %v2501
          %v2508 = vsel %vm1456, %v1499, 0
          %2510 = vmatprep.subr.bf16.mxu0 0
          %2511 = vmatpush1.bf16.msra.mxu0 %v2503
          %2512 = vmatprep.subr.bf16.mxu0 0
          %2513 = vmatpush1.bf16.msra.mxu0 %v2504
          %2514 = vmatprep.subr.bf16.mxu0 0
          %2515 = vmatpush1.bf16.msra.mxu0 0
          %2516 = vmatprep.subr.bf16.mxu0 0
          %2517 = vmatpush1.bf16.msra.mxu0 0
          %2518 = vmatprep.subr.bf16.mxu0 0
          %2519 = vmatpush1.bf16.msra.mxu0 0
          %2520 = vmatprep.subr.bf16.mxu0 0
          %2521 = vmatpush1.bf16.msra.mxu0 0
          %2522 = vmatprep.subr.bf16.mxu0 0
          %2523 = vmatpush1.bf16.msra.mxu0 0
          %2524 = vmatprep.subr.bf16.mxu0 0
          %2525 = vmatpush1.bf16.msra.mxu0 0
          %2526 = vmatprep.subr.bf16.mxu0 0
          %2527 = vmatpush1.bf16.msra.mxu0 0
          %2528 = vmatprep.subr.bf16.mxu0 0
          %2529 = vmatpush1.bf16.msra.mxu0 0
          %2530 = vmatprep.subr.bf16.mxu0 0
          %2531 = vmatpush1.bf16.msra.mxu0 0
          %2532 = vmatprep.subr.bf16.mxu0 0
          %2533 = vmatpush1.bf16.msra.mxu0 0
          %2534 = vmatprep.subr.bf16.mxu0 0
          %2535 = vmatpush1.bf16.msra.mxu0 0
          %2536 = vmatprep.subr.bf16.mxu0 0
          %2537 = vmatpush1.bf16.msra.mxu0 0
          %2538 = vmatprep.subr.bf16.mxu0 0
          %2539 = vmatpush1.bf16.msra.mxu0 0
          %2540 = vmatprep.subr.bf16.mxu0 0
          %2541 = vmatpush1.bf16.msra.mxu0 0
          %2542 = vmatprep.mubr.bf16.mxu0 0
          %2543 = vmatmul.mubr.bf16.gmra.mrb[0].mxu0 %v2508
          %v2544 = vpop.f32.mrb[0].mxu0
          %v2545 = vadd.f32 0.0, %v2544
          %v2546 = vpop.f32.mrb[0].mxu0
          %v2547 = vpop.f32.mrb[0].mxu0
          %v2548 = vpop.f32.mrb[0].mxu0
          %2549 = vdwg.mxu0
          %v2550 = vadd.f32 %v2489, %v2545
          %s2551 = scalar_lea.vmem %s5, 272
          %v2552 = vld [vmem:[%s2551] sm:$0xf]
          %v2553 = vld [vmem:[%s2551 + $0x4] sm:$0xf]
          %v2554 = vld [vmem:[%s2551 + $0x8] sm:$0xf]
          %v2555 = vld [vmem:[%s2551 + $0xc] sm:$0xf]
          %v2557 = vrot.slane %v1499, 1
          %v2562 = vunpack.c.l.b16 %v2552
          %v2563 = vunpack.c.l.b16 %v2553
          %v2564 = vunpack.c.l.b16 %v2554
          %v2565 = vunpack.c.l.b16 %v2555
          %v2566 = vpack.c.b16 %v2563, %v2562
          %v2567 = vpack.c.b16 %v2565, %v2564
          %v2571 = vsel %vm1456, %v2557, 0
          %2573 = vmatprep.subr.bf16.mxu0 0
          %2574 = vmatpush1.bf16.msra.mxu0 %v2566
          %2575 = vmatprep.subr.bf16.mxu0 0
          %2576 = vmatpush1.bf16.msra.mxu0 %v2567
          %2577 = vmatprep.subr.bf16.mxu0 0
          %2578 = vmatpush1.bf16.msra.mxu0 0
          %2579 = vmatprep.subr.bf16.mxu0 0
          %2580 = vmatpush1.bf16.msra.mxu0 0
          %2581 = vmatprep.subr.bf16.mxu0 0
          %2582 = vmatpush1.bf16.msra.mxu0 0
          %2583 = vmatprep.subr.bf16.mxu0 0
          %2584 = vmatpush1.bf16.msra.mxu0 0
          %2585 = vmatprep.subr.bf16.mxu0 0
          %2586 = vmatpush1.bf16.msra.mxu0 0
          %2587 = vmatprep.subr.bf16.mxu0 0
          %2588 = vmatpush1.bf16.msra.mxu0 0
          %2589 = vmatprep.subr.bf16.mxu0 0
          %2590 = vmatpush1.bf16.msra.mxu0 0
          %2591 = vmatprep.subr.bf16.mxu0 0
          %2592 = vmatpush1.bf16.msra.mxu0 0
          %2593 = vmatprep.subr.bf16.mxu0 0
          %2594 = vmatpush1.bf16.msra.mxu0 0
          %2595 = vmatprep.subr.bf16.mxu0 0
          %2596 = vmatpush1.bf16.msra.mxu0 0
          %2597 = vmatprep.subr.bf16.mxu0 0
          %2598 = vmatpush1.bf16.msra.mxu0 0
          %2599 = vmatprep.subr.bf16.mxu0 0
          %2600 = vmatpush1.bf16.msra.mxu0 0
          %2601 = vmatprep.subr.bf16.mxu0 0
          %2602 = vmatpush1.bf16.msra.mxu0 0
          %2603 = vmatprep.subr.bf16.mxu0 0
          %2604 = vmatpush1.bf16.msra.mxu0 0
          %2605 = vmatprep.mubr.bf16.mxu0 0
          %2606 = vmatmul.mubr.bf16.gmra.mrb[0].mxu0 %v2571
          %v2607 = vpop.f32.mrb[0].mxu0
          %v2608 = vadd.f32 0.0, %v2607
          %v2609 = vpop.f32.mrb[0].mxu0
          %v2610 = vpop.f32.mrb[0].mxu0
          %v2611 = vpop.f32.mrb[0].mxu0
          %2612 = vdwg.mxu0
          %v2613 = vadd.f32 %v2550, %v2608
          %s2614 = scalar_lea.vmem %s5, 288
          %v2615 = vld [vmem:[%s2614] sm:$0xf]
          %v2616 = vld [vmem:[%s2614 + $0x4] sm:$0xf]
          %v2617 = vld [vmem:[%s2614 + $0x8] sm:$0xf]
          %v2618 = vld [vmem:[%s2614 + $0xc] sm:$0xf]
          %v2619 = vrot.slane %v1499, 2
          %v2624 = vunpack.c.l.b16 %v2615
          %v2625 = vunpack.c.l.b16 %v2616
          %v2626 = vunpack.c.l.b16 %v2617
          %v2627 = vunpack.c.l.b16 %v2618
          %v2628 = vpack.c.b16 %v2625, %v2624
          %v2629 = vpack.c.b16 %v2627, %v2626
          %v2633 = vsel %vm1456, %v2619, 0
          %2635 = vmatprep.subr.bf16.mxu0 0
          %2636 = vmatpush1.bf16.msra.mxu0 %v2628
          %2637 = vmatprep.subr.bf16.mxu0 0
          %2638 = vmatpush1.bf16.msra.mxu0 %v2629
          %2639 = vmatprep.subr.bf16.mxu0 0
          %2640 = vmatpush1.bf16.msra.mxu0 0
          %2641 = vmatprep.subr.bf16.mxu0 0
          %2642 = vmatpush1.bf16.msra.mxu0 0
          %2643 = vmatprep.subr.bf16.mxu0 0
          %2644 = vmatpush1.bf16.msra.mxu0 0
          %2645 = vmatprep.subr.bf16.mxu0 0
          %2646 = vmatpush1.bf16.msra.mxu0 0
          %2647 = vmatprep.subr.bf16.mxu0 0
          %2648 = vmatpush1.bf16.msra.mxu0 0
          %2649 = vmatprep.subr.bf16.mxu0 0
          %2650 = vmatpush1.bf16.msra.mxu0 0
          %2651 = vmatprep.subr.bf16.mxu0 0
          %2652 = vmatpush1.bf16.msra.mxu0 0
          %2653 = vmatprep.subr.bf16.mxu0 0
          %2654 = vmatpush1.bf16.msra.mxu0 0
          %2655 = vmatprep.subr.bf16.mxu0 0
          %2656 = vmatpush1.bf16.msra.mxu0 0
          %2657 = vmatprep.subr.bf16.mxu0 0
          %2658 = vmatpush1.bf16.msra.mxu0 0
          %2659 = vmatprep.subr.bf16.mxu0 0
          %2660 = vmatpush1.bf16.msra.mxu0 0
          %2661 = vmatprep.subr.bf16.mxu0 0
          %2662 = vmatpush1.bf16.msra.mxu0 0
          %2663 = vmatprep.subr.bf16.mxu0 0
          %2664 = vmatpush1.bf16.msra.mxu0 0
          %2665 = vmatprep.subr.bf16.mxu0 0
          %2666 = vmatpush1.bf16.msra.mxu0 0
          %2667 = vmatprep.mubr.bf16.mxu0 0
          %2668 = vmatmul.mubr.bf16.gmra.mrb[0].mxu0 %v2633
          %v2669 = vpop.f32.mrb[0].mxu0
          %v2670 = vadd.f32 0.0, %v2669
          %v2671 = vpop.f32.mrb[0].mxu0
          %v2672 = vpop.f32.mrb[0].mxu0
          %v2673 = vpop.f32.mrb[0].mxu0
          %2674 = vdwg.mxu0
          %v2675 = vadd.f32 %v2613, %v2670
          %s2676 = scalar_lea.vmem %s5, 304
          %v2677 = vld [vmem:[%s2676] sm:$0xf]
          %v2678 = vld [vmem:[%s2676 + $0x4] sm:$0xf]
          %v2679 = vld [vmem:[%s2676 + $0x8] sm:$0xf]
          %v2680 = vld [vmem:[%s2676 + $0xc] sm:$0xf]
          %v2681 = vrot.slane %v1499, 3
          %v2686 = vunpack.c.l.b16 %v2677
          %v2687 = vunpack.c.l.b16 %v2678
          %v2688 = vunpack.c.l.b16 %v2679
          %v2689 = vunpack.c.l.b16 %v2680
          %v2690 = vpack.c.b16 %v2687, %v2686
          %v2691 = vpack.c.b16 %v2689, %v2688
          %v2695 = vsel %vm1456, %v2681, 0
          %2697 = vmatprep.subr.bf16.mxu0 0
          %2698 = vmatpush1.bf16.msra.mxu0 %v2690
          %2699 = vmatprep.subr.bf16.mxu0 0
          %2700 = vmatpush1.bf16.msra.mxu0 %v2691
          %2701 = vmatprep.subr.bf16.mxu0 0
          %2702 = vmatpush1.bf16.msra.mxu0 0
          %2703 = vmatprep.subr.bf16.mxu0 0
          %2704 = vmatpush1.bf16.msra.mxu0 0
          %2705 = vmatprep.subr.bf16.mxu0 0
          %2706 = vmatpush1.bf16.msra.mxu0 0
          %2707 = vmatprep.subr.bf16.mxu0 0
          %2708 = vmatpush1.bf16.msra.mxu0 0
          %2709 = vmatprep.subr.bf16.mxu0 0
          %2710 = vmatpush1.bf16.msra.mxu0 0
          %2711 = vmatprep.subr.bf16.mxu0 0
          %2712 = vmatpush1.bf16.msra.mxu0 0
          %2713 = vmatprep.subr.bf16.mxu0 0
          %2714 = vmatpush1.bf16.msra.mxu0 0
          %2715 = vmatprep.subr.bf16.mxu0 0
          %2716 = vmatpush1.bf16.msra.mxu0 0
          %2717 = vmatprep.subr.bf16.mxu0 0
          %2718 = vmatpush1.bf16.msra.mxu0 0
          %2719 = vmatprep.subr.bf16.mxu0 0
          %2720 = vmatpush1.bf16.msra.mxu0 0
          %2721 = vmatprep.subr.bf16.mxu0 0
          %2722 = vmatpush1.bf16.msra.mxu0 0
          %2723 = vmatprep.subr.bf16.mxu0 0
          %2724 = vmatpush1.bf16.msra.mxu0 0
          %2725 = vmatprep.subr.bf16.mxu0 0
          %2726 = vmatpush1.bf16.msra.mxu0 0
          %2727 = vmatprep.subr.bf16.mxu0 0
          %2728 = vmatpush1.bf16.msra.mxu0 0
          %2729 = vmatprep.mubr.bf16.mxu0 0
          %2730 = vmatmul.mubr.bf16.gmra.mrb[0].mxu0 %v2695
          %v2731 = vpop.f32.mrb[0].mxu0
          %v2732 = vadd.f32 0.0, %v2731
          %v2733 = vpop.f32.mrb[0].mxu0
          %v2734 = vpop.f32.mrb[0].mxu0
          %v2735 = vpop.f32.mrb[0].mxu0
          %2736 = vdwg.mxu0
          %v2737 = vadd.f32 %v2675, %v2732
          %s2738 = scalar_lea.vmem %s5, 320
          %v2739 = vld [vmem:[%s2738] sm:$0xf]
          %v2740 = vld [vmem:[%s2738 + $0x4] sm:$0xf]
          %v2741 = vld [vmem:[%s2738 + $0x8] sm:$0xf]
          %v2742 = vld [vmem:[%s2738 + $0xc] sm:$0xf]
          %v2743 = vrot.slane %v1499, 4
          %v2748 = vunpack.c.l.b16 %v2739
          %v2749 = vunpack.c.l.b16 %v2740
          %v2750 = vunpack.c.l.b16 %v2741
          %v2751 = vunpack.c.l.b16 %v2742
          %v2752 = vpack.c.b16 %v2749, %v2748
          %v2753 = vpack.c.b16 %v2751, %v2750
          %v2757 = vsel %vm1456, %v2743, 0
          %2759 = vmatprep.subr.bf16.mxu0 0
          %2760 = vmatpush1.bf16.msra.mxu0 %v2752
          %2761 = vmatprep.subr.bf16.mxu0 0
          %2762 = vmatpush1.bf16.msra.mxu0 %v2753
          %2763 = vmatprep.subr.bf16.mxu0 0
          %2764 = vmatpush1.bf16.msra.mxu0 0
          %2765 = vmatprep.subr.bf16.mxu0 0
          %2766 = vmatpush1.bf16.msra.mxu0 0
          %2767 = vmatprep.subr.bf16.mxu0 0
          %2768 = vmatpush1.bf16.msra.mxu0 0
          %2769 = vmatprep.subr.bf16.mxu0 0
          %2770 = vmatpush1.bf16.msra.mxu0 0
          %2771 = vmatprep.subr.bf16.mxu0 0
          %2772 = vmatpush1.bf16.msra.mxu0 0
          %2773 = vmatprep.subr.bf16.mxu0 0
          %2774 = vmatpush1.bf16.msra.mxu0 0
          %2775 = vmatprep.subr.bf16.mxu0 0
          %2776 = vmatpush1.bf16.msra.mxu0 0
          %2777 = vmatprep.subr.bf16.mxu0 0
          %2778 = vmatpush1.bf16.msra.mxu0 0
          %2779 = vmatprep.subr.bf16.mxu0 0
          %2780 = vmatpush1.bf16.msra.mxu0 0
          %2781 = vmatprep.subr.bf16.mxu0 0
          %2782 = vmatpush1.bf16.msra.mxu0 0
          %2783 = vmatprep.subr.bf16.mxu0 0
          %2784 = vmatpush1.bf16.msra.mxu0 0
          %2785 = vmatprep.subr.bf16.mxu0 0
          %2786 = vmatpush1.bf16.msra.mxu0 0
          %2787 = vmatprep.subr.bf16.mxu0 0
          %2788 = vmatpush1.bf16.msra.mxu0 0
          %2789 = vmatprep.subr.bf16.mxu0 0
          %2790 = vmatpush1.bf16.msra.mxu0 0
          %2791 = vmatprep.mubr.bf16.mxu0 0
          %2792 = vmatmul.mubr.bf16.gmra.mrb[0].mxu0 %v2757
          %v2793 = vpop.f32.mrb[0].mxu0
          %v2794 = vadd.f32 0.0, %v2793
          %v2795 = vpop.f32.mrb[0].mxu0
          %v2796 = vpop.f32.mrb[0].mxu0
          %v2797 = vpop.f32.mrb[0].mxu0
          %2798 = vdwg.mxu0
          %v2799 = vadd.f32 %v2737, %v2794
          %s2800 = scalar_lea.vmem %s5, 336
          %v2801 = vld [vmem:[%s2800] sm:$0xf]
          %v2802 = vld [vmem:[%s2800 + $0x4] sm:$0xf]
          %v2803 = vld [vmem:[%s2800 + $0x8] sm:$0xf]
          %v2804 = vld [vmem:[%s2800 + $0xc] sm:$0xf]
          %v2805 = vrot.slane %v1499, 5
          %v2810 = vunpack.c.l.b16 %v2801
          %v2811 = vunpack.c.l.b16 %v2802
          %v2812 = vunpack.c.l.b16 %v2803
          %v2813 = vunpack.c.l.b16 %v2804
          %v2814 = vpack.c.b16 %v2811, %v2810
          %v2815 = vpack.c.b16 %v2813, %v2812
          %v2819 = vsel %vm1456, %v2805, 0
          %2821 = vmatprep.subr.bf16.mxu0 0
          %2822 = vmatpush1.bf16.msra.mxu0 %v2814
          %2823 = vmatprep.subr.bf16.mxu0 0
          %2824 = vmatpush1.bf16.msra.mxu0 %v2815
          %2825 = vmatprep.subr.bf16.mxu0 0
          %2826 = vmatpush1.bf16.msra.mxu0 0
          %2827 = vmatprep.subr.bf16.mxu0 0
          %2828 = vmatpush1.bf16.msra.mxu0 0
          %2829 = vmatprep.subr.bf16.mxu0 0
          %2830 = vmatpush1.bf16.msra.mxu0 0
          %2831 = vmatprep.subr.bf16.mxu0 0
          %2832 = vmatpush1.bf16.msra.mxu0 0
          %2833 = vmatprep.subr.bf16.mxu0 0
          %2834 = vmatpush1.bf16.msra.mxu0 0
          %2835 = vmatprep.subr.bf16.mxu0 0
          %2836 = vmatpush1.bf16.msra.mxu0 0
          %2837 = vmatprep.subr.bf16.mxu0 0
          %2838 = vmatpush1.bf16.msra.mxu0 0
          %2839 = vmatprep.subr.bf16.mxu0 0
          %2840 = vmatpush1.bf16.msra.mxu0 0
          %2841 = vmatprep.subr.bf16.mxu0 0
          %2842 = vmatpush1.bf16.msra.mxu0 0
          %2843 = vmatprep.subr.bf16.mxu0 0
          %2844 = vmatpush1.bf16.msra.mxu0 0
          %2845 = vmatprep.subr.bf16.mxu0 0
          %2846 = vmatpush1.bf16.msra.mxu0 0
          %2847 = vmatprep.subr.bf16.mxu0 0
          %2848 = vmatpush1.bf16.msra.mxu0 0
          %2849 = vmatprep.subr.bf16.mxu0 0
          %2850 = vmatpush1.bf16.msra.mxu0 0
          %2851 = vmatprep.subr.bf16.mxu0 0
          %2852 = vmatpush1.bf16.msra.mxu0 0
          %2853 = vmatprep.mubr.bf16.mxu0 0
          %2854 = vmatmul.mubr.bf16.gmra.mrb[0].mxu0 %v2819
          %v2855 = vpop.f32.mrb[0].mxu0
          %v2856 = vadd.f32 0.0, %v2855
          %v2857 = vpop.f32.mrb[0].mxu0
          %v2858 = vpop.f32.mrb[0].mxu0
          %v2859 = vpop.f32.mrb[0].mxu0
          %2860 = vdwg.mxu0
          %v2861 = vadd.f32 %v2799, %v2856
          %s2862 = scalar_lea.vmem %s5, 352
          %v2863 = vld [vmem:[%s2862] sm:$0xf]
          %v2864 = vld [vmem:[%s2862 + $0x4] sm:$0xf]
          %v2865 = vld [vmem:[%s2862 + $0x8] sm:$0xf]
          %v2866 = vld [vmem:[%s2862 + $0xc] sm:$0xf]
          %v2867 = vrot.slane %v1499, 6
          %v2872 = vunpack.c.l.b16 %v2863
          %v2873 = vunpack.c.l.b16 %v2864
          %v2874 = vunpack.c.l.b16 %v2865
          %v2875 = vunpack.c.l.b16 %v2866
          %v2876 = vpack.c.b16 %v2873, %v2872
          %v2877 = vpack.c.b16 %v2875, %v2874
          %v2881 = vsel %vm1456, %v2867, 0
          %2883 = vmatprep.subr.bf16.mxu0 0
          %2884 = vmatpush1.bf16.msra.mxu0 %v2876
          %2885 = vmatprep.subr.bf16.mxu0 0
          %2886 = vmatpush1.bf16.msra.mxu0 %v2877
          %2887 = vmatprep.subr.bf16.mxu0 0
          %2888 = vmatpush1.bf16.msra.mxu0 0
          %2889 = vmatprep.subr.bf16.mxu0 0
          %2890 = vmatpush1.bf16.msra.mxu0 0
          %2891 = vmatprep.subr.bf16.mxu0 0
          %2892 = vmatpush1.bf16.msra.mxu0 0
          %2893 = vmatprep.subr.bf16.mxu0 0
          %2894 = vmatpush1.bf16.msra.mxu0 0
          %2895 = vmatprep.subr.bf16.mxu0 0
          %2896 = vmatpush1.bf16.msra.mxu0 0
          %2897 = vmatprep.subr.bf16.mxu0 0
          %2898 = vmatpush1.bf16.msra.mxu0 0
          %2899 = vmatprep.subr.bf16.mxu0 0
          %2900 = vmatpush1.bf16.msra.mxu0 0
          %2901 = vmatprep.subr.bf16.mxu0 0
          %2902 = vmatpush1.bf16.msra.mxu0 0
          %2903 = vmatprep.subr.bf16.mxu0 0
          %2904 = vmatpush1.bf16.msra.mxu0 0
          %2905 = vmatprep.subr.bf16.mxu0 0
          %2906 = vmatpush1.bf16.msra.mxu0 0
          %2907 = vmatprep.subr.bf16.mxu0 0
          %2908 = vmatpush1.bf16.msra.mxu0 0
          %2909 = vmatprep.subr.bf16.mxu0 0
          %2910 = vmatpush1.bf16.msra.mxu0 0
          %2911 = vmatprep.subr.bf16.mxu0 0
          %2912 = vmatpush1.bf16.msra.mxu0 0
          %2913 = vmatprep.subr.bf16.mxu0 0
          %2914 = vmatpush1.bf16.msra.mxu0 0
          %2915 = vmatprep.mubr.bf16.mxu0 0
          %2916 = vmatmul.mubr.bf16.gmra.mrb[0].mxu0 %v2881
          %v2917 = vpop.f32.mrb[0].mxu0
          %v2918 = vadd.f32 0.0, %v2917
          %v2919 = vpop.f32.mrb[0].mxu0
          %v2920 = vpop.f32.mrb[0].mxu0
          %v2921 = vpop.f32.mrb[0].mxu0
          %2922 = vdwg.mxu0
          %v2923 = vadd.f32 %v2861, %v2918
          %s2924 = scalar_lea.vmem %s5, 368
          %v2925 = vld [vmem:[%s2924] sm:$0xf]
          %v2926 = vld [vmem:[%s2924 + $0x4] sm:$0xf]
          %v2927 = vld [vmem:[%s2924 + $0x8] sm:$0xf]
          %v2928 = vld [vmem:[%s2924 + $0xc] sm:$0xf]
          %v2929 = vrot.slane %v1499, 7
          %v2934 = vunpack.c.l.b16 %v2925
          %v2935 = vunpack.c.l.b16 %v2926
          %v2936 = vunpack.c.l.b16 %v2927
          %v2937 = vunpack.c.l.b16 %v2928
          %v2938 = vpack.c.b16 %v2935, %v2934
          %v2939 = vpack.c.b16 %v2937, %v2936
          %v2943 = vsel %vm1456, %v2929, 0
          %2945 = vmatprep.subr.bf16.mxu0 0
          %2946 = vmatpush1.bf16.msra.mxu0 %v2938
          %2947 = vmatprep.subr.bf16.mxu0 0
          %2948 = vmatpush1.bf16.msra.mxu0 %v2939
          %2949 = vmatprep.subr.bf16.mxu0 0
          %2950 = vmatpush1.bf16.msra.mxu0 0
          %2951 = vmatprep.subr.bf16.mxu0 0
          %2952 = vmatpush1.bf16.msra.mxu0 0
          %2953 = vmatprep.subr.bf16.mxu0 0
          %2954 = vmatpush1.bf16.msra.mxu0 0
          %2955 = vmatprep.subr.bf16.mxu0 0
          %2956 = vmatpush1.bf16.msra.mxu0 0
          %2957 = vmatprep.subr.bf16.mxu0 0
          %2958 = vmatpush1.bf16.msra.mxu0 0
          %2959 = vmatprep.subr.bf16.mxu0 0
          %2960 = vmatpush1.bf16.msra.mxu0 0
          %2961 = vmatprep.subr.bf16.mxu0 0
          %2962 = vmatpush1.bf16.msra.mxu0 0
          %2963 = vmatprep.subr.bf16.mxu0 0
          %2964 = vmatpush1.bf16.msra.mxu0 0
          %2965 = vmatprep.subr.bf16.mxu0 0
          %2966 = vmatpush1.bf16.msra.mxu0 0
          %2967 = vmatprep.subr.bf16.mxu0 0
          %2968 = vmatpush1.bf16.msra.mxu0 0
          %2969 = vmatprep.subr.bf16.mxu0 0
          %2970 = vmatpush1.bf16.msra.mxu0 0
          %2971 = vmatprep.subr.bf16.mxu0 0
          %2972 = vmatpush1.bf16.msra.mxu0 0
          %2973 = vmatprep.subr.bf16.mxu0 0
          %2974 = vmatpush1.bf16.msra.mxu0 0
          %2975 = vmatprep.subr.bf16.mxu0 0
          %2976 = vmatpush1.bf16.msra.mxu0 0
          %2977 = vmatprep.mubr.bf16.mxu0 0
          %2978 = vmatmul.mubr.bf16.gmra.mrb[0].mxu0 %v2943
          %v2979 = vpop.f32.mrb[0].mxu0
          %v2980 = vadd.f32 0.0, %v2979
          %v2981 = vpop.f32.mrb[0].mxu0
          %v2982 = vpop.f32.mrb[0].mxu0
          %v2983 = vpop.f32.mrb[0].mxu0
          %2984 = vdwg.mxu0
          %v2985 = vadd.f32 %v2923, %v2980
          %s2986 = scalar_lea.vmem %s5, 384
          %v2987 = vld [vmem:[%s2986] sm:$0xf]
          %v2988 = vld [vmem:[%s2986 + $0x4] sm:$0xf]
          %v2989 = vld [vmem:[%s2986 + $0x8] sm:$0xf]
          %v2990 = vld [vmem:[%s2986 + $0xc] sm:$0xf]
          %v2995 = vunpack.c.l.b16 %v2987
          %v2996 = vunpack.c.l.b16 %v2988
          %v2997 = vunpack.c.l.b16 %v2989
          %v2998 = vunpack.c.l.b16 %v2990
          %v2999 = vpack.c.b16 %v2996, %v2995
          %v3000 = vpack.c.b16 %v2998, %v2997
          %v3004 = vsel %vm1456, %v1500, 0
          %3006 = vmatprep.subr.bf16.mxu0 0
          %3007 = vmatpush1.bf16.msra.mxu0 %v2999
          %3008 = vmatprep.subr.bf16.mxu0 0
          %3009 = vmatpush1.bf16.msra.mxu0 %v3000
          %3010 = vmatprep.subr.bf16.mxu0 0
          %3011 = vmatpush1.bf16.msra.mxu0 0
          %3012 = vmatprep.subr.bf16.mxu0 0
          %3013 = vmatpush1.bf16.msra.mxu0 0
          %3014 = vmatprep.subr.bf16.mxu0 0
          %3015 = vmatpush1.bf16.msra.mxu0 0
          %3016 = vmatprep.subr.bf16.mxu0 0
          %3017 = vmatpush1.bf16.msra.mxu0 0
          %3018 = vmatprep.subr.bf16.mxu0 0
          %3019 = vmatpush1.bf16.msra.mxu0 0
          %3020 = vmatprep.subr.bf16.mxu0 0
          %3021 = vmatpush1.bf16.msra.mxu0 0
          %3022 = vmatprep.subr.bf16.mxu0 0
          %3023 = vmatpush1.bf16.msra.mxu0 0
          %3024 = vmatprep.subr.bf16.mxu0 0
          %3025 = vmatpush1.bf16.msra.mxu0 0
          %3026 = vmatprep.subr.bf16.mxu0 0
          %3027 = vmatpush1.bf16.msra.mxu0 0
          %3028 = vmatprep.subr.bf16.mxu0 0
          %3029 = vmatpush1.bf16.msra.mxu0 0
          %3030 = vmatprep.subr.bf16.mxu0 0
          %3031 = vmatpush1.bf16.msra.mxu0 0
          %3032 = vmatprep.subr.bf16.mxu0 0
          %3033 = vmatpush1.bf16.msra.mxu0 0
          %3034 = vmatprep.subr.bf16.mxu0 0
          %3035 = vmatpush1.bf16.msra.mxu0 0
          %3036 = vmatprep.subr.bf16.mxu0 0
          %3037 = vmatpush1.bf16.msra.mxu0 0
          %3038 = vmatprep.mubr.bf16.mxu0 0
          %3039 = vmatmul.mubr.bf16.gmra.mrb[0].mxu0 %v3004
          %v3040 = vpop.f32.mrb[0].mxu0
          %v3041 = vadd.f32 0.0, %v3040
          %v3042 = vpop.f32.mrb[0].mxu0
          %v3043 = vpop.f32.mrb[0].mxu0
          %v3044 = vpop.f32.mrb[0].mxu0
          %3045 = vdwg.mxu0
          %v3046 = vadd.f32 %v2985, %v3041
          %v3047 = vld [vmem:[%s6] sm:$0x1]
          %v3049 = vlaneseq
          %v3050 = vshrl.u32 %v3049, 7
          %v3051 = vsub.s32 0, %v3050
          %v3052 = vrot.slane %v3047, %v3051
          %v3054 = vadd.f32 %v3046, %v3052
          %v3055 = vmax.f32 %v3054, 0.0
          %v3056 = vpack.c.bf16 %v3055, %v3055
          %v3057 = vld [vmem:[%s7] sm:$0xf]
          %v3058 = vld [vmem:[%s7 + $0x4] sm:$0xf]
          %v3059 = vld [vmem:[%s7 + $0x8] sm:$0xf]
          %v3060 = vld [vmem:[%s7 + $0xc] sm:$0xf]
          %v3061 = vld [vmem:[%s8] sm:$0x1]
          %v3063 = vlaneseq
          %v3064 = vshrl.u32 %v3063, 7
          %v3065 = vsub.s32 0, %v3064
          %v3066 = vrot.slane %v3061, %v3065
          %v3072 = vunpack.c.l.b16 %v3057
          %v3073 = vunpack.c.l.b16 %v3058
          %v3074 = vunpack.c.l.b16 %v3059
          %v3075 = vunpack.c.l.b16 %v3060
          %v3076 = vpack.c.b16 %v3073, %v3072
          %v3077 = vpack.c.b16 %v3075, %v3074
          %v3081 = vsel %vm1456, %v3056, 0
          %3083 = vmatprep.subr.bf16.mxu0 0
          %3084 = vmatpush1.bf16.msra.mxu0 %v3076
          %3085 = vmatprep.subr.bf16.mxu0 0
          %3086 = vmatpush1.bf16.msra.mxu0 %v3077
          %3087 = vmatprep.subr.bf16.mxu0 0
          %3088 = vmatpush1.bf16.msra.mxu0 0
          %3089 = vmatprep.subr.bf16.mxu0 0
          %3090 = vmatpush1.bf16.msra.mxu0 0
          %3091 = vmatprep.subr.bf16.mxu0 0
          %3092 = vmatpush1.bf16.msra.mxu0 0
          %3093 = vmatprep.subr.bf16.mxu0 0
          %3094 = vmatpush1.bf16.msra.mxu0 0
          %3095 = vmatprep.subr.bf16.mxu0 0
          %3096 = vmatpush1.bf16.msra.mxu0 0
          %3097 = vmatprep.subr.bf16.mxu0 0
          %3098 = vmatpush1.bf16.msra.mxu0 0
          %3099 = vmatprep.subr.bf16.mxu0 0
          %3100 = vmatpush1.bf16.msra.mxu0 0
          %3101 = vmatprep.subr.bf16.mxu0 0
          %3102 = vmatpush1.bf16.msra.mxu0 0
          %3103 = vmatprep.subr.bf16.mxu0 0
          %3104 = vmatpush1.bf16.msra.mxu0 0
          %3105 = vmatprep.subr.bf16.mxu0 0
          %3106 = vmatpush1.bf16.msra.mxu0 0
          %3107 = vmatprep.subr.bf16.mxu0 0
          %3108 = vmatpush1.bf16.msra.mxu0 0
          %3109 = vmatprep.subr.bf16.mxu0 0
          %3110 = vmatpush1.bf16.msra.mxu0 0
          %3111 = vmatprep.subr.bf16.mxu0 0
          %3112 = vmatpush1.bf16.msra.mxu0 0
          %3113 = vmatprep.subr.bf16.mxu0 0
          %3114 = vmatpush1.bf16.msra.mxu0 0
          %3115 = vmatprep.mubr.bf16.mxu0 0
          %3116 = vmatmul.mubr.bf16.gmra.mrb[0].mxu0 %v3081
          %v3117 = vpop.f32.mrb[0].mxu0
          %v3118 = vadd.f32 %v3066, %v3117
          %v3119 = vpop.f32.mrb[0].mxu0
          %v3120 = vpop.f32.mrb[0].mxu0
          %v3121 = vpop.f32.mrb[0].mxu0
          %3122 = vdwg.mxu0
          %3123 = vst [vmem:[#allocation3] sm:$0x3] %v3118
        $region64: #{dqn_conv_forward.1} parent=55 // pred_fallthru
          _
        // Predicated region
        $region65: #{dqn_conv_forward.1} parent=55 // pred_check
          %p3124 = pneg %p254
        $region66: #{dqn_conv_forward.1} parent=55 // pred_check_branch
          %3126 = sbr.rel (%p3124) target = $region68
        $region67: #{dqn_conv_forward.1} parent=55 // pred_region
          %s3128 = ssub.s32 32, 32
          %3129 = vsyncadd [#allocation4], %s3128
          %s3130 = smul.addr %s25, 32
          %s3131 = scalar_lea.hbm %s9, %s3130
          %s3133 = sshll.u32 [#allocation3], 4
          %s3134 = int_to_ptr.vmem [resolvable:$true] %s3133
          %3136 = dma.vmem_to_hbm [thread:$0]  %s3134, 32, %s3131, [#allocation4]
        $region68: #{dqn_conv_forward.1} parent=55 // pred_fallthru
          _
        // Predicated region
        $region69: #{dqn_conv_forward.1} parent=55 // pred_check
          %p3137 = pneg %p254
        $region70: #{dqn_conv_forward.1} parent=55 // pred_check_branch
          %3139 = sbr.rel (%p3137) target = $region72
        $region71: #{dqn_conv_forward.1} parent=55 // pred_region
          %3140 = dma.done [#allocation4], 32
        $region72: #{dqn_conv_forward.1} parent=55 // pred_fallthru
          _
      $region56: #{dqn_conv_forward.1} parent=5 // pred_fallthru
        _
      %p3141 = scmp.le.s32.totalorder 2, %s16
      // Predicated region
      $region73: #{dqn_conv_forward.1} parent=5 // pred_check
        %p3142 = pneg %p3141
      $region74: #{dqn_conv_forward.1} parent=5 // pred_check_branch
        %3144 = sbr.rel (%p3142) target = $region76
      $region75: #{dqn_conv_forward.1} parent=5 // pred_region
        %s3145 = ssub.s32 %s16, 2
      $region76: #{dqn_conv_forward.1} parent=5 // pred_fallthru
        _
    $region6: #{dqn_conv_forward.1} parent=1 // loop_footer
      %s20 = sadd.s32 1, %s16
    $region7: #{dqn_conv_forward.1} parent=1 // loop_footer_branch
      %15 = sbr.rel target = $region3
    $region8: #{dqn_conv_forward.1} parent=1 // loop_exit
      _
    %3146 = vsyncpa [#allocation4], 1
    %s3147 = scalar_lea.sflag [#allocation4], 1
    %3148 = vsyncpa %s3147, 1

</llo_original>
